<compile_context>
chip_gen: v7x
topology: tpu7x:2x2x1
jax: 0.10.0
libtpu: 0.0.40
codegen_flags: <defaults>
</compile_context>

<pallas_src>
import functools
import math

import jax
import jax.numpy as jnp
import numpy as np
from jax.experimental import pallas as pl
from jax.experimental.pallas import tpu as pltpu

# ----------------------------- model config ---------------------------------
NUM_LAYERS = 2
D_MODEL = 32
NUM_HEADS = 4
HIDDEN_DIM = 64
D_K = D_MODEL // NUM_HEADS
BATCH = 2
SEQ = 8
EPS = 1e-6
R_SOFTPLUS_0 = 1.442695041  # PerDimScale constant


# ------------------------------ Pallas kernel -------------------------------
def fused_transformer_kernel(
    # inputs (refs)
    x_ref, mask_ref,
    rms_s_ref,
    qkv_w_ref, qkv_b_ref,
    post_w_ref, post_b_ref,
    ln_s_ref, ln_b_ref,
    w1_ref, b1_ref, w2_ref, b2_ref,
    # output
    o_ref,
    *, num_layers, batch, seq, num_heads, d_k,
):
    d = num_heads * d_k
    n = batch * seq
    x = x_ref[...]                                      # (N, D) = (B*S, D), f32

    # Block-diagonal (per-batch) causal mask, broadcast across heads ONCE and
    # reused by every layer — avoids re-emitting broadcast_in_dim per layer.
    mask = jnp.broadcast_to(mask_ref[...], (num_heads, n, n))

    # Static unroll over layers: all weights already resident in VMEM.
    for l in range(num_layers):
        # ---- RmsNorm (direct_scale=True) ----
        ms = jnp.mean(x * x, axis=-1, keepdims=True)
        xn = x * jax.lax.rsqrt(ms + EPS) * rms_s_ref[l]

        # ---- fused QKV projection; PerDimScale already folded into q cols ----
        # TODO(synk): measure whether 128-lane padding of the fused qkv weight
        # removes lane-rotate relayouts on the slices below (measure-first).
        qkv = (jnp.dot(xn, qkv_w_ref[l], preferred_element_type=jnp.float32)
               + qkv_b_ref[l])                          # (N, 3D)
        q = qkv[:, :d]
        k = qkv[:, d:2 * d]
        v = qkv[:, 2 * d:]

        # ---- attention: one relayout per tensor, one einsum pair per layer --
        qh = pltpu.einshape("nhd->hnd", q.reshape(n, num_heads, d_k))  # (H,N,dk)
        kh = pltpu.einshape("nhd->hnd", k.reshape(n, num_heads, d_k))
        vh = pltpu.einshape("nhd->hnd", v.reshape(n, num_heads, d_k))

        s = jnp.einsum("hqd,hkd->hqk", qh, kh,
                       preferred_element_type=jnp.float32) + mask     # (H,N,N)
        s = s - jnp.max(s, axis=-1, keepdims=True)
        p = jnp.exp(s)                       # cross-batch entries -> exactly 0
        p = p * pl.reciprocal(jnp.sum(p, axis=-1, keepdims=True), approx=False)
        ch = jnp.einsum("hqk,hkd->hqd", p, vh,
                        preferred_element_type=jnp.float32)           # (H,N,dk)
        ctx = pltpu.einshape("hnd->nhd", ch).reshape(n, d)            # (N, D)

        attn_out = (jnp.dot(ctx, post_w_ref[l], preferred_element_type=jnp.float32)
                    + post_b_ref[l])
        x1 = attn_out + x                               # residual with block input

        # ---- FeedForward: LayerNorm (single-pass stats), MLP, residual ----
        m1 = jnp.mean(x1, axis=-1, keepdims=True)
        m2 = jnp.mean(x1 * x1, axis=-1, keepdims=True)
        ln = (x1 - m1) * jax.lax.rsqrt(m2 - m1 * m1 + EPS)
        ln = ln * (1.0 + ln_s_ref[l]) + ln_b_ref[l]

        h1 = jnp.maximum(
            jnp.dot(ln, w1_ref[l], preferred_element_type=jnp.float32) + b1_ref[l],
            0.0)
        y = jnp.dot(h1, w2_ref[l], preferred_element_type=jnp.float32) + b2_ref[l]
        x = y + x1

    o_ref[...] = x                                      # single lane-dense store


# --------------------------- one-time weight prep ----------------------------
def pack_layer_params(layer_params):
    """Weight preprocessing — done ONCE, outside the per-call path.
    Folds PerDimScale (r0/sqrt(d_k) * softplus(p)) into the q projection
    weight columns AND bias, fuses q/k/v into one (D, 3D) weight, and stacks
    every per-layer parameter along a leading layer axis."""
    rms_s, qkv_w, qkv_b, post_w, post_b = [], [], [], [], []
    ln_s, ln_b, w1, b1, w2, b2 = [], [], [], [], [], []
    for p in layer_params:
        scale = (R_SOFTPLUS_0 / math.sqrt(D_K)) * jax.nn.softplus(p["per_dim_scale"][0])
        scale_full = jnp.tile(scale, NUM_HEADS)          # (D,), per-head-dim scale
        qw = p["qw"] * scale_full[None, :]
        qb = p["qb"][0] * scale_full
        qkv_w.append(jnp.concatenate([qw, p["kw"], p["vw"]], axis=1))     # (D, 3D)
        qkv_b.append(jnp.concatenate([qb, p["kb"][0], p["vb"][0]], axis=0))  # (3D,)
        rms_s.append(p["rms_scale"][0])
        post_w.append(p["post_w"]); post_b.append(p["post_b"][0])
        ln_s.append(p["ln_scale"][0]); ln_b.append(p["ln_bias"][0])
        w1.append(p["w1"]); b1.append(p["b1"][0])
        w2.append(p["w2"]); b2.append(p["b2"][0])
    st = lambda xs: jnp.stack(xs, axis=0)
    return [st(rms_s), st(qkv_w), st(qkv_b), st(post_w), st(post_b),
            st(ln_s), st(ln_b), st(w1), st(b1), st(w2), st(b2)]


def make_block_mask(mask, batch, seq):
    """(S,S) additive causal mask -> (B*S, B*S) block-diagonal mask with -1e9
    on cross-batch pairs (exp underflows to exactly 0 -> per-batch softmax)."""
    bidx = jnp.arange(batch * seq) // seq
    same_batch = bidx[:, None] == bidx[None, :]
    return jnp.where(same_batch, jnp.tile(mask, (batch, batch)),
                     jnp.float32(-1e9)).astype(jnp.float32)


# ------------------------------ jitted wrapper --------------------------------
def transformer_pallas(x, block_mask, packed):
    B, S, D = x.shape
    num_layers = packed[0].shape[0]
    x2d = x.reshape(B * S, D)                            # free row-major view
    kernel = functools.partial(
        fused_transformer_kernel,
        num_layers=num_layers, batch=B, seq=S,
        num_heads=NUM_HEADS, d_k=D_K)
    vmem = pl.BlockSpec(memory_space=pltpu.MemorySpace.VMEM)  # whole array in VMEM
    out2d = pl.pallas_call(
        kernel,
        out_shape=jax.ShapeDtypeStruct((B * S, D), jnp.float32),
        in_specs=[vmem] * (2 + len(packed)),
        out_specs=vmem,
    )(x2d, block_mask, *packed)
    return out2d.reshape(B, S, D)


transformer_pallas_jit = jax.jit(transformer_pallas)


# --------------------------- pure-JAX reference -----------------------------
def transformer_block_ref(x, mask, p):
    ms = jnp.mean(x * x, axis=-1, keepdims=True)
    xn = x * jax.lax.rsqrt(ms + EPS) * p["rms_scale"][0]
    q = xn @ p["qw"] + p["qb"][0]
    k = xn @ p["kw"] + p["kb"][0]
    v = xn @ p["vw"] + p["vb"][0]
    B, S, D = x.shape
    q = q.reshape(B, S, NUM_HEADS, D_K).transpose(0, 2, 1, 3)
    k = k.reshape(B, S, NUM_HEADS, D_K).transpose(0, 2, 1, 3)
    v = v.reshape(B, S, NUM_HEADS, D_K).transpose(0, 2, 1, 3)
    # PerDimScale (the spec module): scale = r0/sqrt(dim) * softplus(param)
    scale = (R_SOFTPLUS_0 / math.sqrt(D_K)) * jax.nn.softplus(p["per_dim_scale"][0])
    attn = jnp.einsum("bhqd,bhkd->bhqk", q * scale, k) + mask
    attn = jax.nn.softmax(attn, axis=-1)
    ctx = jnp.einsum("bhqk,bhkd->bhqd", attn, v)
    ctx = ctx.transpose(0, 2, 1, 3).reshape(B, S, D)
    x1 = ctx @ p["post_w"] + p["post_b"][0] + x
    mean = jnp.mean(x1, axis=-1, keepdims=True)
    var = jnp.mean((x1 - mean) ** 2, axis=-1, keepdims=True)
    ln = (x1 - mean) * jax.lax.rsqrt(var + EPS)
    ln = ln * (1.0 + p["ln_scale"][0]) + p["ln_bias"][0]
    h1 = jnp.maximum(ln @ p["w1"] + p["b1"][0], 0.0)
    return h1 @ p["w2"] + p["b2"][0] + x1


def transformer_ref(x, mask, layer_params):
    for p in layer_params:
        x = transformer_block_ref(x, mask, p)
    return x


# ------------------------------ param init ----------------------------------
def init_layer_params(key):
    ks = jax.random.split(key, 16)
    w = lambda k, i, o: jax.random.normal(k, (i, o), jnp.float32) * 0.05
    b = lambda k, n: jax.random.normal(k, (1, n), jnp.float32) * 0.01
    return {
        "rms_scale": 1.0 + 0.1 * jax.random.normal(ks[12], (1, D_MODEL), jnp.float32),
        "qw": w(ks[0], D_MODEL, D_MODEL), "qb": b(ks[1], D_MODEL),
        "kw": w(ks[2], D_MODEL, D_MODEL), "kb": b(ks[3], D_MODEL),
        "vw": w(ks[4], D_MODEL, D_MODEL), "vb": b(ks[5], D_MODEL),
        # PerDimScale parameter — random (nonzero) so its forward path is exercised.
        "per_dim_scale": 0.3 * jax.random.normal(ks[13], (1, D_K), jnp.float32),
        "post_w": w(ks[6], D_MODEL, D_MODEL), "post_b": b(ks[7], D_MODEL),
        "ln_scale": 0.1 * jax.random.normal(ks[14], (1, D_MODEL), jnp.float32),
        "ln_bias": 0.1 * jax.random.normal(ks[15], (1, D_MODEL), jnp.float32),
        "w1": w(ks[8], D_MODEL, HIDDEN_DIM), "b1": b(ks[9], HIDDEN_DIM),
        "w2": w(ks[10], HIDDEN_DIM, D_MODEL), "b2": b(ks[11], D_MODEL),
    }


# --------------------------------- main --------------------------------------
if __name__ == "__main__":
    root = jax.random.PRNGKey(0)
    kx, *kls = jax.random.split(root, NUM_LAYERS + 1)

    x = jax.random.normal(kx, (BATCH, SEQ, D_MODEL), jnp.float32)
    # additive causal mask (S, S): 0 on/below diagonal, large negative above.
    causal = jnp.tril(jnp.ones((SEQ, SEQ), jnp.float32))
    mask = jnp.where(causal > 0, 0.0, -1e9).astype(jnp.float32)

    layer_params = [init_layer_params(k) for k in kls]

    # One-time weight / mask preparation (hoisted out of the per-call path).
    packed = pack_layer_params(layer_params)
    packed = [jax.block_until_ready(a) for a in packed]
    block_mask = jax.block_until_ready(make_block_mask(mask, BATCH, SEQ))

    out = transformer_pallas_jit(x, block_mask, packed)
    out = jax.block_until_ready(out)

    ref = transformer_ref(x, mask, layer_params)
    np.testing.assert_allclose(np.asarray(out), np.asarray(ref),
                               rtol=1e-4, atol=2e-5)

    print("KERNEL_OK")
</pallas_src>

<mosaic_0001>
module attributes {stable_mosaic.version = 11 : i64} {
  func.func @fused_transformer_kernel(%arg0: memref<16x32xf32, #tpu.memory_space<vmem>>, %arg1: memref<16x16xf32, #tpu.memory_space<vmem>>, %arg2: memref<2x32xf32, #tpu.memory_space<vmem>>, %arg3: memref<2x32x96xf32, #tpu.memory_space<vmem>>, %arg4: memref<2x96xf32, #tpu.memory_space<vmem>>, %arg5: memref<2x32x32xf32, #tpu.memory_space<vmem>>, %arg6: memref<2x32xf32, #tpu.memory_space<vmem>>, %arg7: memref<2x32xf32, #tpu.memory_space<vmem>>, %arg8: memref<2x32xf32, #tpu.memory_space<vmem>>, %arg9: memref<2x32x64xf32, #tpu.memory_space<vmem>>, %arg10: memref<2x64xf32, #tpu.memory_space<vmem>>, %arg11: memref<2x64x32xf32, #tpu.memory_space<vmem>>, %arg12: memref<2x32xf32, #tpu.memory_space<vmem>>, %arg13: memref<16x32xf32, #tpu.memory_space<vmem>>) attributes {dimension_semantics = [], scalar_prefetch = 0 : i64, scratch_operands = 0 : i64, tpu.core_type = #tpu.core_type<tc>} {
    %c0 = arith.constant 0 : index
    %c0_0 = arith.constant 0 : index
    %0 = vector.load %arg0[%c0, %c0_0] : memref<16x32xf32, #tpu.memory_space<vmem>>, vector<16x32xf32>
    %c0_1 = arith.constant 0 : index
    %c0_2 = arith.constant 0 : index
    %1 = vector.load %arg1[%c0_1, %c0_2] : memref<16x16xf32, #tpu.memory_space<vmem>>, vector<16x16xf32>
    %2 = vector.shape_cast %1 : vector<16x16xf32> to vector<1x16x16xf32>
    %3 = vector.broadcast %2 : vector<1x16x16xf32> to vector<4x16x16xf32>
    %4 = arith.mulf %0, %0 : vector<16x32xf32>
    %cst = arith.constant dense<0.000000e+00> : vector<16xf32>
    %5 = vector.multi_reduction <add>, %4, %cst [1] : vector<16x32xf32> to vector<16xf32>
    %6 = vector.shape_cast %5 : vector<16xf32> to vector<16x1xf32>
    %cst_3 = arith.constant 3.200000e+01 : f32
    %7 = vector.broadcast %cst_3 : f32 to vector<16x1xf32>
    %8 = arith.divf %6, %7 : vector<16x1xf32>
    %cst_4 = arith.constant 9.99999997E-7 : f32
    %9 = vector.broadcast %cst_4 : f32 to vector<16x1xf32>
    %10 = arith.addf %8, %9 : vector<16x1xf32>
    %11 = math.rsqrt %10 : vector<16x1xf32>
    %12 = vector.broadcast %11 : vector<16x1xf32> to vector<16x32xf32>
    %13 = arith.mulf %0, %12 : vector<16x32xf32>
    %c0_5 = arith.constant 0 : index
    %c0_6 = arith.constant 0 : index
    %14 = vector.load %arg2[%c0_5, %c0_6] : memref<2x32xf32, #tpu.memory_space<vmem>>, vector<1x32xf32>
    %15 = vector.shape_cast %14 : vector<1x32xf32> to vector<32xf32>
    %16 = vector.shape_cast %15 : vector<32xf32> to vector<1x32xf32>
    %17 = vector.broadcast %16 : vector<1x32xf32> to vector<16x32xf32>
    %18 = arith.mulf %13, %17 : vector<16x32xf32>
    %c0_7 = arith.constant 0 : index
    %c0_8 = arith.constant 0 : index
    %c0_9 = arith.constant 0 : index
    %19 = vector.load %arg3[%c0_7, %c0_8, %c0_9] : memref<2x32x96xf32, #tpu.memory_space<vmem>>, vector<1x32x96xf32>
    %20 = vector.shape_cast %19 : vector<1x32x96xf32> to vector<32x96xf32>
    %cst_10 = arith.constant dense<0.000000e+00> : vector<16x96xf32>
    %21 = tpu.matmul %18, %20, %cst_10 {dimension_numbers = #tpu.dot_dimension_numbers<[1], [0], [0], [1], [0, 0, 1, 1], [], []>} : vector<16x32xf32>, vector<32x96xf32>, vector<16x96xf32> -> vector<16x96xf32>
    %c0_11 = arith.constant 0 : index
    %c0_12 = arith.constant 0 : index
    %22 = vector.load %arg4[%c0_11, %c0_12] : memref<2x96xf32, #tpu.memory_space<vmem>>, vector<1x96xf32>
    %23 = vector.shape_cast %22 : vector<1x96xf32> to vector<96xf32>
    %24 = vector.shape_cast %23 : vector<96xf32> to vector<1x96xf32>
    %25 = vector.broadcast %24 : vector<1x96xf32> to vector<16x96xf32>
    %26 = arith.addf %21, %25 : vector<16x96xf32>
    %27 = vector.extract_strided_slice %26 {offsets = [0, 0], sizes = [16, 32], strides = [1, 1]} : vector<16x96xf32> to vector<16x32xf32>
    %28 = vector.extract_strided_slice %26 {offsets = [0, 32], sizes = [16, 32], strides = [1, 1]} : vector<16x96xf32> to vector<16x32xf32>
    %29 = vector.extract_strided_slice %26 {offsets = [0, 64], sizes = [16, 32], strides = [1, 1]} : vector<16x96xf32> to vector<16x32xf32>
    %30 = vector.shape_cast %27 : vector<16x32xf32> to vector<16x4x8xf32>
    %31 = tpu.transpose %30, [1, 0, 2] : vector<16x4x8xf32> -> vector<4x16x8xf32>
    %32 = vector.shape_cast %28 : vector<16x32xf32> to vector<16x4x8xf32>
    %33 = tpu.transpose %32, [1, 0, 2] : vector<16x4x8xf32> -> vector<4x16x8xf32>
    %34 = vector.shape_cast %29 : vector<16x32xf32> to vector<16x4x8xf32>
    %35 = tpu.transpose %34, [1, 0, 2] : vector<16x4x8xf32> -> vector<4x16x8xf32>
    "tpu.trace_start"() <{level = 10 : i32, message = "hqd,hkd->hqk"}> : () -> ()
    %cst_13 = arith.constant dense<0.000000e+00> : vector<4x16x16xf32>
    %36 = tpu.matmul %31, %33, %cst_13 {dimension_numbers = #tpu.dot_dimension_numbers<[2], [2], [1], [1], [0, 0, 0, 1, 1, 1], [0], [0]>} : vector<4x16x8xf32>, vector<4x16x8xf32>, vector<4x16x16xf32> -> vector<4x16x16xf32>
    "tpu.trace_stop"() : () -> ()
    %37 = arith.addf %36, %3 : vector<4x16x16xf32>
    %cst_14 = arith.constant dense<0xFF800000> : vector<4x16xf32>
    %38 = vector.multi_reduction <maximumf>, %37, %cst_14 [2] : vector<4x16x16xf32> to vector<4x16xf32>
    %39 = vector.shape_cast %38 : vector<4x16xf32> to vector<4x16x1xf32>
    %40 = vector.broadcast %39 : vector<4x16x1xf32> to vector<4x16x16xf32>
    %41 = arith.subf %37, %40 : vector<4x16x16xf32>
    %42 = math.exp %41 : vector<4x16x16xf32>
    %cst_15 = arith.constant dense<0.000000e+00> : vector<4x16xf32>
    %43 = vector.multi_reduction <add>, %42, %cst_15 [2] : vector<4x16x16xf32> to vector<4x16xf32>
    %44 = vector.shape_cast %43 : vector<4x16xf32> to vector<4x16x1xf32>
    %45 = tpu.reciprocal %44 : vector<4x16x1xf32> -> vector<4x16x1xf32>
    %46 = vector.broadcast %45 : vector<4x16x1xf32> to vector<4x16x16xf32>
    %47 = arith.mulf %42, %46 : vector<4x16x16xf32>
    "tpu.trace_start"() <{level = 10 : i32, message = "hqk,hkd->hqd"}> : () -> ()
    %cst_16 = arith.constant dense<0.000000e+00> : vector<4x16x8xf32>
    %48 = tpu.matmul %47, %35, %cst_16 {dimension_numbers = #tpu.dot_dimension_numbers<[2], [1], [1], [2], [0, 0, 0, 1, 1, 2], [0], [0]>} : vector<4x16x16xf32>, vector<4x16x8xf32>, vector<4x16x8xf32> -> vector<4x16x8xf32>
    "tpu.trace_stop"() : () -> ()
    %49 = tpu.transpose %48, [1, 0, 2] : vector<4x16x8xf32> -> vector<16x4x8xf32>
    %50 = vector.shape_cast %49 : vector<16x4x8xf32> to vector<16x32xf32>
    %c0_17 = arith.constant 0 : index
    %c0_18 = arith.constant 0 : index
    %c0_19 = arith.constant 0 : index
    %51 = vector.load %arg5[%c0_17, %c0_18, %c0_19] : memref<2x32x32xf32, #tpu.memory_space<vmem>>, vector<1x32x32xf32>
    %52 = vector.shape_cast %51 : vector<1x32x32xf32> to vector<32x32xf32>
    %cst_20 = arith.constant dense<0.000000e+00> : vector<16x32xf32>
    %53 = tpu.matmul %50, %52, %cst_20 {dimension_numbers = #tpu.dot_dimension_numbers<[1], [0], [0], [1], [0, 0, 1, 1], [], []>} : vector<16x32xf32>, vector<32x32xf32>, vector<16x32xf32> -> vector<16x32xf32>
    %c0_21 = arith.constant 0 : index
    %c0_22 = arith.constant 0 : index
    %54 = vector.load %arg6[%c0_21, %c0_22] : memref<2x32xf32, #tpu.memory_space<vmem>>, vector<1x32xf32>
    %55 = vector.shape_cast %54 : vector<1x32xf32> to vector<32xf32>
    %56 = vector.shape_cast %55 : vector<32xf32> to vector<1x32xf32>
    %57 = vector.broadcast %56 : vector<1x32xf32> to vector<16x32xf32>
    %58 = arith.addf %53, %57 : vector<16x32xf32>
    %59 = arith.addf %58, %0 : vector<16x32xf32>
    %cst_23 = arith.constant dense<0.000000e+00> : vector<16xf32>
    %60 = vector.multi_reduction <add>, %59, %cst_23 [1] : vector<16x32xf32> to vector<16xf32>
    %61 = vector.shape_cast %60 : vector<16xf32> to vector<16x1xf32>
    %cst_24 = arith.constant 3.200000e+01 : f32
    %62 = vector.broadcast %cst_24 : f32 to vector<16x1xf32>
    %63 = arith.divf %61, %62 : vector<16x1xf32>
    %64 = arith.mulf %59, %59 : vector<16x32xf32>
    %cst_25 = arith.constant dense<0.000000e+00> : vector<16xf32>
    %65 = vector.multi_reduction <add>, %64, %cst_25 [1] : vector<16x32xf32> to vector<16xf32>
    %66 = vector.shape_cast %65 : vector<16xf32> to vector<16x1xf32>
    %cst_26 = arith.constant 3.200000e+01 : f32
    %67 = vector.broadcast %cst_26 : f32 to vector<16x1xf32>
    %68 = arith.divf %66, %67 : vector<16x1xf32>
    %69 = vector.broadcast %63 : vector<16x1xf32> to vector<16x32xf32>
    %70 = arith.subf %59, %69 : vector<16x32xf32>
    %71 = arith.mulf %63, %63 : vector<16x1xf32>
    %72 = arith.subf %68, %71 : vector<16x1xf32>
    %cst_27 = arith.constant 9.99999997E-7 : f32
    %73 = vector.broadcast %cst_27 : f32 to vector<16x1xf32>
    %74 = arith.addf %72, %73 : vector<16x1xf32>
    %75 = math.rsqrt %74 : vector<16x1xf32>
    %76 = vector.broadcast %75 : vector<16x1xf32> to vector<16x32xf32>
    %77 = arith.mulf %70, %76 : vector<16x32xf32>
    %c0_28 = arith.constant 0 : index
    %c0_29 = arith.constant 0 : index
    %78 = vector.load %arg7[%c0_28, %c0_29] : memref<2x32xf32, #tpu.memory_space<vmem>>, vector<1x32xf32>
    %79 = vector.shape_cast %78 : vector<1x32xf32> to vector<32xf32>
    %cst_30 = arith.constant 1.000000e+00 : f32
    %80 = vector.broadcast %cst_30 : f32 to vector<32xf32>
    %81 = arith.addf %80, %79 : vector<32xf32>
    %82 = vector.shape_cast %81 : vector<32xf32> to vector<1x32xf32>
    %83 = vector.broadcast %82 : vector<1x32xf32> to vector<16x32xf32>
    %84 = arith.mulf %77, %83 : vector<16x32xf32>
    %c0_31 = arith.constant 0 : index
    %c0_32 = arith.constant 0 : index
    %85 = vector.load %arg8[%c0_31, %c0_32] : memref<2x32xf32, #tpu.memory_space<vmem>>, vector<1x32xf32>
    %86 = vector.shape_cast %85 : vector<1x32xf32> to vector<32xf32>
    %87 = vector.shape_cast %86 : vector<32xf32> to vector<1x32xf32>
    %88 = vector.broadcast %87 : vector<1x32xf32> to vector<16x32xf32>
    %89 = arith.addf %84, %88 : vector<16x32xf32>
    %c0_33 = arith.constant 0 : index
    %c0_34 = arith.constant 0 : index
    %c0_35 = arith.constant 0 : index
    %90 = vector.load %arg9[%c0_33, %c0_34, %c0_35] : memref<2x32x64xf32, #tpu.memory_space<vmem>>, vector<1x32x64xf32>
    %91 = vector.shape_cast %90 : vector<1x32x64xf32> to vector<32x64xf32>
    %cst_36 = arith.constant dense<0.000000e+00> : vector<16x64xf32>
    %92 = tpu.matmul %89, %91, %cst_36 {dimension_numbers = #tpu.dot_dimension_numbers<[1], [0], [0], [1], [0, 0, 1, 1], [], []>} : vector<16x32xf32>, vector<32x64xf32>, vector<16x64xf32> -> vector<16x64xf32>
    %c0_37 = arith.constant 0 : index
    %c0_38 = arith.constant 0 : index
    %93 = vector.load %arg10[%c0_37, %c0_38] : memref<2x64xf32, #tpu.memory_space<vmem>>, vector<1x64xf32>
    %94 = vector.shape_cast %93 : vector<1x64xf32> to vector<64xf32>
    %95 = vector.shape_cast %94 : vector<64xf32> to vector<1x64xf32>
    %96 = vector.broadcast %95 : vector<1x64xf32> to vector<16x64xf32>
    %97 = arith.addf %92, %96 : vector<16x64xf32>
    %cst_39 = arith.constant 0.000000e+00 : f32
    %98 = vector.broadcast %cst_39 : f32 to vector<16x64xf32>
    %99 = arith.maximumf %97, %98 : vector<16x64xf32>
    %c0_40 = arith.constant 0 : index
    %c0_41 = arith.constant 0 : index
    %c0_42 = arith.constant 0 : index
    %100 = vector.load %arg11[%c0_40, %c0_41, %c0_42] : memref<2x64x32xf32, #tpu.memory_space<vmem>>, vector<1x64x32xf32>
    %101 = vector.shape_cast %100 : vector<1x64x32xf32> to vector<64x32xf32>
    %cst_43 = arith.constant dense<0.000000e+00> : vector<16x32xf32>
    %102 = tpu.matmul %99, %101, %cst_43 {dimension_numbers = #tpu.dot_dimension_numbers<[1], [0], [0], [1], [0, 0, 1, 1], [], []>} : vector<16x64xf32>, vector<64x32xf32>, vector<16x32xf32> -> vector<16x32xf32>
    %c0_44 = arith.constant 0 : index
    %c0_45 = arith.constant 0 : index
    %103 = vector.load %arg12[%c0_44, %c0_45] : memref<2x32xf32, #tpu.memory_space<vmem>>, vector<1x32xf32>
    %104 = vector.shape_cast %103 : vector<1x32xf32> to vector<32xf32>
    %105 = vector.shape_cast %104 : vector<32xf32> to vector<1x32xf32>
    %106 = vector.broadcast %105 : vector<1x32xf32> to vector<16x32xf32>
    %107 = arith.addf %102, %106 : vector<16x32xf32>
    %108 = arith.addf %107, %59 : vector<16x32xf32>
    %109 = arith.mulf %108, %108 : vector<16x32xf32>
    %cst_46 = arith.constant dense<0.000000e+00> : vector<16xf32>
    %110 = vector.multi_reduction <add>, %109, %cst_46 [1] : vector<16x32xf32> to vector<16xf32>
    %111 = vector.shape_cast %110 : vector<16xf32> to vector<16x1xf32>
    %cst_47 = arith.constant 3.200000e+01 : f32
    %112 = vector.broadcast %cst_47 : f32 to vector<16x1xf32>
    %113 = arith.divf %111, %112 : vector<16x1xf32>
    %cst_48 = arith.constant 9.99999997E-7 : f32
    %114 = vector.broadcast %cst_48 : f32 to vector<16x1xf32>
    %115 = arith.addf %113, %114 : vector<16x1xf32>
    %116 = math.rsqrt %115 : vector<16x1xf32>
    %117 = vector.broadcast %116 : vector<16x1xf32> to vector<16x32xf32>
    %118 = arith.mulf %108, %117 : vector<16x32xf32>
    %c1 = arith.constant 1 : index
    %c0_49 = arith.constant 0 : index
    %119 = vector.load %arg2[%c1, %c0_49] : memref<2x32xf32, #tpu.memory_space<vmem>>, vector<1x32xf32>
    %120 = vector.shape_cast %119 : vector<1x32xf32> to vector<32xf32>
    %121 = vector.shape_cast %120 : vector<32xf32> to vector<1x32xf32>
    %122 = vector.broadcast %121 : vector<1x32xf32> to vector<16x32xf32>
    %123 = arith.mulf %118, %122 : vector<16x32xf32>
    %c1_50 = arith.constant 1 : index
    %c0_51 = arith.constant 0 : index
    %c0_52 = arith.constant 0 : index
    %124 = vector.load %arg3[%c1_50, %c0_51, %c0_52] : memref<2x32x96xf32, #tpu.memory_space<vmem>>, vector<1x32x96xf32>
    %125 = vector.shape_cast %124 : vector<1x32x96xf32> to vector<32x96xf32>
    %cst_53 = arith.constant dense<0.000000e+00> : vector<16x96xf32>
    %126 = tpu.matmul %123, %125, %cst_53 {dimension_numbers = #tpu.dot_dimension_numbers<[1], [0], [0], [1], [0, 0, 1, 1], [], []>} : vector<16x32xf32>, vector<32x96xf32>, vector<16x96xf32> -> vector<16x96xf32>
    %c1_54 = arith.constant 1 : index
    %c0_55 = arith.constant 0 : index
    %127 = vector.load %arg4[%c1_54, %c0_55] : memref<2x96xf32, #tpu.memory_space<vmem>>, vector<1x96xf32>
    %128 = vector.shape_cast %127 : vector<1x96xf32> to vector<96xf32>
    %129 = vector.shape_cast %128 : vector<96xf32> to vector<1x96xf32>
    %130 = vector.broadcast %129 : vector<1x96xf32> to vector<16x96xf32>
    %131 = arith.addf %126, %130 : vector<16x96xf32>
    %132 = vector.extract_strided_slice %131 {offsets = [0, 0], sizes = [16, 32], strides = [1, 1]} : vector<16x96xf32> to vector<16x32xf32>
    %133 = vector.extract_strided_slice %131 {offsets = [0, 32], sizes = [16, 32], strides = [1, 1]} : vector<16x96xf32> to vector<16x32xf32>
    %134 = vector.extract_strided_slice %131 {offsets = [0, 64], sizes = [16, 32], strides = [1, 1]} : vector<16x96xf32> to vector<16x32xf32>
    %135 = vector.shape_cast %132 : vector<16x32xf32> to vector<16x4x8xf32>
    %136 = tpu.transpose %135, [1, 0, 2] : vector<16x4x8xf32> -> vector<4x16x8xf32>
    %137 = vector.shape_cast %133 : vector<16x32xf32> to vector<16x4x8xf32>
    %138 = tpu.transpose %137, [1, 0, 2] : vector<16x4x8xf32> -> vector<4x16x8xf32>
    %139 = vector.shape_cast %134 : vector<16x32xf32> to vector<16x4x8xf32>
    %140 = tpu.transpose %139, [1, 0, 2] : vector<16x4x8xf32> -> vector<4x16x8xf32>
    "tpu.trace_start"() <{level = 10 : i32, message = "hqd,hkd->hqk"}> : () -> ()
    %cst_56 = arith.constant dense<0.000000e+00> : vector<4x16x16xf32>
    %141 = tpu.matmul %136, %138, %cst_56 {dimension_numbers = #tpu.dot_dimension_numbers<[2], [2], [1], [1], [0, 0, 0, 1, 1, 1], [0], [0]>} : vector<4x16x8xf32>, vector<4x16x8xf32>, vector<4x16x16xf32> -> vector<4x16x16xf32>
    "tpu.trace_stop"() : () -> ()
    %142 = arith.addf %141, %3 : vector<4x16x16xf32>
    %cst_57 = arith.constant dense<0xFF800000> : vector<4x16xf32>
    %143 = vector.multi_reduction <maximumf>, %142, %cst_57 [2] : vector<4x16x16xf32> to vector<4x16xf32>
    %144 = vector.shape_cast %143 : vector<4x16xf32> to vector<4x16x1xf32>
    %145 = vector.broadcast %144 : vector<4x16x1xf32> to vector<4x16x16xf32>
    %146 = arith.subf %142, %145 : vector<4x16x16xf32>
    %147 = math.exp %146 : vector<4x16x16xf32>
    %cst_58 = arith.constant dense<0.000000e+00> : vector<4x16xf32>
    %148 = vector.multi_reduction <add>, %147, %cst_58 [2] : vector<4x16x16xf32> to vector<4x16xf32>
    %149 = vector.shape_cast %148 : vector<4x16xf32> to vector<4x16x1xf32>
    %150 = tpu.reciprocal %149 : vector<4x16x1xf32> -> vector<4x16x1xf32>
    %151 = vector.broadcast %150 : vector<4x16x1xf32> to vector<4x16x16xf32>
    %152 = arith.mulf %147, %151 : vector<4x16x16xf32>
    "tpu.trace_start"() <{level = 10 : i32, message = "hqk,hkd->hqd"}> : () -> ()
    %cst_59 = arith.constant dense<0.000000e+00> : vector<4x16x8xf32>
    %153 = tpu.matmul %152, %140, %cst_59 {dimension_numbers = #tpu.dot_dimension_numbers<[2], [1], [1], [2], [0, 0, 0, 1, 1, 2], [0], [0]>} : vector<4x16x16xf32>, vector<4x16x8xf32>, vector<4x16x8xf32> -> vector<4x16x8xf32>
    "tpu.trace_stop"() : () -> ()
    %154 = tpu.transpose %153, [1, 0, 2] : vector<4x16x8xf32> -> vector<16x4x8xf32>
    %155 = vector.shape_cast %154 : vector<16x4x8xf32> to vector<16x32xf32>
    %c1_60 = arith.constant 1 : index
    %c0_61 = arith.constant 0 : index
    %c0_62 = arith.constant 0 : index
    %156 = vector.load %arg5[%c1_60, %c0_61, %c0_62] : memref<2x32x32xf32, #tpu.memory_space<vmem>>, vector<1x32x32xf32>
    %157 = vector.shape_cast %156 : vector<1x32x32xf32> to vector<32x32xf32>
    %cst_63 = arith.constant dense<0.000000e+00> : vector<16x32xf32>
    %158 = tpu.matmul %155, %157, %cst_63 {dimension_numbers = #tpu.dot_dimension_numbers<[1], [0], [0], [1], [0, 0, 1, 1], [], []>} : vector<16x32xf32>, vector<32x32xf32>, vector<16x32xf32> -> vector<16x32xf32>
    %c1_64 = arith.constant 1 : index
    %c0_65 = arith.constant 0 : index
    %159 = vector.load %arg6[%c1_64, %c0_65] : memref<2x32xf32, #tpu.memory_space<vmem>>, vector<1x32xf32>
    %160 = vector.shape_cast %159 : vector<1x32xf32> to vector<32xf32>
    %161 = vector.shape_cast %160 : vector<32xf32> to vector<1x32xf32>
    %162 = vector.broadcast %161 : vector<1x32xf32> to vector<16x32xf32>
    %163 = arith.addf %158, %162 : vector<16x32xf32>
    %164 = arith.addf %163, %108 : vector<16x32xf32>
    %cst_66 = arith.constant dense<0.000000e+00> : vector<16xf32>
    %165 = vector.multi_reduction <add>, %164, %cst_66 [1] : vector<16x32xf32> to vector<16xf32>
    %166 = vector.shape_cast %165 : vector<16xf32> to vector<16x1xf32>
    %cst_67 = arith.constant 3.200000e+01 : f32
    %167 = vector.broadcast %cst_67 : f32 to vector<16x1xf32>
    %168 = arith.divf %166, %167 : vector<16x1xf32>
    %169 = arith.mulf %164, %164 : vector<16x32xf32>
    %cst_68 = arith.constant dense<0.000000e+00> : vector<16xf32>
    %170 = vector.multi_reduction <add>, %169, %cst_68 [1] : vector<16x32xf32> to vector<16xf32>
    %171 = vector.shape_cast %170 : vector<16xf32> to vector<16x1xf32>
    %cst_69 = arith.constant 3.200000e+01 : f32
    %172 = vector.broadcast %cst_69 : f32 to vector<16x1xf32>
    %173 = arith.divf %171, %172 : vector<16x1xf32>
    %174 = vector.broadcast %168 : vector<16x1xf32> to vector<16x32xf32>
    %175 = arith.subf %164, %174 : vector<16x32xf32>
    %176 = arith.mulf %168, %168 : vector<16x1xf32>
    %177 = arith.subf %173, %176 : vector<16x1xf32>
    %cst_70 = arith.constant 9.99999997E-7 : f32
    %178 = vector.broadcast %cst_70 : f32 to vector<16x1xf32>
    %179 = arith.addf %177, %178 : vector<16x1xf32>
    %180 = math.rsqrt %179 : vector<16x1xf32>
    %181 = vector.broadcast %180 : vector<16x1xf32> to vector<16x32xf32>
    %182 = arith.mulf %175, %181 : vector<16x32xf32>
    %c1_71 = arith.constant 1 : index
    %c0_72 = arith.constant 0 : index
    %183 = vector.load %arg7[%c1_71, %c0_72] : memref<2x32xf32, #tpu.memory_space<vmem>>, vector<1x32xf32>
    %184 = vector.shape_cast %183 : vector<1x32xf32> to vector<32xf32>
    %cst_73 = arith.constant 1.000000e+00 : f32
    %185 = vector.broadcast %cst_73 : f32 to vector<32xf32>
    %186 = arith.addf %185, %184 : vector<32xf32>
    %187 = vector.shape_cast %186 : vector<32xf32> to vector<1x32xf32>
    %188 = vector.broadcast %187 : vector<1x32xf32> to vector<16x32xf32>
    %189 = arith.mulf %182, %188 : vector<16x32xf32>
    %c1_74 = arith.constant 1 : index
    %c0_75 = arith.constant 0 : index
    %190 = vector.load %arg8[%c1_74, %c0_75] : memref<2x32xf32, #tpu.memory_space<vmem>>, vector<1x32xf32>
    %191 = vector.shape_cast %190 : vector<1x32xf32> to vector<32xf32>
    %192 = vector.shape_cast %191 : vector<32xf32> to vector<1x32xf32>
    %193 = vector.broadcast %192 : vector<1x32xf32> to vector<16x32xf32>
    %194 = arith.addf %189, %193 : vector<16x32xf32>
    %c1_76 = arith.constant 1 : index
    %c0_77 = arith.constant 0 : index
    %c0_78 = arith.constant 0 : index
    %195 = vector.load %arg9[%c1_76, %c0_77, %c0_78] : memref<2x32x64xf32, #tpu.memory_space<vmem>>, vector<1x32x64xf32>
    %196 = vector.shape_cast %195 : vector<1x32x64xf32> to vector<32x64xf32>
    %cst_79 = arith.constant dense<0.000000e+00> : vector<16x64xf32>
    %197 = tpu.matmul %194, %196, %cst_79 {dimension_numbers = #tpu.dot_dimension_numbers<[1], [0], [0], [1], [0, 0, 1, 1], [], []>} : vector<16x32xf32>, vector<32x64xf32>, vector<16x64xf32> -> vector<16x64xf32>
    %c1_80 = arith.constant 1 : index
    %c0_81 = arith.constant 0 : index
    %198 = vector.load %arg10[%c1_80, %c0_81] : memref<2x64xf32, #tpu.memory_space<vmem>>, vector<1x64xf32>
    %199 = vector.shape_cast %198 : vector<1x64xf32> to vector<64xf32>
    %200 = vector.shape_cast %199 : vector<64xf32> to vector<1x64xf32>
    %201 = vector.broadcast %200 : vector<1x64xf32> to vector<16x64xf32>
    %202 = arith.addf %197, %201 : vector<16x64xf32>
    %cst_82 = arith.constant 0.000000e+00 : f32
    %203 = vector.broadcast %cst_82 : f32 to vector<16x64xf32>
    %204 = arith.maximumf %202, %203 : vector<16x64xf32>
    %c1_83 = arith.constant 1 : index
    %c0_84 = arith.constant 0 : index
    %c0_85 = arith.constant 0 : index
    %205 = vector.load %arg11[%c1_83, %c0_84, %c0_85] : memref<2x64x32xf32, #tpu.memory_space<vmem>>, vector<1x64x32xf32>
    %206 = vector.shape_cast %205 : vector<1x64x32xf32> to vector<64x32xf32>
    %cst_86 = arith.constant dense<0.000000e+00> : vector<16x32xf32>
    %207 = tpu.matmul %204, %206, %cst_86 {dimension_numbers = #tpu.dot_dimension_numbers<[1], [0], [0], [1], [0, 0, 1, 1], [], []>} : vector<16x64xf32>, vector<64x32xf32>, vector<16x32xf32> -> vector<16x32xf32>
    %c1_87 = arith.constant 1 : index
    %c0_88 = arith.constant 0 : index
    %208 = vector.load %arg12[%c1_87, %c0_88] : memref<2x32xf32, #tpu.memory_space<vmem>>, vector<1x32xf32>
    %209 = vector.shape_cast %208 : vector<1x32xf32> to vector<32xf32>
    %210 = vector.shape_cast %209 : vector<32xf32> to vector<1x32xf32>
    %211 = vector.broadcast %210 : vector<1x32xf32> to vector<16x32xf32>
    %212 = arith.addf %207, %211 : vector<16x32xf32>
    %213 = arith.addf %212, %164 : vector<16x32xf32>
    %c0_89 = arith.constant 0 : index
    %c0_90 = arith.constant 0 : index
    %214 = vector.load %arg13[%c0_89, %c0_90] : memref<16x32xf32, #tpu.memory_space<vmem>>, vector<16x32xf32>
    tpu.vector_store %arg13[%c0_89, %c0_90], %213 {strides = array<i32>} : memref<16x32xf32, #tpu.memory_space<vmem>>, vector<16x32xf32>,
    return
  }
}

</mosaic_0001>

<llo_original>
// kernel: transformer_pallas.1
$region0: #{transformer_pallas.1}
  #allocation0 [shape = 'u32[]', space=smem, size = 0x4, offset = 0x4, fixed_abs, tag = 'smem constant byte address 0x4 - core index']
  #allocation1 [shape = 'u32[144,128]{1,0:T(1,128)}', space=vmem, size = 0x12000, scoped, tag = 'internal scratch']
  %s0 = inlined_call_operand.hbm [shape: f32[16,32], index: 0, kind: input, shape index: {}]
  %s1 = inlined_call_operand.hbm [shape: f32[16,16], index: 1, kind: input, shape index: {}]
  %s2 = inlined_call_operand.vmem [shape: f32[2,32], index: 2, kind: input, shape index: {}]
  %s3 = inlined_call_operand.vmem [shape: f32[2,32,96], index: 3, kind: input, shape index: {}]
  %s4 = inlined_call_operand.vmem [shape: f32[2,96], index: 4, kind: input, shape index: {}]
  %s5 = inlined_call_operand.vmem [shape: f32[2,32,32], index: 5, kind: input, shape index: {}]
  %s6 = inlined_call_operand.vmem [shape: f32[2,32], index: 6, kind: input, shape index: {}]
  %s7 = inlined_call_operand.vmem [shape: f32[2,32], index: 7, kind: input, shape index: {}]
  %s8 = inlined_call_operand.vmem [shape: f32[2,32], index: 8, kind: input, shape index: {}]
  %s9 = inlined_call_operand.vmem [shape: f32[2,32,64], index: 9, kind: input, shape index: {}]
  %s10 = inlined_call_operand.vmem [shape: f32[2,64], index: 10, kind: input, shape index: {}]
  %s11 = inlined_call_operand.vmem [shape: f32[2,64,32], index: 11, kind: input, shape index: {}]
  %s12 = inlined_call_operand.vmem [shape: f32[2,32], index: 12, kind: input, shape index: {}]
  %s13 = inlined_call_operand.hbm [shape: f32[16,32], index: 13, kind: output, shape index: {}]
  %s14 = sld [smem:[#allocation0]]
  $region70: #{transformer_pallas.1} parent=0
    _
  %s16 = ssub.s32 1, %s14
  %s17 = scalar_select 0, %s16, %s14
  $region1: #{transformer_pallas.1} parent=0
    #allocation2 [shape = 'u8[8192]{0}', space=vmem, size = 0x2000, scoped, tag = 'input window, operand 0, single buffered']
    #allocation3 [shape = 's32[1]{0}', space=sflag, size = 0x4, scoped, tag = 'scoped memory for transformer_pallas.1']
    #allocation4 [shape = 's32[1]{0}', space=sflag, size = 0x4, scoped, tag = 'scoped memory for transformer_pallas.1']
    #allocation5 [shape = 'u8[8192]{0}', space=vmem, size = 0x2000, scoped, tag = 'input window, operand 1, single buffered']
    #allocation6 [shape = 's32[1]{0}', space=sflag, size = 0x4, scoped, tag = 'scoped memory for transformer_pallas.1']
    #allocation7 [shape = 'u8[8192]{0}', space=vmem, size = 0x2000, scoped, tag = 'output window, operand 0, single buffered']
    %18 = vsyncpa [#allocation3], 0
    %19 = vsyncpa [#allocation6], 0
    %20 = vsyncpa [#allocation4], 0
    // Predicated region
    $region2: #{transformer_pallas.1} parent=1 // pred_check
      _
    $region3: #{transformer_pallas.1} parent=1 // pred_check_branch
      %22 = sbr.rel (0) target = $region5
    $region4: #{transformer_pallas.1} parent=1 // pred_region
      %s24 = ssub.s32 256, 256
      %25 = vsyncadd [#allocation3], %s24
      %s26 = sshll.u32 [#allocation2], 4
      %s27 = int_to_ptr.vmem [resolvable:$true] %s26
      %32 = dma.hbm_to_vmem [thread:$0]  %s0, 256, %s27, [#allocation3], 128, 128, 8
    $region5: #{transformer_pallas.1} parent=1 // pred_fallthru
      _
    // Predicated region
    $region6: #{transformer_pallas.1} parent=1 // pred_check
      _
    $region7: #{transformer_pallas.1} parent=1 // pred_check_branch
      %34 = sbr.rel (0) target = $region9
    $region8: #{transformer_pallas.1} parent=1 // pred_region
      %s36 = ssub.s32 256, 256
      %37 = vsyncadd [#allocation6], %s36
      %s38 = sshll.u32 [#allocation5], 4
      %s39 = int_to_ptr.vmem [resolvable:$true] %s38
      %44 = dma.hbm_to_vmem [thread:$0]  %s1, 256, %s39, [#allocation6], 128, 128, 8
    $region9: #{transformer_pallas.1} parent=1 // pred_fallthru
      _
    // Predicated region
    $region10: #{transformer_pallas.1} parent=1 // pred_check
      _
    $region11: #{transformer_pallas.1} parent=1 // pred_check_branch
      %46 = sbr.rel (0) target = $region13
    $region12: #{transformer_pallas.1} parent=1 // pred_region
      _
    $region13: #{transformer_pallas.1} parent=1 // pred_fallthru
      _
    // Predicated region
    $region14: #{transformer_pallas.1} parent=1 // pred_check
      _
    $region15: #{transformer_pallas.1} parent=1 // pred_check_branch
      %48 = sbr.rel (0) target = $region17
    $region16: #{transformer_pallas.1} parent=1 // pred_region
      _
    $region17: #{transformer_pallas.1} parent=1 // pred_fallthru
      _
    // Predicated region
    $region18: #{transformer_pallas.1} parent=1 // pred_check
      _
    $region19: #{transformer_pallas.1} parent=1 // pred_check_branch
      %50 = sbr.rel (0) target = $region21
    $region20: #{transformer_pallas.1} parent=1 // pred_region
      _
    $region21: #{transformer_pallas.1} parent=1 // pred_fallthru
      _
    // Predicated region
    $region22: #{transformer_pallas.1} parent=1 // pred_check
      _
    $region23: #{transformer_pallas.1} parent=1 // pred_check_branch
      %52 = sbr.rel (0) target = $region25
    $region24: #{transformer_pallas.1} parent=1 // pred_region
      _
    $region25: #{transformer_pallas.1} parent=1 // pred_fallthru
      _
    // Predicated region
    $region26: #{transformer_pallas.1} parent=1 // pred_check
      _
    $region27: #{transformer_pallas.1} parent=1 // pred_check_branch
      %54 = sbr.rel (0) target = $region29
    $region28: #{transformer_pallas.1} parent=1 // pred_region
      _
    $region29: #{transformer_pallas.1} parent=1 // pred_fallthru
      _
    // Predicated region
    $region30: #{transformer_pallas.1} parent=1 // pred_check
      _
    $region31: #{transformer_pallas.1} parent=1 // pred_check_branch
      %56 = sbr.rel (0) target = $region33
    $region32: #{transformer_pallas.1} parent=1 // pred_region
      _
    $region33: #{transformer_pallas.1} parent=1 // pred_fallthru
      _
    // Predicated region
    $region34: #{transformer_pallas.1} parent=1 // pred_check
      _
    $region35: #{transformer_pallas.1} parent=1 // pred_check_branch
      %58 = sbr.rel (0) target = $region37
    $region36: #{transformer_pallas.1} parent=1 // pred_region
      _
    $region37: #{transformer_pallas.1} parent=1 // pred_fallthru
      _
    // Predicated region
    $region38: #{transformer_pallas.1} parent=1 // pred_check
      _
    $region39: #{transformer_pallas.1} parent=1 // pred_check_branch
      %60 = sbr.rel (0) target = $region41
    $region40: #{transformer_pallas.1} parent=1 // pred_region
      _
    $region41: #{transformer_pallas.1} parent=1 // pred_fallthru
      _
    // Predicated region
    $region42: #{transformer_pallas.1} parent=1 // pred_check
      _
    $region43: #{transformer_pallas.1} parent=1 // pred_check_branch
      %62 = sbr.rel (0) target = $region45
    $region44: #{transformer_pallas.1} parent=1 // pred_region
      _
    $region45: #{transformer_pallas.1} parent=1 // pred_fallthru
      _
    // Predicated region
    $region46: #{transformer_pallas.1} parent=1 // pred_check
      _
    $region47: #{transformer_pallas.1} parent=1 // pred_check_branch
      %64 = sbr.rel (0) target = $region49
    $region48: #{transformer_pallas.1} parent=1 // pred_region
      _
    $region49: #{transformer_pallas.1} parent=1 // pred_fallthru
      _
    // Predicated region
    $region50: #{transformer_pallas.1} parent=1 // pred_check
      _
    $region51: #{transformer_pallas.1} parent=1 // pred_check_branch
      %66 = sbr.rel (0) target = $region53
    $region52: #{transformer_pallas.1} parent=1 // pred_region
      _
    $region53: #{transformer_pallas.1} parent=1 // pred_fallthru
      _
    // Predicated region
    $region54: #{transformer_pallas.1} parent=1 // pred_check
      _
    $region55: #{transformer_pallas.1} parent=1 // pred_check_branch
      %68 = sbr.rel (0) target = $region57
    $region56: #{transformer_pallas.1} parent=1 // pred_region
      %69 = dma.done [#allocation3], 256
    $region57: #{transformer_pallas.1} parent=1 // pred_fallthru
      _
    // Predicated region
    $region58: #{transformer_pallas.1} parent=1 // pred_check
      _
    $region59: #{transformer_pallas.1} parent=1 // pred_check_branch
      %71 = sbr.rel (0) target = $region61
    $region60: #{transformer_pallas.1} parent=1 // pred_region
      %72 = dma.done [#allocation6], 256
    $region61: #{transformer_pallas.1} parent=1 // pred_fallthru
      _
    %v73 = vld [vmem:[#allocation2] sm:$0xff]
    %v74 = vld [vmem:[#allocation2 + $0x8] sm:$0xff]
    %v75 = vld [vmem:[#allocation5] sm:$0xff]
    %v76 = vld [vmem:[#allocation5 + $0x8] sm:$0xff]
    %v77 = vmul.f32 %v73, %v73
    %v78 = vmul.f32 %v74, %v74
    %vm79 = vcmask 261120
    %v80 = vsel %vm79, %v77, 0.0
    %81 = vadd.xlane.f32.xlu0 %v80
    %v82 = vpop.xlane.xlu0 %81
    %v83 = vsel %vm79, %v78, 0.0
    %84 = vadd.xlane.f32.xlu0 %v83
    %v85 = vpop.xlane.xlu0 %84
    %v86 = vrcp.pop 32.0
    %v87 = vmul.f32 %v82, %v86
    %v88 = vmul.f32 %v85, %v86
    %v89 = vadd.f32 %v87, 1e-06
    %v90 = vadd.f32 %v88, 1e-06
    %v91 = vrsqrt.pop %v89
    %v92 = vrsqrt.pop %v90
    %v93 = vmul.f32 %v73, %v91
    %v94 = vmul.f32 %v74, %v92
    %v95 = vld [vmem:[%s2] sm:$0x1]
    %v96 = vlaneseq
    %v97 = vshrl.u32 %v96, 7
    %v98 = vsub.s32 0, %v97
    %v99 = vrot.slane %v95, %v98
    %v100 = vmul.f32 %v93, %v99
    %v101 = vmul.f32 %v94, %v99
    %v102 = vld [vmem:[%s3] sm:$0xff]
    %v103 = vld [vmem:[%s3 + $0x8] sm:$0xff]
    %v104 = vld [vmem:[%s3 + $0x10] sm:$0xff]
    %v105 = vld [vmem:[%s3 + $0x18] sm:$0xff]
    %v106 = vld [vmem:[%s4] sm:$0x1]
    %v107 = vlaneseq
    %v108 = vshrl.u32 %v107, 7
    %v109 = vsub.s32 0, %v108
    %v110 = vrot.slane %v106, %v109
    %v112 = vsel %vm79, %v100, 0
    %v115 = vsel %vm79, %v101, 0
    %117 = vmatprep.subr.mxu0 0.0
    %118 = vmatpush1.msra.mxu0 %v102
    %119 = vmatprep.subr.mxu0 0.0
    %120 = vmatpush1.msra.mxu0 %v103
    %121 = vmatprep.subr.mxu0 0.0
    %122 = vmatpush1.msra.mxu0 %v104
    %123 = vmatprep.subr.mxu0 0.0
    %124 = vmatpush1.msra.mxu0 %v105
    %125 = vmatprep.subr.mxu0 0.0
    %126 = vmatpush1.msra.mxu0 0.0
    %127 = vmatprep.subr.mxu0 0.0
    %128 = vmatpush1.msra.mxu0 0.0
    %129 = vmatprep.subr.mxu0 0.0
    %130 = vmatpush1.msra.mxu0 0.0
    %131 = vmatprep.subr.mxu0 0.0
    %132 = vmatpush1.msra.mxu0 0.0
    %133 = vmatprep.subr.mxu0 0.0
    %134 = vmatpush1.msra.mxu0 0.0
    %135 = vmatprep.subr.mxu0 0.0
    %136 = vmatpush1.msra.mxu0 0.0
    %137 = vmatprep.subr.mxu0 0.0
    %138 = vmatpush1.msra.mxu0 0.0
    %139 = vmatprep.subr.mxu0 0.0
    %140 = vmatpush1.msra.mxu0 0.0
    %141 = vmatprep.subr.mxu0 0.0
    %142 = vmatpush1.msra.mxu0 0.0
    %143 = vmatprep.subr.mxu0 0.0
    %144 = vmatpush1.msra.mxu0 0.0
    %145 = vmatprep.subr.mxu0 0.0
    %146 = vmatpush1.msra.mxu0 0.0
    %147 = vmatprep.subr.mxu0 0.0
    %148 = vmatpush1.msra.mxu0 0.0
    %149 = vmatprep.subr.mxu0 0.0
    %150 = vmatpush1.msra.mxu0 0.0
    %151 = vmatprep.subr.mxu0 0.0
    %152 = vmatpush1.msra.mxu0 0.0
    %153 = vmatprep.subr.mxu0 0.0
    %154 = vmatpush1.msra.mxu0 0.0
    %155 = vmatprep.subr.mxu0 0.0
    %156 = vmatpush1.msra.mxu0 0.0
    %157 = vmatprep.subr.mxu0 0.0
    %158 = vmatpush1.msra.mxu0 0.0
    %159 = vmatprep.subr.mxu0 0.0
    %160 = vmatpush1.msra.mxu0 0.0
    %161 = vmatprep.subr.mxu0 0.0
    %162 = vmatpush1.msra.mxu0 0.0
    %163 = vmatprep.subr.mxu0 0.0
    %164 = vmatpush1.msra.mxu0 0.0
    %165 = vmatprep.subr.mxu0 0.0
    %166 = vmatpush1.msra.mxu0 0.0
    %167 = vmatprep.subr.mxu0 0.0
    %168 = vmatpush1.msra.mxu0 0.0
    %169 = vmatprep.subr.mxu0 0.0
    %170 = vmatpush1.msra.mxu0 0.0
    %171 = vmatprep.subr.mxu0 0.0
    %172 = vmatpush1.msra.mxu0 0.0
    %173 = vmatprep.subr.mxu0 0.0
    %174 = vmatpush1.msra.mxu0 0.0
    %175 = vmatprep.subr.mxu0 0.0
    %176 = vmatpush1.msra.mxu0 0.0
    %177 = vmatprep.subr.mxu0 0.0
    %178 = vmatpush1.msra.mxu0 0.0
    %179 = vmatprep.subr.mxu0 0.0
    %180 = vmatpush1.msra.mxu0 0.0
    %181 = vmatprep.mubr.f32.mxu0 0.0
    %182 = vmatmul.mubr.f32.gmra.mrb[0].mxu0 %v112
    %v183 = vpop.f32.mrb[0].mxu0
    %v184 = vadd.f32 %v110, %v183
    %v185 = vpop.f32.mrb[0].mxu0
    %186 = vmatprep.mubr.f32.mxu0 0.0
    %187 = vmatmul.mubr.f32.gmra.mrb[0].mxu0 %v115
    %v188 = vpop.f32.mrb[0].mxu0
    %v189 = vadd.f32 %v110, %v188
    %v190 = vpop.f32.mrb[0].mxu0
    %191 = vdwg.mxu0
    %194 = vrot.lane.b32.xlu0 %v184, 120
    %v195 = vpop.permute.xlu0 %194
    %196 = vrot.lane.b32.xlu0 %v189, 120
    %v197 = vpop.permute.xlu0 %196
    %200 = vrot.lane.b32.xlu0 %v184, 112
    %v201 = vpop.permute.xlu0 %200
    %202 = vrot.lane.b32.xlu0 %v189, 112
    %v203 = vpop.permute.xlu0 %202
    %206 = vrot.lane.b32.xlu0 %v184, 104
    %v207 = vpop.permute.xlu0 %206
    %208 = vrot.lane.b32.xlu0 %v189, 104
    %v209 = vpop.permute.xlu0 %208
    %v212 = vcombine.low %v184, %v201
    %v213 = vcombine.high %v184, %v201
    %v215 = vunpack.c.l.s4 1983009808
    %v216 = vunpack.c.0.s8 %v215
    %v217 = vlaneseq
    %v218 = vshrl.u32 %v217, 7
    %v219 = vsub.s32 %v216, %v218
    %v220 = vrot.slane %v212, %v219
    %v222 = vunpack.c.l.s4 1983009808
    %v223 = vunpack.c.0.s8 %v222
    %v224 = vlaneseq
    %v225 = vshrl.u32 %v224, 7
    %v226 = vsub.s32 %v223, %v225
    %v227 = vrot.slane %v213, %v226
    %v228 = vcombine.low %v195, %v207
    %v229 = vcombine.high %v195, %v207
    %v231 = vunpack.c.l.s4 1983009808
    %v232 = vunpack.c.0.s8 %v231
    %v233 = vlaneseq
    %v234 = vshrl.u32 %v233, 7
    %v235 = vsub.s32 %v232, %v234
    %v236 = vrot.slane %v228, %v235
    %v238 = vunpack.c.l.s4 1983009808
    %v239 = vunpack.c.0.s8 %v238
    %v240 = vlaneseq
    %v241 = vshrl.u32 %v240, 7
    %v242 = vsub.s32 %v239, %v241
    %v243 = vrot.slane %v229, %v242
    %v244 = vcombine.low %v220, %v236
    %v245 = vcombine.high %v220, %v236
    %v247 = vunpack.c.l.s4 1934713408
    %v248 = vunpack.c.0.s8 %v247
    %v249 = vlaneseq
    %v250 = vshrl.u32 %v249, 7
    %v251 = vsub.s32 %v248, %v250
    %v252 = vrot.slane %v244, %v251
    %v254 = vunpack.c.l.s4 1934713408
    %v255 = vunpack.c.0.s8 %v254
    %v256 = vlaneseq
    %v257 = vshrl.u32 %v256, 7
    %v258 = vsub.s32 %v255, %v257
    %v259 = vrot.slane %v245, %v258
    %v260 = vcombine.low %v227, %v243
    %v261 = vcombine.high %v227, %v243
    %v263 = vunpack.c.l.s4 1934713408
    %v264 = vunpack.c.0.s8 %v263
    %v265 = vlaneseq
    %v266 = vshrl.u32 %v265, 7
    %v267 = vsub.s32 %v264, %v266
    %v268 = vrot.slane %v260, %v267
    %v270 = vunpack.c.l.s4 1934713408
    %v271 = vunpack.c.0.s8 %v270
    %v272 = vlaneseq
    %v273 = vshrl.u32 %v272, 7
    %v274 = vsub.s32 %v271, %v273
    %v275 = vrot.slane %v261, %v274
    %v276 = vcombine.high %v252, 0.0
    %v277 = vcombine.high %v259, 0.0
    %v278 = vcombine.high %v268, 0.0
    %v279 = vcombine.high %v275, 0.0
    %v280 = vcombine.low %v189, %v203
    %v281 = vcombine.high %v189, %v203
    %v283 = vunpack.c.l.s4 1983009808
    %v284 = vunpack.c.0.s8 %v283
    %v285 = vlaneseq
    %v286 = vshrl.u32 %v285, 7
    %v287 = vsub.s32 %v284, %v286
    %v288 = vrot.slane %v280, %v287
    %v290 = vunpack.c.l.s4 1983009808
    %v291 = vunpack.c.0.s8 %v290
    %v292 = vlaneseq
    %v293 = vshrl.u32 %v292, 7
    %v294 = vsub.s32 %v291, %v293
    %v295 = vrot.slane %v281, %v294
    %v296 = vcombine.low %v197, %v209
    %v297 = vcombine.high %v197, %v209
    %v299 = vunpack.c.l.s4 1983009808
    %v300 = vunpack.c.0.s8 %v299
    %v301 = vlaneseq
    %v302 = vshrl.u32 %v301, 7
    %v303 = vsub.s32 %v300, %v302
    %v304 = vrot.slane %v296, %v303
    %v306 = vunpack.c.l.s4 1983009808
    %v307 = vunpack.c.0.s8 %v306
    %v308 = vlaneseq
    %v309 = vshrl.u32 %v308, 7
    %v310 = vsub.s32 %v307, %v309
    %v311 = vrot.slane %v297, %v310
    %v312 = vcombine.low %v288, %v304
    %v313 = vcombine.high %v288, %v304
    %v315 = vunpack.c.l.s4 1934713408
    %v316 = vunpack.c.0.s8 %v315
    %v317 = vlaneseq
    %v318 = vshrl.u32 %v317, 7
    %v319 = vsub.s32 %v316, %v318
    %v320 = vrot.slane %v312, %v319
    %v322 = vunpack.c.l.s4 1934713408
    %v323 = vunpack.c.0.s8 %v322
    %v324 = vlaneseq
    %v325 = vshrl.u32 %v324, 7
    %v326 = vsub.s32 %v323, %v325
    %v327 = vrot.slane %v313, %v326
    %v328 = vcombine.low %v295, %v311
    %v329 = vcombine.high %v295, %v311
    %v331 = vunpack.c.l.s4 1934713408
    %v332 = vunpack.c.0.s8 %v331
    %v333 = vlaneseq
    %v334 = vshrl.u32 %v333, 7
    %v335 = vsub.s32 %v332, %v334
    %v336 = vrot.slane %v328, %v335
    %v338 = vunpack.c.l.s4 1934713408
    %v339 = vunpack.c.0.s8 %v338
    %v340 = vlaneseq
    %v341 = vshrl.u32 %v340, 7
    %v342 = vsub.s32 %v339, %v341
    %v343 = vrot.slane %v329, %v342
    %v344 = vcombine.high %v320, 0.0
    %v345 = vcombine.high %v327, 0.0
    %v346 = vcombine.high %v336, 0.0
    %v347 = vcombine.high %v343, 0.0
    %v348 = vcombine.low %v252, %v259
    %v350 = vunpack.c.l.s4 1983009808
    %v351 = vunpack.c.0.s8 %v350
    %v352 = vlaneseq
    %v353 = vshrl.u32 %v352, 7
    %v354 = vsub.s32 %v351, %v353
    %v355 = vrot.slane %v348, %v354
    %v356 = vcombine.low %v276, %v277
    %v358 = vunpack.c.l.s4 1983009808
    %v359 = vunpack.c.0.s8 %v358
    %v360 = vlaneseq
    %v361 = vshrl.u32 %v360, 7
    %v362 = vsub.s32 %v359, %v361
    %v363 = vrot.slane %v356, %v362
    %v364 = vcombine.low %v268, %v275
    %v366 = vunpack.c.l.s4 1983009808
    %v367 = vunpack.c.0.s8 %v366
    %v368 = vlaneseq
    %v369 = vshrl.u32 %v368, 7
    %v370 = vsub.s32 %v367, %v369
    %v371 = vrot.slane %v364, %v370
    %v372 = vcombine.low %v278, %v279
    %v374 = vunpack.c.l.s4 1983009808
    %v375 = vunpack.c.0.s8 %v374
    %v376 = vlaneseq
    %v377 = vshrl.u32 %v376, 7
    %v378 = vsub.s32 %v375, %v377
    %v379 = vrot.slane %v372, %v378
    %v380 = vcombine.low %v355, %v363
    %v381 = vcombine.high %v355, %v363
    %v383 = vunpack.c.l.s4 1934713408
    %v384 = vunpack.c.0.s8 %v383
    %v385 = vlaneseq
    %v386 = vshrl.u32 %v385, 7
    %v387 = vsub.s32 %v384, %v386
    %v388 = vrot.slane %v380, %v387
    %v390 = vunpack.c.l.s4 1934713408
    %v391 = vunpack.c.0.s8 %v390
    %v392 = vlaneseq
    %v393 = vshrl.u32 %v392, 7
    %v394 = vsub.s32 %v391, %v393
    %v395 = vrot.slane %v381, %v394
    %v396 = vcombine.low %v371, %v379
    %v397 = vcombine.high %v371, %v379
    %v399 = vunpack.c.l.s4 1934713408
    %v400 = vunpack.c.0.s8 %v399
    %v401 = vlaneseq
    %v402 = vshrl.u32 %v401, 7
    %v403 = vsub.s32 %v400, %v402
    %v404 = vrot.slane %v396, %v403
    %v406 = vunpack.c.l.s4 1934713408
    %v407 = vunpack.c.0.s8 %v406
    %v408 = vlaneseq
    %v409 = vshrl.u32 %v408, 7
    %v410 = vsub.s32 %v407, %v409
    %v411 = vrot.slane %v397, %v410
    %v412 = vcombine.low %v388, %v404
    %v413 = vcombine.high %v388, %v404
    %v414 = vcombine.low %v395, %v411
    %v415 = vcombine.high %v395, %v411
    %v416 = vcombine.low %v320, %v327
    %v418 = vunpack.c.l.s4 1983009808
    %v419 = vunpack.c.0.s8 %v418
    %v420 = vlaneseq
    %v421 = vshrl.u32 %v420, 7
    %v422 = vsub.s32 %v419, %v421
    %v423 = vrot.slane %v416, %v422
    %v424 = vcombine.low %v344, %v345
    %v426 = vunpack.c.l.s4 1983009808
    %v427 = vunpack.c.0.s8 %v426
    %v428 = vlaneseq
    %v429 = vshrl.u32 %v428, 7
    %v430 = vsub.s32 %v427, %v429
    %v431 = vrot.slane %v424, %v430
    %v432 = vcombine.low %v336, %v343
    %v434 = vunpack.c.l.s4 1983009808
    %v435 = vunpack.c.0.s8 %v434
    %v436 = vlaneseq
    %v437 = vshrl.u32 %v436, 7
    %v438 = vsub.s32 %v435, %v437
    %v439 = vrot.slane %v432, %v438
    %v440 = vcombine.low %v346, %v347
    %v442 = vunpack.c.l.s4 1983009808
    %v443 = vunpack.c.0.s8 %v442
    %v444 = vlaneseq
    %v445 = vshrl.u32 %v444, 7
    %v446 = vsub.s32 %v443, %v445
    %v447 = vrot.slane %v440, %v446
    %v448 = vcombine.low %v423, %v431
    %v449 = vcombine.high %v423, %v431
    %v451 = vunpack.c.l.s4 1934713408
    %v452 = vunpack.c.0.s8 %v451
    %v453 = vlaneseq
    %v454 = vshrl.u32 %v453, 7
    %v455 = vsub.s32 %v452, %v454
    %v456 = vrot.slane %v448, %v455
    %v458 = vunpack.c.l.s4 1934713408
    %v459 = vunpack.c.0.s8 %v458
    %v460 = vlaneseq
    %v461 = vshrl.u32 %v460, 7
    %v462 = vsub.s32 %v459, %v461
    %v463 = vrot.slane %v449, %v462
    %v464 = vcombine.low %v439, %v447
    %v465 = vcombine.high %v439, %v447
    %v467 = vunpack.c.l.s4 1934713408
    %v468 = vunpack.c.0.s8 %v467
    %v469 = vlaneseq
    %v470 = vshrl.u32 %v469, 7
    %v471 = vsub.s32 %v468, %v470
    %v472 = vrot.slane %v464, %v471
    %v474 = vunpack.c.l.s4 1934713408
    %v475 = vunpack.c.0.s8 %v474
    %v476 = vlaneseq
    %v477 = vshrl.u32 %v476, 7
    %v478 = vsub.s32 %v475, %v477
    %v479 = vrot.slane %v465, %v478
    %v480 = vcombine.low %v456, %v472
    %v481 = vcombine.high %v456, %v472
    %v482 = vcombine.low %v463, %v479
    %v483 = vcombine.high %v463, %v479
    %484 = vrot.lane.b32.xlu0 %v184, 96
    %v485 = vpop.permute.xlu0 %484
    %486 = vrot.lane.b32.xlu0 %v189, 96
    %v487 = vpop.permute.xlu0 %486
    %488 = vrot.lane.b32.xlu0 %v195, 96
    %v489 = vpop.permute.xlu0 %488
    %490 = vrot.lane.b32.xlu0 %v197, 96
    %v491 = vpop.permute.xlu0 %490
    %492 = vrot.lane.b32.xlu0 %v201, 96
    %v493 = vpop.permute.xlu0 %492
    %494 = vrot.lane.b32.xlu0 %v203, 96
    %v495 = vpop.permute.xlu0 %494
    %496 = vrot.lane.b32.xlu0 %v207, 96
    %v497 = vpop.permute.xlu0 %496
    %498 = vrot.lane.b32.xlu0 %v209, 96
    %v499 = vpop.permute.xlu0 %498
    %v508 = vcombine.low %v485, %v493
    %v509 = vcombine.high %v485, %v493
    %v511 = vunpack.c.l.s4 1983009808
    %v512 = vunpack.c.0.s8 %v511
    %v513 = vlaneseq
    %v514 = vshrl.u32 %v513, 7
    %v515 = vsub.s32 %v512, %v514
    %v516 = vrot.slane %v508, %v515
    %v518 = vunpack.c.l.s4 1983009808
    %v519 = vunpack.c.0.s8 %v518
    %v520 = vlaneseq
    %v521 = vshrl.u32 %v520, 7
    %v522 = vsub.s32 %v519, %v521
    %v523 = vrot.slane %v509, %v522
    %v524 = vcombine.low %v489, %v497
    %v525 = vcombine.high %v489, %v497
    %v527 = vunpack.c.l.s4 1983009808
    %v528 = vunpack.c.0.s8 %v527
    %v529 = vlaneseq
    %v530 = vshrl.u32 %v529, 7
    %v531 = vsub.s32 %v528, %v530
    %v532 = vrot.slane %v524, %v531
    %v534 = vunpack.c.l.s4 1983009808
    %v535 = vunpack.c.0.s8 %v534
    %v536 = vlaneseq
    %v537 = vshrl.u32 %v536, 7
    %v538 = vsub.s32 %v535, %v537
    %v539 = vrot.slane %v525, %v538
    %v540 = vcombine.low %v516, %v532
    %v541 = vcombine.high %v516, %v532
    %v543 = vunpack.c.l.s4 1934713408
    %v544 = vunpack.c.0.s8 %v543
    %v545 = vlaneseq
    %v546 = vshrl.u32 %v545, 7
    %v547 = vsub.s32 %v544, %v546
    %v548 = vrot.slane %v540, %v547
    %v550 = vunpack.c.l.s4 1934713408
    %v551 = vunpack.c.0.s8 %v550
    %v552 = vlaneseq
    %v553 = vshrl.u32 %v552, 7
    %v554 = vsub.s32 %v551, %v553
    %v555 = vrot.slane %v541, %v554
    %v556 = vcombine.low %v523, %v539
    %v557 = vcombine.high %v523, %v539
    %v559 = vunpack.c.l.s4 1934713408
    %v560 = vunpack.c.0.s8 %v559
    %v561 = vlaneseq
    %v562 = vshrl.u32 %v561, 7
    %v563 = vsub.s32 %v560, %v562
    %v564 = vrot.slane %v556, %v563
    %v566 = vunpack.c.l.s4 1934713408
    %v567 = vunpack.c.0.s8 %v566
    %v568 = vlaneseq
    %v569 = vshrl.u32 %v568, 7
    %v570 = vsub.s32 %v567, %v569
    %v571 = vrot.slane %v557, %v570
    %v572 = vcombine.high %v548, 0.0
    %v573 = vcombine.high %v555, 0.0
    %v574 = vcombine.high %v564, 0.0
    %v575 = vcombine.high %v571, 0.0
    %v576 = vcombine.low %v487, %v495
    %v577 = vcombine.high %v487, %v495
    %v579 = vunpack.c.l.s4 1983009808
    %v580 = vunpack.c.0.s8 %v579
    %v581 = vlaneseq
    %v582 = vshrl.u32 %v581, 7
    %v583 = vsub.s32 %v580, %v582
    %v584 = vrot.slane %v576, %v583
    %v586 = vunpack.c.l.s4 1983009808
    %v587 = vunpack.c.0.s8 %v586
    %v588 = vlaneseq
    %v589 = vshrl.u32 %v588, 7
    %v590 = vsub.s32 %v587, %v589
    %v591 = vrot.slane %v577, %v590
    %v592 = vcombine.low %v491, %v499
    %v593 = vcombine.high %v491, %v499
    %v595 = vunpack.c.l.s4 1983009808
    %v596 = vunpack.c.0.s8 %v595
    %v597 = vlaneseq
    %v598 = vshrl.u32 %v597, 7
    %v599 = vsub.s32 %v596, %v598
    %v600 = vrot.slane %v592, %v599
    %v602 = vunpack.c.l.s4 1983009808
    %v603 = vunpack.c.0.s8 %v602
    %v604 = vlaneseq
    %v605 = vshrl.u32 %v604, 7
    %v606 = vsub.s32 %v603, %v605
    %v607 = vrot.slane %v593, %v606
    %v608 = vcombine.low %v584, %v600
    %v609 = vcombine.high %v584, %v600
    %v611 = vunpack.c.l.s4 1934713408
    %v612 = vunpack.c.0.s8 %v611
    %v613 = vlaneseq
    %v614 = vshrl.u32 %v613, 7
    %v615 = vsub.s32 %v612, %v614
    %v616 = vrot.slane %v608, %v615
    %v618 = vunpack.c.l.s4 1934713408
    %v619 = vunpack.c.0.s8 %v618
    %v620 = vlaneseq
    %v621 = vshrl.u32 %v620, 7
    %v622 = vsub.s32 %v619, %v621
    %v623 = vrot.slane %v609, %v622
    %v624 = vcombine.low %v591, %v607
    %v625 = vcombine.high %v591, %v607
    %v627 = vunpack.c.l.s4 1934713408
    %v628 = vunpack.c.0.s8 %v627
    %v629 = vlaneseq
    %v630 = vshrl.u32 %v629, 7
    %v631 = vsub.s32 %v628, %v630
    %v632 = vrot.slane %v624, %v631
    %v634 = vunpack.c.l.s4 1934713408
    %v635 = vunpack.c.0.s8 %v634
    %v636 = vlaneseq
    %v637 = vshrl.u32 %v636, 7
    %v638 = vsub.s32 %v635, %v637
    %v639 = vrot.slane %v625, %v638
    %v640 = vcombine.high %v616, 0.0
    %v641 = vcombine.high %v623, 0.0
    %v642 = vcombine.high %v632, 0.0
    %v643 = vcombine.high %v639, 0.0
    %v644 = vcombine.low %v548, %v555
    %v646 = vunpack.c.l.s4 1983009808
    %v647 = vunpack.c.0.s8 %v646
    %v648 = vlaneseq
    %v649 = vshrl.u32 %v648, 7
    %v650 = vsub.s32 %v647, %v649
    %v651 = vrot.slane %v644, %v650
    %v652 = vcombine.low %v572, %v573
    %v654 = vunpack.c.l.s4 1983009808
    %v655 = vunpack.c.0.s8 %v654
    %v656 = vlaneseq
    %v657 = vshrl.u32 %v656, 7
    %v658 = vsub.s32 %v655, %v657
    %v659 = vrot.slane %v652, %v658
    %v660 = vcombine.low %v564, %v571
    %v662 = vunpack.c.l.s4 1983009808
    %v663 = vunpack.c.0.s8 %v662
    %v664 = vlaneseq
    %v665 = vshrl.u32 %v664, 7
    %v666 = vsub.s32 %v663, %v665
    %v667 = vrot.slane %v660, %v666
    %v668 = vcombine.low %v574, %v575
    %v670 = vunpack.c.l.s4 1983009808
    %v671 = vunpack.c.0.s8 %v670
    %v672 = vlaneseq
    %v673 = vshrl.u32 %v672, 7
    %v674 = vsub.s32 %v671, %v673
    %v675 = vrot.slane %v668, %v674
    %v676 = vcombine.low %v651, %v659
    %v677 = vcombine.high %v651, %v659
    %v679 = vunpack.c.l.s4 1934713408
    %v680 = vunpack.c.0.s8 %v679
    %v681 = vlaneseq
    %v682 = vshrl.u32 %v681, 7
    %v683 = vsub.s32 %v680, %v682
    %v684 = vrot.slane %v676, %v683
    %v686 = vunpack.c.l.s4 1934713408
    %v687 = vunpack.c.0.s8 %v686
    %v688 = vlaneseq
    %v689 = vshrl.u32 %v688, 7
    %v690 = vsub.s32 %v687, %v689
    %v691 = vrot.slane %v677, %v690
    %v692 = vcombine.low %v667, %v675
    %v693 = vcombine.high %v667, %v675
    %v695 = vunpack.c.l.s4 1934713408
    %v696 = vunpack.c.0.s8 %v695
    %v697 = vlaneseq
    %v698 = vshrl.u32 %v697, 7
    %v699 = vsub.s32 %v696, %v698
    %v700 = vrot.slane %v692, %v699
    %v702 = vunpack.c.l.s4 1934713408
    %v703 = vunpack.c.0.s8 %v702
    %v704 = vlaneseq
    %v705 = vshrl.u32 %v704, 7
    %v706 = vsub.s32 %v703, %v705
    %v707 = vrot.slane %v693, %v706
    %v708 = vcombine.low %v684, %v700
    %v709 = vcombine.high %v684, %v700
    %v710 = vcombine.low %v691, %v707
    %v711 = vcombine.high %v691, %v707
    %v712 = vcombine.low %v616, %v623
    %v714 = vunpack.c.l.s4 1983009808
    %v715 = vunpack.c.0.s8 %v714
    %v716 = vlaneseq
    %v717 = vshrl.u32 %v716, 7
    %v718 = vsub.s32 %v715, %v717
    %v719 = vrot.slane %v712, %v718
    %v720 = vcombine.low %v640, %v641
    %v722 = vunpack.c.l.s4 1983009808
    %v723 = vunpack.c.0.s8 %v722
    %v724 = vlaneseq
    %v725 = vshrl.u32 %v724, 7
    %v726 = vsub.s32 %v723, %v725
    %v727 = vrot.slane %v720, %v726
    %v728 = vcombine.low %v632, %v639
    %v730 = vunpack.c.l.s4 1983009808
    %v731 = vunpack.c.0.s8 %v730
    %v732 = vlaneseq
    %v733 = vshrl.u32 %v732, 7
    %v734 = vsub.s32 %v731, %v733
    %v735 = vrot.slane %v728, %v734
    %v736 = vcombine.low %v642, %v643
    %v738 = vunpack.c.l.s4 1983009808
    %v739 = vunpack.c.0.s8 %v738
    %v740 = vlaneseq
    %v741 = vshrl.u32 %v740, 7
    %v742 = vsub.s32 %v739, %v741
    %v743 = vrot.slane %v736, %v742
    %v744 = vcombine.low %v719, %v727
    %v745 = vcombine.high %v719, %v727
    %v747 = vunpack.c.l.s4 1934713408
    %v748 = vunpack.c.0.s8 %v747
    %v749 = vlaneseq
    %v750 = vshrl.u32 %v749, 7
    %v751 = vsub.s32 %v748, %v750
    %v752 = vrot.slane %v744, %v751
    %v754 = vunpack.c.l.s4 1934713408
    %v755 = vunpack.c.0.s8 %v754
    %v756 = vlaneseq
    %v757 = vshrl.u32 %v756, 7
    %v758 = vsub.s32 %v755, %v757
    %v759 = vrot.slane %v745, %v758
    %v760 = vcombine.low %v735, %v743
    %v761 = vcombine.high %v735, %v743
    %v763 = vunpack.c.l.s4 1934713408
    %v764 = vunpack.c.0.s8 %v763
    %v765 = vlaneseq
    %v766 = vshrl.u32 %v765, 7
    %v767 = vsub.s32 %v764, %v766
    %v768 = vrot.slane %v760, %v767
    %v770 = vunpack.c.l.s4 1934713408
    %v771 = vunpack.c.0.s8 %v770
    %v772 = vlaneseq
    %v773 = vshrl.u32 %v772, 7
    %v774 = vsub.s32 %v771, %v773
    %v775 = vrot.slane %v761, %v774
    %v776 = vcombine.low %v752, %v768
    %v777 = vcombine.high %v752, %v768
    %v778 = vcombine.low %v759, %v775
    %v779 = vcombine.high %v759, %v775
    %780 = vrot.lane.b32.xlu0 %v184, 64
    %v781 = vpop.permute.xlu0 %780
    %782 = vrot.lane.b32.xlu0 %v189, 64
    %v783 = vpop.permute.xlu0 %782
    %784 = vrot.lane.b32.xlu0 %v195, 64
    %v785 = vpop.permute.xlu0 %784
    %786 = vrot.lane.b32.xlu0 %v197, 64
    %v787 = vpop.permute.xlu0 %786
    %788 = vrot.lane.b32.xlu0 %v201, 64
    %v789 = vpop.permute.xlu0 %788
    %790 = vrot.lane.b32.xlu0 %v203, 64
    %v791 = vpop.permute.xlu0 %790
    %792 = vrot.lane.b32.xlu0 %v207, 64
    %v793 = vpop.permute.xlu0 %792
    %794 = vrot.lane.b32.xlu0 %v209, 64
    %v795 = vpop.permute.xlu0 %794
    %v804 = vcombine.low %v781, %v789
    %v805 = vcombine.high %v781, %v789
    %v807 = vunpack.c.l.s4 1983009808
    %v808 = vunpack.c.0.s8 %v807
    %v809 = vlaneseq
    %v810 = vshrl.u32 %v809, 7
    %v811 = vsub.s32 %v808, %v810
    %v812 = vrot.slane %v804, %v811
    %v814 = vunpack.c.l.s4 1983009808
    %v815 = vunpack.c.0.s8 %v814
    %v816 = vlaneseq
    %v817 = vshrl.u32 %v816, 7
    %v818 = vsub.s32 %v815, %v817
    %v819 = vrot.slane %v805, %v818
    %v820 = vcombine.low %v785, %v793
    %v821 = vcombine.high %v785, %v793
    %v823 = vunpack.c.l.s4 1983009808
    %v824 = vunpack.c.0.s8 %v823
    %v825 = vlaneseq
    %v826 = vshrl.u32 %v825, 7
    %v827 = vsub.s32 %v824, %v826
    %v828 = vrot.slane %v820, %v827
    %v830 = vunpack.c.l.s4 1983009808
    %v831 = vunpack.c.0.s8 %v830
    %v832 = vlaneseq
    %v833 = vshrl.u32 %v832, 7
    %v834 = vsub.s32 %v831, %v833
    %v835 = vrot.slane %v821, %v834
    %v836 = vcombine.low %v812, %v828
    %v837 = vcombine.high %v812, %v828
    %v839 = vunpack.c.l.s4 1934713408
    %v840 = vunpack.c.0.s8 %v839
    %v841 = vlaneseq
    %v842 = vshrl.u32 %v841, 7
    %v843 = vsub.s32 %v840, %v842
    %v844 = vrot.slane %v836, %v843
    %v846 = vunpack.c.l.s4 1934713408
    %v847 = vunpack.c.0.s8 %v846
    %v848 = vlaneseq
    %v849 = vshrl.u32 %v848, 7
    %v850 = vsub.s32 %v847, %v849
    %v851 = vrot.slane %v837, %v850
    %v852 = vcombine.low %v819, %v835
    %v853 = vcombine.high %v819, %v835
    %v855 = vunpack.c.l.s4 1934713408
    %v856 = vunpack.c.0.s8 %v855
    %v857 = vlaneseq
    %v858 = vshrl.u32 %v857, 7
    %v859 = vsub.s32 %v856, %v858
    %v860 = vrot.slane %v852, %v859
    %v862 = vunpack.c.l.s4 1934713408
    %v863 = vunpack.c.0.s8 %v862
    %v864 = vlaneseq
    %v865 = vshrl.u32 %v864, 7
    %v866 = vsub.s32 %v863, %v865
    %v867 = vrot.slane %v853, %v866
    %v868 = vcombine.high %v844, 0.0
    %v869 = vcombine.high %v851, 0.0
    %v870 = vcombine.high %v860, 0.0
    %v871 = vcombine.high %v867, 0.0
    %v872 = vcombine.low %v783, %v791
    %v873 = vcombine.high %v783, %v791
    %v875 = vunpack.c.l.s4 1983009808
    %v876 = vunpack.c.0.s8 %v875
    %v877 = vlaneseq
    %v878 = vshrl.u32 %v877, 7
    %v879 = vsub.s32 %v876, %v878
    %v880 = vrot.slane %v872, %v879
    %v882 = vunpack.c.l.s4 1983009808
    %v883 = vunpack.c.0.s8 %v882
    %v884 = vlaneseq
    %v885 = vshrl.u32 %v884, 7
    %v886 = vsub.s32 %v883, %v885
    %v887 = vrot.slane %v873, %v886
    %v888 = vcombine.low %v787, %v795
    %v889 = vcombine.high %v787, %v795
    %v891 = vunpack.c.l.s4 1983009808
    %v892 = vunpack.c.0.s8 %v891
    %v893 = vlaneseq
    %v894 = vshrl.u32 %v893, 7
    %v895 = vsub.s32 %v892, %v894
    %v896 = vrot.slane %v888, %v895
    %v898 = vunpack.c.l.s4 1983009808
    %v899 = vunpack.c.0.s8 %v898
    %v900 = vlaneseq
    %v901 = vshrl.u32 %v900, 7
    %v902 = vsub.s32 %v899, %v901
    %v903 = vrot.slane %v889, %v902
    %v904 = vcombine.low %v880, %v896
    %v905 = vcombine.high %v880, %v896
    %v907 = vunpack.c.l.s4 1934713408
    %v908 = vunpack.c.0.s8 %v907
    %v909 = vlaneseq
    %v910 = vshrl.u32 %v909, 7
    %v911 = vsub.s32 %v908, %v910
    %v912 = vrot.slane %v904, %v911
    %v914 = vunpack.c.l.s4 1934713408
    %v915 = vunpack.c.0.s8 %v914
    %v916 = vlaneseq
    %v917 = vshrl.u32 %v916, 7
    %v918 = vsub.s32 %v915, %v917
    %v919 = vrot.slane %v905, %v918
    %v920 = vcombine.low %v887, %v903
    %v921 = vcombine.high %v887, %v903
    %v923 = vunpack.c.l.s4 1934713408
    %v924 = vunpack.c.0.s8 %v923
    %v925 = vlaneseq
    %v926 = vshrl.u32 %v925, 7
    %v927 = vsub.s32 %v924, %v926
    %v928 = vrot.slane %v920, %v927
    %v930 = vunpack.c.l.s4 1934713408
    %v931 = vunpack.c.0.s8 %v930
    %v932 = vlaneseq
    %v933 = vshrl.u32 %v932, 7
    %v934 = vsub.s32 %v931, %v933
    %v935 = vrot.slane %v921, %v934
    %v936 = vcombine.high %v912, 0.0
    %v937 = vcombine.high %v919, 0.0
    %v938 = vcombine.high %v928, 0.0
    %v939 = vcombine.high %v935, 0.0
    %v940 = vcombine.low %v844, %v851
    %v942 = vunpack.c.l.s4 1983009808
    %v943 = vunpack.c.0.s8 %v942
    %v944 = vlaneseq
    %v945 = vshrl.u32 %v944, 7
    %v946 = vsub.s32 %v943, %v945
    %v947 = vrot.slane %v940, %v946
    %v948 = vcombine.low %v868, %v869
    %v950 = vunpack.c.l.s4 1983009808
    %v951 = vunpack.c.0.s8 %v950
    %v952 = vlaneseq
    %v953 = vshrl.u32 %v952, 7
    %v954 = vsub.s32 %v951, %v953
    %v955 = vrot.slane %v948, %v954
    %v956 = vcombine.low %v860, %v867
    %v958 = vunpack.c.l.s4 1983009808
    %v959 = vunpack.c.0.s8 %v958
    %v960 = vlaneseq
    %v961 = vshrl.u32 %v960, 7
    %v962 = vsub.s32 %v959, %v961
    %v963 = vrot.slane %v956, %v962
    %v964 = vcombine.low %v870, %v871
    %v966 = vunpack.c.l.s4 1983009808
    %v967 = vunpack.c.0.s8 %v966
    %v968 = vlaneseq
    %v969 = vshrl.u32 %v968, 7
    %v970 = vsub.s32 %v967, %v969
    %v971 = vrot.slane %v964, %v970
    %v972 = vcombine.low %v947, %v955
    %v973 = vcombine.high %v947, %v955
    %v975 = vunpack.c.l.s4 1934713408
    %v976 = vunpack.c.0.s8 %v975
    %v977 = vlaneseq
    %v978 = vshrl.u32 %v977, 7
    %v979 = vsub.s32 %v976, %v978
    %v980 = vrot.slane %v972, %v979
    %v982 = vunpack.c.l.s4 1934713408
    %v983 = vunpack.c.0.s8 %v982
    %v984 = vlaneseq
    %v985 = vshrl.u32 %v984, 7
    %v986 = vsub.s32 %v983, %v985
    %v987 = vrot.slane %v973, %v986
    %v988 = vcombine.low %v963, %v971
    %v989 = vcombine.high %v963, %v971
    %v991 = vunpack.c.l.s4 1934713408
    %v992 = vunpack.c.0.s8 %v991
    %v993 = vlaneseq
    %v994 = vshrl.u32 %v993, 7
    %v995 = vsub.s32 %v992, %v994
    %v996 = vrot.slane %v988, %v995
    %v998 = vunpack.c.l.s4 1934713408
    %v999 = vunpack.c.0.s8 %v998
    %v1000 = vlaneseq
    %v1001 = vshrl.u32 %v1000, 7
    %v1002 = vsub.s32 %v999, %v1001
    %v1003 = vrot.slane %v989, %v1002
    %v1004 = vcombine.low %v980, %v996
    %v1005 = vcombine.high %v980, %v996
    %v1006 = vcombine.low %v987, %v1003
    %v1007 = vcombine.high %v987, %v1003
    %v1008 = vcombine.low %v912, %v919
    %v1010 = vunpack.c.l.s4 1983009808
    %v1011 = vunpack.c.0.s8 %v1010
    %v1012 = vlaneseq
    %v1013 = vshrl.u32 %v1012, 7
    %v1014 = vsub.s32 %v1011, %v1013
    %v1015 = vrot.slane %v1008, %v1014
    %v1016 = vcombine.low %v936, %v937
    %v1018 = vunpack.c.l.s4 1983009808
    %v1019 = vunpack.c.0.s8 %v1018
    %v1020 = vlaneseq
    %v1021 = vshrl.u32 %v1020, 7
    %v1022 = vsub.s32 %v1019, %v1021
    %v1023 = vrot.slane %v1016, %v1022
    %v1024 = vcombine.low %v928, %v935
    %v1026 = vunpack.c.l.s4 1983009808
    %v1027 = vunpack.c.0.s8 %v1026
    %v1028 = vlaneseq
    %v1029 = vshrl.u32 %v1028, 7
    %v1030 = vsub.s32 %v1027, %v1029
    %v1031 = vrot.slane %v1024, %v1030
    %v1032 = vcombine.low %v938, %v939
    %v1034 = vunpack.c.l.s4 1983009808
    %v1035 = vunpack.c.0.s8 %v1034
    %v1036 = vlaneseq
    %v1037 = vshrl.u32 %v1036, 7
    %v1038 = vsub.s32 %v1035, %v1037
    %v1039 = vrot.slane %v1032, %v1038
    %v1040 = vcombine.low %v1015, %v1023
    %v1041 = vcombine.high %v1015, %v1023
    %v1043 = vunpack.c.l.s4 1934713408
    %v1044 = vunpack.c.0.s8 %v1043
    %v1045 = vlaneseq
    %v1046 = vshrl.u32 %v1045, 7
    %v1047 = vsub.s32 %v1044, %v1046
    %v1048 = vrot.slane %v1040, %v1047
    %v1050 = vunpack.c.l.s4 1934713408
    %v1051 = vunpack.c.0.s8 %v1050
    %v1052 = vlaneseq
    %v1053 = vshrl.u32 %v1052, 7
    %v1054 = vsub.s32 %v1051, %v1053
    %v1055 = vrot.slane %v1041, %v1054
    %v1056 = vcombine.low %v1031, %v1039
    %v1057 = vcombine.high %v1031, %v1039
    %v1059 = vunpack.c.l.s4 1934713408
    %v1060 = vunpack.c.0.s8 %v1059
    %v1061 = vlaneseq
    %v1062 = vshrl.u32 %v1061, 7
    %v1063 = vsub.s32 %v1060, %v1062
    %v1064 = vrot.slane %v1056, %v1063
    %v1066 = vunpack.c.l.s4 1934713408
    %v1067 = vunpack.c.0.s8 %v1066
    %v1068 = vlaneseq
    %v1069 = vshrl.u32 %v1068, 7
    %v1070 = vsub.s32 %v1067, %v1069
    %v1071 = vrot.slane %v1057, %v1070
    %v1072 = vcombine.low %v1048, %v1064
    %v1073 = vcombine.high %v1048, %v1064
    %v1074 = vcombine.low %v1055, %v1071
    %v1075 = vcombine.high %v1055, %v1071
    %vm1076 = vcmask 64512
    %v1078 = vsel %vm1076, %v412, 0
    %v1081 = vsel %vm1076, %v480, 0
    %v1084 = vsel %vm1076, %v708, 0
    %v1087 = vsel %vm1076, %v776, 0
    %1089 = vmatprep.subr.mxu0 0.0
    %1090 = vmatpush1.xpose.msra.mxu0 %v1084
    %1091 = vmatprep.subr.mxu0 0.0
    %1092 = vmatpush1.xpose.msra.mxu0 %v1087
    %1093 = vmatprep.subr.mxu0 0.0
    %1094 = vmatpush1.xpose.msra.mxu0 0.0
    %1095 = vmatprep.subr.mxu0 0.0
    %1096 = vmatpush1.xpose.msra.mxu0 0.0
    %1097 = vmatprep.subr.mxu0 0.0
    %1098 = vmatpush1.xpose.msra.mxu0 0.0
    %1099 = vmatprep.subr.mxu0 0.0
    %1100 = vmatpush1.xpose.msra.mxu0 0.0
    %1101 = vmatprep.subr.mxu0 0.0
    %1102 = vmatpush1.xpose.msra.mxu0 0.0
    %1103 = vmatprep.subr.mxu0 0.0
    %1104 = vmatpush1.xpose.msra.mxu0 0.0
    %1105 = vmatprep.subr.mxu0 0.0
    %1106 = vmatpush1.xpose.msra.mxu0 0.0
    %1107 = vmatprep.subr.mxu0 0.0
    %1108 = vmatpush1.xpose.msra.mxu0 0.0
    %1109 = vmatprep.subr.mxu0 0.0
    %1110 = vmatpush1.xpose.msra.mxu0 0.0
    %1111 = vmatprep.subr.mxu0 0.0
    %1112 = vmatpush1.xpose.msra.mxu0 0.0
    %1113 = vmatprep.subr.mxu0 0.0
    %1114 = vmatpush1.xpose.msra.mxu0 0.0
    %1115 = vmatprep.subr.mxu0 0.0
    %1116 = vmatpush1.xpose.msra.mxu0 0.0
    %1117 = vmatprep.subr.mxu0 0.0
    %1118 = vmatpush1.xpose.msra.mxu0 0.0
    %1119 = vmatprep.subr.mxu0 0.0
    %1120 = vmatpush1.xpose.msra.mxu0 0.0
    %1121 = vmatprep.subr.mxu0 0.0
    %1122 = vmatpush1.xpose.msra.mxu0 0.0
    %1123 = vmatprep.subr.mxu0 0.0
    %1124 = vmatpush1.xpose.msra.mxu0 0.0
    %1125 = vmatprep.subr.mxu0 0.0
    %1126 = vmatpush1.xpose.msra.mxu0 0.0
    %1127 = vmatprep.subr.mxu0 0.0
    %1128 = vmatpush1.xpose.msra.mxu0 0.0
    %1129 = vmatprep.subr.mxu0 0.0
    %1130 = vmatpush1.xpose.msra.mxu0 0.0
    %1131 = vmatprep.subr.mxu0 0.0
    %1132 = vmatpush1.xpose.msra.mxu0 0.0
    %1133 = vmatprep.subr.mxu0 0.0
    %1134 = vmatpush1.xpose.msra.mxu0 0.0
    %1135 = vmatprep.subr.mxu0 0.0
    %1136 = vmatpush1.xpose.msra.mxu0 0.0
    %1137 = vmatprep.subr.mxu0 0.0
    %1138 = vmatpush1.xpose.msra.mxu0 0.0
    %1139 = vmatprep.subr.mxu0 0.0
    %1140 = vmatpush1.xpose.msra.mxu0 0.0
    %1141 = vmatprep.subr.mxu0 0.0
    %1142 = vmatpush1.xpose.msra.mxu0 0.0
    %1143 = vmatprep.subr.mxu0 0.0
    %1144 = vmatpush1.xpose.msra.mxu0 0.0
    %1145 = vmatprep.subr.mxu0 0.0
    %1146 = vmatpush1.xpose.msra.mxu0 0.0
    %1147 = vmatprep.subr.mxu0 0.0
    %1148 = vmatpush1.xpose.msra.mxu0 0.0
    %1149 = vmatprep.subr.mxu0 0.0
    %1150 = vmatpush1.xpose.msra.mxu0 0.0
    %1151 = vmatprep.subr.mxu0 0.0
    %1152 = vmatpush1.xpose.msra.mxu0 0.0
    %1153 = vmatprep.mubr.f32.mxu0 0.0
    %1154 = vmatmul.mubr.f32.gmra.mrb[0].mxu0 %v1078
    %v1155 = vpop.f32.mrb[0].mxu0
    %v1156 = vadd.f32 %v75, %v1155
    %v1157 = vpop.f32.mrb[0].mxu0
    %1158 = vmatprep.mubr.f32.mxu0 0.0
    %1159 = vmatmul.mubr.f32.gmra.mrb[0].mxu0 %v1081
    %v1160 = vpop.f32.mrb[0].mxu0
    %v1161 = vadd.f32 %v76, %v1160
    %v1162 = vpop.f32.mrb[0].mxu0
    %1163 = vdwg.mxu0
    %v1165 = vsel %vm1076, %v413, 0
    %v1168 = vsel %vm1076, %v481, 0
    %v1171 = vsel %vm1076, %v709, 0
    %v1174 = vsel %vm1076, %v777, 0
    %1176 = vmatprep.subr.mxu0 0.0
    %1177 = vmatpush1.xpose.msra.mxu0 %v1171
    %1178 = vmatprep.subr.mxu0 0.0
    %1179 = vmatpush1.xpose.msra.mxu0 %v1174
    %1180 = vmatprep.subr.mxu0 0.0
    %1181 = vmatpush1.xpose.msra.mxu0 0.0
    %1182 = vmatprep.subr.mxu0 0.0
    %1183 = vmatpush1.xpose.msra.mxu0 0.0
    %1184 = vmatprep.subr.mxu0 0.0
    %1185 = vmatpush1.xpose.msra.mxu0 0.0
    %1186 = vmatprep.subr.mxu0 0.0
    %1187 = vmatpush1.xpose.msra.mxu0 0.0
    %1188 = vmatprep.subr.mxu0 0.0
    %1189 = vmatpush1.xpose.msra.mxu0 0.0
    %1190 = vmatprep.subr.mxu0 0.0
    %1191 = vmatpush1.xpose.msra.mxu0 0.0
    %1192 = vmatprep.subr.mxu0 0.0
    %1193 = vmatpush1.xpose.msra.mxu0 0.0
    %1194 = vmatprep.subr.mxu0 0.0
    %1195 = vmatpush1.xpose.msra.mxu0 0.0
    %1196 = vmatprep.subr.mxu0 0.0
    %1197 = vmatpush1.xpose.msra.mxu0 0.0
    %1198 = vmatprep.subr.mxu0 0.0
    %1199 = vmatpush1.xpose.msra.mxu0 0.0
    %1200 = vmatprep.subr.mxu0 0.0
    %1201 = vmatpush1.xpose.msra.mxu0 0.0
    %1202 = vmatprep.subr.mxu0 0.0
    %1203 = vmatpush1.xpose.msra.mxu0 0.0
    %1204 = vmatprep.subr.mxu0 0.0
    %1205 = vmatpush1.xpose.msra.mxu0 0.0
    %1206 = vmatprep.subr.mxu0 0.0
    %1207 = vmatpush1.xpose.msra.mxu0 0.0
    %1208 = vmatprep.subr.mxu0 0.0
    %1209 = vmatpush1.xpose.msra.mxu0 0.0
    %1210 = vmatprep.subr.mxu0 0.0
    %1211 = vmatpush1.xpose.msra.mxu0 0.0
    %1212 = vmatprep.subr.mxu0 0.0
    %1213 = vmatpush1.xpose.msra.mxu0 0.0
    %1214 = vmatprep.subr.mxu0 0.0
    %1215 = vmatpush1.xpose.msra.mxu0 0.0
    %1216 = vmatprep.subr.mxu0 0.0
    %1217 = vmatpush1.xpose.msra.mxu0 0.0
    %1218 = vmatprep.subr.mxu0 0.0
    %1219 = vmatpush1.xpose.msra.mxu0 0.0
    %1220 = vmatprep.subr.mxu0 0.0
    %1221 = vmatpush1.xpose.msra.mxu0 0.0
    %1222 = vmatprep.subr.mxu0 0.0
    %1223 = vmatpush1.xpose.msra.mxu0 0.0
    %1224 = vmatprep.subr.mxu0 0.0
    %1225 = vmatpush1.xpose.msra.mxu0 0.0
    %1226 = vmatprep.subr.mxu0 0.0
    %1227 = vmatpush1.xpose.msra.mxu0 0.0
    %1228 = vmatprep.subr.mxu0 0.0
    %1229 = vmatpush1.xpose.msra.mxu0 0.0
    %1230 = vmatprep.subr.mxu0 0.0
    %1231 = vmatpush1.xpose.msra.mxu0 0.0
    %1232 = vmatprep.subr.mxu0 0.0
    %1233 = vmatpush1.xpose.msra.mxu0 0.0
    %1234 = vmatprep.subr.mxu0 0.0
    %1235 = vmatpush1.xpose.msra.mxu0 0.0
    %1236 = vmatprep.subr.mxu0 0.0
    %1237 = vmatpush1.xpose.msra.mxu0 0.0
    %1238 = vmatprep.subr.mxu0 0.0
    %1239 = vmatpush1.xpose.msra.mxu0 0.0
    %1240 = vmatprep.mubr.f32.mxu0 0.0
    %1241 = vmatmul.mubr.f32.gmra.mrb[0].mxu0 %v1165
    %v1242 = vpop.f32.mrb[0].mxu0
    %v1243 = vadd.f32 %v75, %v1242
    %v1244 = vpop.f32.mrb[0].mxu0
    %1245 = vmatprep.mubr.f32.mxu0 0.0
    %1246 = vmatmul.mubr.f32.gmra.mrb[0].mxu0 %v1168
    %v1247 = vpop.f32.mrb[0].mxu0
    %v1248 = vadd.f32 %v76, %v1247
    %v1249 = vpop.f32.mrb[0].mxu0
    %1250 = vdwg.mxu0
    %v1252 = vsel %vm1076, %v414, 0
    %v1255 = vsel %vm1076, %v482, 0
    %v1258 = vsel %vm1076, %v710, 0
    %v1261 = vsel %vm1076, %v778, 0
    %1263 = vmatprep.subr.mxu0 0.0
    %1264 = vmatpush1.xpose.msra.mxu0 %v1258
    %1265 = vmatprep.subr.mxu0 0.0
    %1266 = vmatpush1.xpose.msra.mxu0 %v1261
    %1267 = vmatprep.subr.mxu0 0.0
    %1268 = vmatpush1.xpose.msra.mxu0 0.0
    %1269 = vmatprep.subr.mxu0 0.0
    %1270 = vmatpush1.xpose.msra.mxu0 0.0
    %1271 = vmatprep.subr.mxu0 0.0
    %1272 = vmatpush1.xpose.msra.mxu0 0.0
    %1273 = vmatprep.subr.mxu0 0.0
    %1274 = vmatpush1.xpose.msra.mxu0 0.0
    %1275 = vmatprep.subr.mxu0 0.0
    %1276 = vmatpush1.xpose.msra.mxu0 0.0
    %1277 = vmatprep.subr.mxu0 0.0
    %1278 = vmatpush1.xpose.msra.mxu0 0.0
    %1279 = vmatprep.subr.mxu0 0.0
    %1280 = vmatpush1.xpose.msra.mxu0 0.0
    %1281 = vmatprep.subr.mxu0 0.0
    %1282 = vmatpush1.xpose.msra.mxu0 0.0
    %1283 = vmatprep.subr.mxu0 0.0
    %1284 = vmatpush1.xpose.msra.mxu0 0.0
    %1285 = vmatprep.subr.mxu0 0.0
    %1286 = vmatpush1.xpose.msra.mxu0 0.0
    %1287 = vmatprep.subr.mxu0 0.0
    %1288 = vmatpush1.xpose.msra.mxu0 0.0
    %1289 = vmatprep.subr.mxu0 0.0
    %1290 = vmatpush1.xpose.msra.mxu0 0.0
    %1291 = vmatprep.subr.mxu0 0.0
    %1292 = vmatpush1.xpose.msra.mxu0 0.0
    %1293 = vmatprep.subr.mxu0 0.0
    %1294 = vmatpush1.xpose.msra.mxu0 0.0
    %1295 = vmatprep.subr.mxu0 0.0
    %1296 = vmatpush1.xpose.msra.mxu0 0.0
    %1297 = vmatprep.subr.mxu0 0.0
    %1298 = vmatpush1.xpose.msra.mxu0 0.0
    %1299 = vmatprep.subr.mxu0 0.0
    %1300 = vmatpush1.xpose.msra.mxu0 0.0
    %1301 = vmatprep.subr.mxu0 0.0
    %1302 = vmatpush1.xpose.msra.mxu0 0.0
    %1303 = vmatprep.subr.mxu0 0.0
    %1304 = vmatpush1.xpose.msra.mxu0 0.0
    %1305 = vmatprep.subr.mxu0 0.0
    %1306 = vmatpush1.xpose.msra.mxu0 0.0
    %1307 = vmatprep.subr.mxu0 0.0
    %1308 = vmatpush1.xpose.msra.mxu0 0.0
    %1309 = vmatprep.subr.mxu0 0.0
    %1310 = vmatpush1.xpose.msra.mxu0 0.0
    %1311 = vmatprep.subr.mxu0 0.0
    %1312 = vmatpush1.xpose.msra.mxu0 0.0
    %1313 = vmatprep.subr.mxu0 0.0
    %1314 = vmatpush1.xpose.msra.mxu0 0.0
    %1315 = vmatprep.subr.mxu0 0.0
    %1316 = vmatpush1.xpose.msra.mxu0 0.0
    %1317 = vmatprep.subr.mxu0 0.0
    %1318 = vmatpush1.xpose.msra.mxu0 0.0
    %1319 = vmatprep.subr.mxu0 0.0
    %1320 = vmatpush1.xpose.msra.mxu0 0.0
    %1321 = vmatprep.subr.mxu0 0.0
    %1322 = vmatpush1.xpose.msra.mxu0 0.0
    %1323 = vmatprep.subr.mxu0 0.0
    %1324 = vmatpush1.xpose.msra.mxu0 0.0
    %1325 = vmatprep.subr.mxu0 0.0
    %1326 = vmatpush1.xpose.msra.mxu0 0.0
    %1327 = vmatprep.mubr.f32.mxu0 0.0
    %1328 = vmatmul.mubr.f32.gmra.mrb[0].mxu0 %v1252
    %v1329 = vpop.f32.mrb[0].mxu0
    %v1330 = vadd.f32 %v75, %v1329
    %v1331 = vpop.f32.mrb[0].mxu0
    %1332 = vmatprep.mubr.f32.mxu0 0.0
    %1333 = vmatmul.mubr.f32.gmra.mrb[0].mxu0 %v1255
    %v1334 = vpop.f32.mrb[0].mxu0
    %v1335 = vadd.f32 %v76, %v1334
    %v1336 = vpop.f32.mrb[0].mxu0
    %1337 = vdwg.mxu0
    %v1339 = vsel %vm1076, %v415, 0
    %v1342 = vsel %vm1076, %v483, 0
    %v1345 = vsel %vm1076, %v711, 0
    %v1348 = vsel %vm1076, %v779, 0
    %1350 = vmatprep.subr.mxu0 0.0
    %1351 = vmatpush1.xpose.msra.mxu0 %v1345
    %1352 = vmatprep.subr.mxu0 0.0
    %1353 = vmatpush1.xpose.msra.mxu0 %v1348
    %1354 = vmatprep.subr.mxu0 0.0
    %1355 = vmatpush1.xpose.msra.mxu0 0.0
    %1356 = vmatprep.subr.mxu0 0.0
    %1357 = vmatpush1.xpose.msra.mxu0 0.0
    %1358 = vmatprep.subr.mxu0 0.0
    %1359 = vmatpush1.xpose.msra.mxu0 0.0
    %1360 = vmatprep.subr.mxu0 0.0
    %1361 = vmatpush1.xpose.msra.mxu0 0.0
    %1362 = vmatprep.subr.mxu0 0.0
    %1363 = vmatpush1.xpose.msra.mxu0 0.0
    %1364 = vmatprep.subr.mxu0 0.0
    %1365 = vmatpush1.xpose.msra.mxu0 0.0
    %1366 = vmatprep.subr.mxu0 0.0
    %1367 = vmatpush1.xpose.msra.mxu0 0.0
    %1368 = vmatprep.subr.mxu0 0.0
    %1369 = vmatpush1.xpose.msra.mxu0 0.0
    %1370 = vmatprep.subr.mxu0 0.0
    %1371 = vmatpush1.xpose.msra.mxu0 0.0
    %1372 = vmatprep.subr.mxu0 0.0
    %1373 = vmatpush1.xpose.msra.mxu0 0.0
    %1374 = vmatprep.subr.mxu0 0.0
    %1375 = vmatpush1.xpose.msra.mxu0 0.0
    %1376 = vmatprep.subr.mxu0 0.0
    %1377 = vmatpush1.xpose.msra.mxu0 0.0
    %1378 = vmatprep.subr.mxu0 0.0
    %1379 = vmatpush1.xpose.msra.mxu0 0.0
    %1380 = vmatprep.subr.mxu0 0.0
    %1381 = vmatpush1.xpose.msra.mxu0 0.0
    %1382 = vmatprep.subr.mxu0 0.0
    %1383 = vmatpush1.xpose.msra.mxu0 0.0
    %1384 = vmatprep.subr.mxu0 0.0
    %1385 = vmatpush1.xpose.msra.mxu0 0.0
    %1386 = vmatprep.subr.mxu0 0.0
    %1387 = vmatpush1.xpose.msra.mxu0 0.0
    %1388 = vmatprep.subr.mxu0 0.0
    %1389 = vmatpush1.xpose.msra.mxu0 0.0
    %1390 = vmatprep.subr.mxu0 0.0
    %1391 = vmatpush1.xpose.msra.mxu0 0.0
    %1392 = vmatprep.subr.mxu0 0.0
    %1393 = vmatpush1.xpose.msra.mxu0 0.0
    %1394 = vmatprep.subr.mxu0 0.0
    %1395 = vmatpush1.xpose.msra.mxu0 0.0
    %1396 = vmatprep.subr.mxu0 0.0
    %1397 = vmatpush1.xpose.msra.mxu0 0.0
    %1398 = vmatprep.subr.mxu0 0.0
    %1399 = vmatpush1.xpose.msra.mxu0 0.0
    %1400 = vmatprep.subr.mxu0 0.0
    %1401 = vmatpush1.xpose.msra.mxu0 0.0
    %1402 = vmatprep.subr.mxu0 0.0
    %1403 = vmatpush1.xpose.msra.mxu0 0.0
    %1404 = vmatprep.subr.mxu0 0.0
    %1405 = vmatpush1.xpose.msra.mxu0 0.0
    %1406 = vmatprep.subr.mxu0 0.0
    %1407 = vmatpush1.xpose.msra.mxu0 0.0
    %1408 = vmatprep.subr.mxu0 0.0
    %1409 = vmatpush1.xpose.msra.mxu0 0.0
    %1410 = vmatprep.subr.mxu0 0.0
    %1411 = vmatpush1.xpose.msra.mxu0 0.0
    %1412 = vmatprep.subr.mxu0 0.0
    %1413 = vmatpush1.xpose.msra.mxu0 0.0
    %1414 = vmatprep.mubr.f32.mxu0 0.0
    %1415 = vmatmul.mubr.f32.gmra.mrb[0].mxu0 %v1339
    %v1416 = vpop.f32.mrb[0].mxu0
    %v1417 = vadd.f32 %v75, %v1416
    %v1418 = vpop.f32.mrb[0].mxu0
    %1419 = vmatprep.mubr.f32.mxu0 0.0
    %1420 = vmatmul.mubr.f32.gmra.mrb[0].mxu0 %v1342
    %v1421 = vpop.f32.mrb[0].mxu0
    %v1422 = vadd.f32 %v76, %v1421
    %v1423 = vpop.f32.mrb[0].mxu0
    %1424 = vdwg.mxu0
    %vm1425 = vcmask 130048
    %v1426 = vsel %vm1425, %v1156, -inf
    %1427 = vmax.xlane.f32.xlu0 %v1426
    %v1428 = vpop.xlane.xlu0 %1427
    %v1429 = vsel %vm1425, %v1161, -inf
    %1430 = vmax.xlane.f32.xlu0 %v1429
    %v1431 = vpop.xlane.xlu0 %1430
    %v1432 = vsel %vm1425, %v1243, -inf
    %1433 = vmax.xlane.f32.xlu0 %v1432
    %v1434 = vpop.xlane.xlu0 %1433
    %v1435 = vsel %vm1425, %v1248, -inf
    %1436 = vmax.xlane.f32.xlu0 %v1435
    %v1437 = vpop.xlane.xlu0 %1436
    %v1438 = vsel %vm1425, %v1330, -inf
    %1439 = vmax.xlane.f32.xlu0 %v1438
    %v1440 = vpop.xlane.xlu0 %1439
    %v1441 = vsel %vm1425, %v1335, -inf
    %1442 = vmax.xlane.f32.xlu0 %v1441
    %v1443 = vpop.xlane.xlu0 %1442
    %v1444 = vsel %vm1425, %v1417, -inf
    %1445 = vmax.xlane.f32.xlu0 %v1444
    %v1446 = vpop.xlane.xlu0 %1445
    %v1447 = vsel %vm1425, %v1422, -inf
    %1448 = vmax.xlane.f32.xlu0 %v1447
    %v1449 = vpop.xlane.xlu0 %1448
    %v1450 = vsub.f32 %v1156, %v1428
    %v1451 = vsub.f32 %v1161, %v1431
    %v1452 = vsub.f32 %v1243, %v1434
    %v1453 = vsub.f32 %v1248, %v1437
    %v1454 = vsub.f32 %v1330, %v1440
    %v1455 = vsub.f32 %v1335, %v1443
    %v1456 = vsub.f32 %v1417, %v1446
    %v1457 = vsub.f32 %v1422, %v1449
    %v1458 = vmul.f32 %v1450, 1.442695
    %v1459 = vpow.pop %v1458
    %v1460 = vmul.f32 %v1451, 1.442695
    %v1461 = vpow.pop %v1460
    %v1462 = vmul.f32 %v1452, 1.442695
    %v1463 = vpow.pop %v1462
    %v1464 = vmul.f32 %v1453, 1.442695
    %v1465 = vpow.pop %v1464
    %v1466 = vmul.f32 %v1454, 1.442695
    %v1467 = vpow.pop %v1466
    %v1468 = vmul.f32 %v1455, 1.442695
    %v1469 = vpow.pop %v1468
    %v1470 = vmul.f32 %v1456, 1.442695
    %v1471 = vpow.pop %v1470
    %v1472 = vmul.f32 %v1457, 1.442695
    %v1473 = vpow.pop %v1472
    %v1474 = vsel %vm1425, %v1459, 0.0
    %1475 = vadd.xlane.f32.xlu0 %v1474
    %v1476 = vpop.xlane.xlu0 %1475
    %v1477 = vsel %vm1425, %v1461, 0.0
    %1478 = vadd.xlane.f32.xlu0 %v1477
    %v1479 = vpop.xlane.xlu0 %1478
    %v1480 = vsel %vm1425, %v1463, 0.0
    %1481 = vadd.xlane.f32.xlu0 %v1480
    %v1482 = vpop.xlane.xlu0 %1481
    %v1483 = vsel %vm1425, %v1465, 0.0
    %1484 = vadd.xlane.f32.xlu0 %v1483
    %v1485 = vpop.xlane.xlu0 %1484
    %v1486 = vsel %vm1425, %v1467, 0.0
    %1487 = vadd.xlane.f32.xlu0 %v1486
    %v1488 = vpop.xlane.xlu0 %1487
    %v1489 = vsel %vm1425, %v1469, 0.0
    %1490 = vadd.xlane.f32.xlu0 %v1489
    %v1491 = vpop.xlane.xlu0 %1490
    %v1492 = vsel %vm1425, %v1471, 0.0
    %1493 = vadd.xlane.f32.xlu0 %v1492
    %v1494 = vpop.xlane.xlu0 %1493
    %v1495 = vsel %vm1425, %v1473, 0.0
    %1496 = vadd.xlane.f32.xlu0 %v1495
    %v1497 = vpop.xlane.xlu0 %1496
    %v1498 = vrcp.pop %v1476
    %v1499 = vrcp.pop %v1479
    %v1500 = vrcp.pop %v1482
    %v1501 = vrcp.pop %v1485
    %v1502 = vrcp.pop %v1488
    %v1503 = vrcp.pop %v1491
    %v1504 = vrcp.pop %v1494
    %v1505 = vrcp.pop %v1497
    %v1506 = vmul.f32 %v1459, %v1498
    %v1507 = vmul.f32 %v1461, %v1499
    %v1508 = vmul.f32 %v1463, %v1500
    %v1509 = vmul.f32 %v1465, %v1501
    %v1510 = vmul.f32 %v1467, %v1502
    %v1511 = vmul.f32 %v1469, %v1503
    %v1512 = vmul.f32 %v1471, %v1504
    %v1513 = vmul.f32 %v1473, %v1505
    %v1515 = vsel %vm1425, %v1506, 0
    %v1518 = vsel %vm1425, %v1507, 0
    %1520 = vmatprep.subr.mxu0 0.0
    %1521 = vmatpush1.msra.mxu0 %v1004
    %1522 = vmatprep.subr.mxu0 0.0
    %1523 = vmatpush1.msra.mxu0 %v1072
    %1524 = vmatprep.subr.mxu0 0.0
    %1525 = vmatpush1.msra.mxu0 0.0
    %1526 = vmatprep.subr.mxu0 0.0
    %1527 = vmatpush1.msra.mxu0 0.0
    %1528 = vmatprep.subr.mxu0 0.0
    %1529 = vmatpush1.msra.mxu0 0.0
    %1530 = vmatprep.subr.mxu0 0.0
    %1531 = vmatpush1.msra.mxu0 0.0
    %1532 = vmatprep.subr.mxu0 0.0
    %1533 = vmatpush1.msra.mxu0 0.0
    %1534 = vmatprep.subr.mxu0 0.0
    %1535 = vmatpush1.msra.mxu0 0.0
    %1536 = vmatprep.subr.mxu0 0.0
    %1537 = vmatpush1.msra.mxu0 0.0
    %1538 = vmatprep.subr.mxu0 0.0
    %1539 = vmatpush1.msra.mxu0 0.0
    %1540 = vmatprep.subr.mxu0 0.0
    %1541 = vmatpush1.msra.mxu0 0.0
    %1542 = vmatprep.subr.mxu0 0.0
    %1543 = vmatpush1.msra.mxu0 0.0
    %1544 = vmatprep.subr.mxu0 0.0
    %1545 = vmatpush1.msra.mxu0 0.0
    %1546 = vmatprep.subr.mxu0 0.0
    %1547 = vmatpush1.msra.mxu0 0.0
    %1548 = vmatprep.subr.mxu0 0.0
    %1549 = vmatpush1.msra.mxu0 0.0
    %1550 = vmatprep.subr.mxu0 0.0
    %1551 = vmatpush1.msra.mxu0 0.0
    %1552 = vmatprep.subr.mxu0 0.0
    %1553 = vmatpush1.msra.mxu0 0.0
    %1554 = vmatprep.subr.mxu0 0.0
    %1555 = vmatpush1.msra.mxu0 0.0
    %1556 = vmatprep.subr.mxu0 0.0
    %1557 = vmatpush1.msra.mxu0 0.0
    %1558 = vmatprep.subr.mxu0 0.0
    %1559 = vmatpush1.msra.mxu0 0.0
    %1560 = vmatprep.subr.mxu0 0.0
    %1561 = vmatpush1.msra.mxu0 0.0
    %1562 = vmatprep.subr.mxu0 0.0
    %1563 = vmatpush1.msra.mxu0 0.0
    %1564 = vmatprep.subr.mxu0 0.0
    %1565 = vmatpush1.msra.mxu0 0.0
    %1566 = vmatprep.subr.mxu0 0.0
    %1567 = vmatpush1.msra.mxu0 0.0
    %1568 = vmatprep.subr.mxu0 0.0
    %1569 = vmatpush1.msra.mxu0 0.0
    %1570 = vmatprep.subr.mxu0 0.0
    %1571 = vmatpush1.msra.mxu0 0.0
    %1572 = vmatprep.subr.mxu0 0.0
    %1573 = vmatpush1.msra.mxu0 0.0
    %1574 = vmatprep.subr.mxu0 0.0
    %1575 = vmatpush1.msra.mxu0 0.0
    %1576 = vmatprep.subr.mxu0 0.0
    %1577 = vmatpush1.msra.mxu0 0.0
    %1578 = vmatprep.subr.mxu0 0.0
    %1579 = vmatpush1.msra.mxu0 0.0
    %1580 = vmatprep.subr.mxu0 0.0
    %1581 = vmatpush1.msra.mxu0 0.0
    %1582 = vmatprep.subr.mxu0 0.0
    %1583 = vmatpush1.msra.mxu0 0.0
    %1584 = vmatprep.mubr.f32.mxu0 0.0
    %1585 = vmatmul.mubr.f32.gmra.mrb[0].mxu0 %v1515
    %v1586 = vpop.f32.mrb[0].mxu0
    %v1587 = vadd.f32 0.0, %v1586
    %v1588 = vpop.f32.mrb[0].mxu0
    %1589 = vmatprep.mubr.f32.mxu0 0.0
    %1590 = vmatmul.mubr.f32.gmra.mrb[0].mxu0 %v1518
    %v1591 = vpop.f32.mrb[0].mxu0
    %v1592 = vadd.f32 0.0, %v1591
    %v1593 = vpop.f32.mrb[0].mxu0
    %1594 = vdwg.mxu0
    %v1596 = vsel %vm1425, %v1508, 0
    %v1599 = vsel %vm1425, %v1509, 0
    %1601 = vmatprep.subr.mxu0 0.0
    %1602 = vmatpush1.msra.mxu0 %v1005
    %1603 = vmatprep.subr.mxu0 0.0
    %1604 = vmatpush1.msra.mxu0 %v1073
    %1605 = vmatprep.subr.mxu0 0.0
    %1606 = vmatpush1.msra.mxu0 0.0
    %1607 = vmatprep.subr.mxu0 0.0
    %1608 = vmatpush1.msra.mxu0 0.0
    %1609 = vmatprep.subr.mxu0 0.0
    %1610 = vmatpush1.msra.mxu0 0.0
    %1611 = vmatprep.subr.mxu0 0.0
    %1612 = vmatpush1.msra.mxu0 0.0
    %1613 = vmatprep.subr.mxu0 0.0
    %1614 = vmatpush1.msra.mxu0 0.0
    %1615 = vmatprep.subr.mxu0 0.0
    %1616 = vmatpush1.msra.mxu0 0.0
    %1617 = vmatprep.subr.mxu0 0.0
    %1618 = vmatpush1.msra.mxu0 0.0
    %1619 = vmatprep.subr.mxu0 0.0
    %1620 = vmatpush1.msra.mxu0 0.0
    %1621 = vmatprep.subr.mxu0 0.0
    %1622 = vmatpush1.msra.mxu0 0.0
    %1623 = vmatprep.subr.mxu0 0.0
    %1624 = vmatpush1.msra.mxu0 0.0
    %1625 = vmatprep.subr.mxu0 0.0
    %1626 = vmatpush1.msra.mxu0 0.0
    %1627 = vmatprep.subr.mxu0 0.0
    %1628 = vmatpush1.msra.mxu0 0.0
    %1629 = vmatprep.subr.mxu0 0.0
    %1630 = vmatpush1.msra.mxu0 0.0
    %1631 = vmatprep.subr.mxu0 0.0
    %1632 = vmatpush1.msra.mxu0 0.0
    %1633 = vmatprep.subr.mxu0 0.0
    %1634 = vmatpush1.msra.mxu0 0.0
    %1635 = vmatprep.subr.mxu0 0.0
    %1636 = vmatpush1.msra.mxu0 0.0
    %1637 = vmatprep.subr.mxu0 0.0
    %1638 = vmatpush1.msra.mxu0 0.0
    %1639 = vmatprep.subr.mxu0 0.0
    %1640 = vmatpush1.msra.mxu0 0.0
    %1641 = vmatprep.subr.mxu0 0.0
    %1642 = vmatpush1.msra.mxu0 0.0
    %1643 = vmatprep.subr.mxu0 0.0
    %1644 = vmatpush1.msra.mxu0 0.0
    %1645 = vmatprep.subr.mxu0 0.0
    %1646 = vmatpush1.msra.mxu0 0.0
    %1647 = vmatprep.subr.mxu0 0.0
    %1648 = vmatpush1.msra.mxu0 0.0
    %1649 = vmatprep.subr.mxu0 0.0
    %1650 = vmatpush1.msra.mxu0 0.0
    %1651 = vmatprep.subr.mxu0 0.0
    %1652 = vmatpush1.msra.mxu0 0.0
    %1653 = vmatprep.subr.mxu0 0.0
    %1654 = vmatpush1.msra.mxu0 0.0
    %1655 = vmatprep.subr.mxu0 0.0
    %1656 = vmatpush1.msra.mxu0 0.0
    %1657 = vmatprep.subr.mxu0 0.0
    %1658 = vmatpush1.msra.mxu0 0.0
    %1659 = vmatprep.subr.mxu0 0.0
    %1660 = vmatpush1.msra.mxu0 0.0
    %1661 = vmatprep.subr.mxu0 0.0
    %1662 = vmatpush1.msra.mxu0 0.0
    %1663 = vmatprep.subr.mxu0 0.0
    %1664 = vmatpush1.msra.mxu0 0.0
    %1665 = vmatprep.mubr.f32.mxu0 0.0
    %1666 = vmatmul.mubr.f32.gmra.mrb[0].mxu0 %v1596
    %v1667 = vpop.f32.mrb[0].mxu0
    %v1668 = vadd.f32 0.0, %v1667
    %v1669 = vpop.f32.mrb[0].mxu0
    %1670 = vmatprep.mubr.f32.mxu0 0.0
    %1671 = vmatmul.mubr.f32.gmra.mrb[0].mxu0 %v1599
    %v1672 = vpop.f32.mrb[0].mxu0
    %v1673 = vadd.f32 0.0, %v1672
    %v1674 = vpop.f32.mrb[0].mxu0
    %1675 = vdwg.mxu0
    %v1677 = vsel %vm1425, %v1510, 0
    %v1680 = vsel %vm1425, %v1511, 0
    %1682 = vmatprep.subr.mxu0 0.0
    %1683 = vmatpush1.msra.mxu0 %v1006
    %1684 = vmatprep.subr.mxu0 0.0
    %1685 = vmatpush1.msra.mxu0 %v1074
    %1686 = vmatprep.subr.mxu0 0.0
    %1687 = vmatpush1.msra.mxu0 0.0
    %1688 = vmatprep.subr.mxu0 0.0
    %1689 = vmatpush1.msra.mxu0 0.0
    %1690 = vmatprep.subr.mxu0 0.0
    %1691 = vmatpush1.msra.mxu0 0.0
    %1692 = vmatprep.subr.mxu0 0.0
    %1693 = vmatpush1.msra.mxu0 0.0
    %1694 = vmatprep.subr.mxu0 0.0
    %1695 = vmatpush1.msra.mxu0 0.0
    %1696 = vmatprep.subr.mxu0 0.0
    %1697 = vmatpush1.msra.mxu0 0.0
    %1698 = vmatprep.subr.mxu0 0.0
    %1699 = vmatpush1.msra.mxu0 0.0
    %1700 = vmatprep.subr.mxu0 0.0
    %1701 = vmatpush1.msra.mxu0 0.0
    %1702 = vmatprep.subr.mxu0 0.0
    %1703 = vmatpush1.msra.mxu0 0.0
    %1704 = vmatprep.subr.mxu0 0.0
    %1705 = vmatpush1.msra.mxu0 0.0
    %1706 = vmatprep.subr.mxu0 0.0
    %1707 = vmatpush1.msra.mxu0 0.0
    %1708 = vmatprep.subr.mxu0 0.0
    %1709 = vmatpush1.msra.mxu0 0.0
    %1710 = vmatprep.subr.mxu0 0.0
    %1711 = vmatpush1.msra.mxu0 0.0
    %1712 = vmatprep.subr.mxu0 0.0
    %1713 = vmatpush1.msra.mxu0 0.0
    %1714 = vmatprep.subr.mxu0 0.0
    %1715 = vmatpush1.msra.mxu0 0.0
    %1716 = vmatprep.subr.mxu0 0.0
    %1717 = vmatpush1.msra.mxu0 0.0
    %1718 = vmatprep.subr.mxu0 0.0
    %1719 = vmatpush1.msra.mxu0 0.0
    %1720 = vmatprep.subr.mxu0 0.0
    %1721 = vmatpush1.msra.mxu0 0.0
    %1722 = vmatprep.subr.mxu0 0.0
    %1723 = vmatpush1.msra.mxu0 0.0
    %1724 = vmatprep.subr.mxu0 0.0
    %1725 = vmatpush1.msra.mxu0 0.0
    %1726 = vmatprep.subr.mxu0 0.0
    %1727 = vmatpush1.msra.mxu0 0.0
    %1728 = vmatprep.subr.mxu0 0.0
    %1729 = vmatpush1.msra.mxu0 0.0
    %1730 = vmatprep.subr.mxu0 0.0
    %1731 = vmatpush1.msra.mxu0 0.0
    %1732 = vmatprep.subr.mxu0 0.0
    %1733 = vmatpush1.msra.mxu0 0.0
    %1734 = vmatprep.subr.mxu0 0.0
    %1735 = vmatpush1.msra.mxu0 0.0
    %1736 = vmatprep.subr.mxu0 0.0
    %1737 = vmatpush1.msra.mxu0 0.0
    %1738 = vmatprep.subr.mxu0 0.0
    %1739 = vmatpush1.msra.mxu0 0.0
    %1740 = vmatprep.subr.mxu0 0.0
    %1741 = vmatpush1.msra.mxu0 0.0
    %1742 = vmatprep.subr.mxu0 0.0
    %1743 = vmatpush1.msra.mxu0 0.0
    %1744 = vmatprep.subr.mxu0 0.0
    %1745 = vmatpush1.msra.mxu0 0.0
    %1746 = vmatprep.mubr.f32.mxu0 0.0
    %1747 = vmatmul.mubr.f32.gmra.mrb[0].mxu0 %v1677
    %v1748 = vpop.f32.mrb[0].mxu0
    %v1749 = vadd.f32 0.0, %v1748
    %v1750 = vpop.f32.mrb[0].mxu0
    %1751 = vmatprep.mubr.f32.mxu0 0.0
    %1752 = vmatmul.mubr.f32.gmra.mrb[0].mxu0 %v1680
    %v1753 = vpop.f32.mrb[0].mxu0
    %v1754 = vadd.f32 0.0, %v1753
    %v1755 = vpop.f32.mrb[0].mxu0
    %1756 = vdwg.mxu0
    %v1758 = vsel %vm1425, %v1512, 0
    %v1761 = vsel %vm1425, %v1513, 0
    %1763 = vmatprep.subr.mxu0 0.0
    %1764 = vmatpush1.msra.mxu0 %v1007
    %1765 = vmatprep.subr.mxu0 0.0
    %1766 = vmatpush1.msra.mxu0 %v1075
    %1767 = vmatprep.subr.mxu0 0.0
    %1768 = vmatpush1.msra.mxu0 0.0
    %1769 = vmatprep.subr.mxu0 0.0
    %1770 = vmatpush1.msra.mxu0 0.0
    %1771 = vmatprep.subr.mxu0 0.0
    %1772 = vmatpush1.msra.mxu0 0.0
    %1773 = vmatprep.subr.mxu0 0.0
    %1774 = vmatpush1.msra.mxu0 0.0
    %1775 = vmatprep.subr.mxu0 0.0
    %1776 = vmatpush1.msra.mxu0 0.0
    %1777 = vmatprep.subr.mxu0 0.0
    %1778 = vmatpush1.msra.mxu0 0.0
    %1779 = vmatprep.subr.mxu0 0.0
    %1780 = vmatpush1.msra.mxu0 0.0
    %1781 = vmatprep.subr.mxu0 0.0
    %1782 = vmatpush1.msra.mxu0 0.0
    %1783 = vmatprep.subr.mxu0 0.0
    %1784 = vmatpush1.msra.mxu0 0.0
    %1785 = vmatprep.subr.mxu0 0.0
    %1786 = vmatpush1.msra.mxu0 0.0
    %1787 = vmatprep.subr.mxu0 0.0
    %1788 = vmatpush1.msra.mxu0 0.0
    %1789 = vmatprep.subr.mxu0 0.0
    %1790 = vmatpush1.msra.mxu0 0.0
    %1791 = vmatprep.subr.mxu0 0.0
    %1792 = vmatpush1.msra.mxu0 0.0
    %1793 = vmatprep.subr.mxu0 0.0
    %1794 = vmatpush1.msra.mxu0 0.0
    %1795 = vmatprep.subr.mxu0 0.0
    %1796 = vmatpush1.msra.mxu0 0.0
    %1797 = vmatprep.subr.mxu0 0.0
    %1798 = vmatpush1.msra.mxu0 0.0
    %1799 = vmatprep.subr.mxu0 0.0
    %1800 = vmatpush1.msra.mxu0 0.0
    %1801 = vmatprep.subr.mxu0 0.0
    %1802 = vmatpush1.msra.mxu0 0.0
    %1803 = vmatprep.subr.mxu0 0.0
    %1804 = vmatpush1.msra.mxu0 0.0
    %1805 = vmatprep.subr.mxu0 0.0
    %1806 = vmatpush1.msra.mxu0 0.0
    %1807 = vmatprep.subr.mxu0 0.0
    %1808 = vmatpush1.msra.mxu0 0.0
    %1809 = vmatprep.subr.mxu0 0.0
    %1810 = vmatpush1.msra.mxu0 0.0
    %1811 = vmatprep.subr.mxu0 0.0
    %1812 = vmatpush1.msra.mxu0 0.0
    %1813 = vmatprep.subr.mxu0 0.0
    %1814 = vmatpush1.msra.mxu0 0.0
    %1815 = vmatprep.subr.mxu0 0.0
    %1816 = vmatpush1.msra.mxu0 0.0
    %1817 = vmatprep.subr.mxu0 0.0
    %1818 = vmatpush1.msra.mxu0 0.0
    %1819 = vmatprep.subr.mxu0 0.0
    %1820 = vmatpush1.msra.mxu0 0.0
    %1821 = vmatprep.subr.mxu0 0.0
    %1822 = vmatpush1.msra.mxu0 0.0
    %1823 = vmatprep.subr.mxu0 0.0
    %1824 = vmatpush1.msra.mxu0 0.0
    %1825 = vmatprep.subr.mxu0 0.0
    %1826 = vmatpush1.msra.mxu0 0.0
    %1827 = vmatprep.mubr.f32.mxu0 0.0
    %1828 = vmatmul.mubr.f32.gmra.mrb[0].mxu0 %v1758
    %v1829 = vpop.f32.mrb[0].mxu0
    %v1830 = vadd.f32 0.0, %v1829
    %v1831 = vpop.f32.mrb[0].mxu0
    %1832 = vmatprep.mubr.f32.mxu0 0.0
    %1833 = vmatmul.mubr.f32.gmra.mrb[0].mxu0 %v1761
    %v1834 = vpop.f32.mrb[0].mxu0
    %v1835 = vadd.f32 0.0, %v1834
    %v1836 = vpop.f32.mrb[0].mxu0
    %1837 = vdwg.mxu0
    %v1838 = vcombine.low %v1587, %v1749
    %v1839 = vcombine.high %v1587, %v1749
    %v1841 = vunpack.c.l.s4 1983009808
    %v1842 = vunpack.c.0.s8 %v1841
    %v1843 = vlaneseq
    %v1844 = vshrl.u32 %v1843, 7
    %v1845 = vsub.s32 %v1842, %v1844
    %v1846 = vrot.slane %v1838, %v1845
    %v1848 = vunpack.c.l.s4 1983009808
    %v1849 = vunpack.c.0.s8 %v1848
    %v1850 = vlaneseq
    %v1851 = vshrl.u32 %v1850, 7
    %v1852 = vsub.s32 %v1849, %v1851
    %v1853 = vrot.slane %v1839, %v1852
    %v1854 = vcombine.low %v1668, %v1830
    %v1855 = vcombine.high %v1668, %v1830
    %v1857 = vunpack.c.l.s4 1983009808
    %v1858 = vunpack.c.0.s8 %v1857
    %v1859 = vlaneseq
    %v1860 = vshrl.u32 %v1859, 7
    %v1861 = vsub.s32 %v1858, %v1860
    %v1862 = vrot.slane %v1854, %v1861
    %v1864 = vunpack.c.l.s4 1983009808
    %v1865 = vunpack.c.0.s8 %v1864
    %v1866 = vlaneseq
    %v1867 = vshrl.u32 %v1866, 7
    %v1868 = vsub.s32 %v1865, %v1867
    %v1869 = vrot.slane %v1855, %v1868
    %v1870 = vcombine.low %v1846, %v1862
    %v1871 = vcombine.high %v1846, %v1862
    %v1873 = vunpack.c.l.s4 1934713408
    %v1874 = vunpack.c.0.s8 %v1873
    %v1875 = vlaneseq
    %v1876 = vshrl.u32 %v1875, 7
    %v1877 = vsub.s32 %v1874, %v1876
    %v1878 = vrot.slane %v1870, %v1877
    %v1880 = vunpack.c.l.s4 1934713408
    %v1881 = vunpack.c.0.s8 %v1880
    %v1882 = vlaneseq
    %v1883 = vshrl.u32 %v1882, 7
    %v1884 = vsub.s32 %v1881, %v1883
    %v1885 = vrot.slane %v1871, %v1884
    %v1886 = vcombine.low %v1853, %v1869
    %v1887 = vcombine.high %v1853, %v1869
    %v1889 = vunpack.c.l.s4 1934713408
    %v1890 = vunpack.c.0.s8 %v1889
    %v1891 = vlaneseq
    %v1892 = vshrl.u32 %v1891, 7
    %v1893 = vsub.s32 %v1890, %v1892
    %v1894 = vrot.slane %v1886, %v1893
    %v1896 = vunpack.c.l.s4 1934713408
    %v1897 = vunpack.c.0.s8 %v1896
    %v1898 = vlaneseq
    %v1899 = vshrl.u32 %v1898, 7
    %v1900 = vsub.s32 %v1897, %v1899
    %v1901 = vrot.slane %v1887, %v1900
    %v1902 = vcombine.high %v1878, 0.0
    %v1903 = vcombine.high %v1885, 0.0
    %v1904 = vcombine.high %v1894, 0.0
    %v1905 = vcombine.high %v1901, 0.0
    %v1906 = vcombine.low %v1592, %v1754
    %v1907 = vcombine.high %v1592, %v1754
    %v1909 = vunpack.c.l.s4 1983009808
    %v1910 = vunpack.c.0.s8 %v1909
    %v1911 = vlaneseq
    %v1912 = vshrl.u32 %v1911, 7
    %v1913 = vsub.s32 %v1910, %v1912
    %v1914 = vrot.slane %v1906, %v1913
    %v1916 = vunpack.c.l.s4 1983009808
    %v1917 = vunpack.c.0.s8 %v1916
    %v1918 = vlaneseq
    %v1919 = vshrl.u32 %v1918, 7
    %v1920 = vsub.s32 %v1917, %v1919
    %v1921 = vrot.slane %v1907, %v1920
    %v1922 = vcombine.low %v1673, %v1835
    %v1923 = vcombine.high %v1673, %v1835
    %v1925 = vunpack.c.l.s4 1983009808
    %v1926 = vunpack.c.0.s8 %v1925
    %v1927 = vlaneseq
    %v1928 = vshrl.u32 %v1927, 7
    %v1929 = vsub.s32 %v1926, %v1928
    %v1930 = vrot.slane %v1922, %v1929
    %v1932 = vunpack.c.l.s4 1983009808
    %v1933 = vunpack.c.0.s8 %v1932
    %v1934 = vlaneseq
    %v1935 = vshrl.u32 %v1934, 7
    %v1936 = vsub.s32 %v1933, %v1935
    %v1937 = vrot.slane %v1923, %v1936
    %v1938 = vcombine.low %v1914, %v1930
    %v1939 = vcombine.high %v1914, %v1930
    %v1941 = vunpack.c.l.s4 1934713408
    %v1942 = vunpack.c.0.s8 %v1941
    %v1943 = vlaneseq
    %v1944 = vshrl.u32 %v1943, 7
    %v1945 = vsub.s32 %v1942, %v1944
    %v1946 = vrot.slane %v1938, %v1945
    %v1948 = vunpack.c.l.s4 1934713408
    %v1949 = vunpack.c.0.s8 %v1948
    %v1950 = vlaneseq
    %v1951 = vshrl.u32 %v1950, 7
    %v1952 = vsub.s32 %v1949, %v1951
    %v1953 = vrot.slane %v1939, %v1952
    %v1954 = vcombine.low %v1921, %v1937
    %v1955 = vcombine.high %v1921, %v1937
    %v1957 = vunpack.c.l.s4 1934713408
    %v1958 = vunpack.c.0.s8 %v1957
    %v1959 = vlaneseq
    %v1960 = vshrl.u32 %v1959, 7
    %v1961 = vsub.s32 %v1958, %v1960
    %v1962 = vrot.slane %v1954, %v1961
    %v1964 = vunpack.c.l.s4 1934713408
    %v1965 = vunpack.c.0.s8 %v1964
    %v1966 = vlaneseq
    %v1967 = vshrl.u32 %v1966, 7
    %v1968 = vsub.s32 %v1965, %v1967
    %v1969 = vrot.slane %v1955, %v1968
    %v1970 = vcombine.high %v1946, 0.0
    %v1971 = vcombine.high %v1953, 0.0
    %v1972 = vcombine.high %v1962, 0.0
    %v1973 = vcombine.high %v1969, 0.0
    %v1974 = vcombine.low %v1878, %v1885
    %v1976 = vunpack.c.l.s4 1983009808
    %v1977 = vunpack.c.0.s8 %v1976
    %v1978 = vlaneseq
    %v1979 = vshrl.u32 %v1978, 7
    %v1980 = vsub.s32 %v1977, %v1979
    %v1981 = vrot.slane %v1974, %v1980
    %v1982 = vcombine.low %v1902, %v1903
    %v1984 = vunpack.c.l.s4 1983009808
    %v1985 = vunpack.c.0.s8 %v1984
    %v1986 = vlaneseq
    %v1987 = vshrl.u32 %v1986, 7
    %v1988 = vsub.s32 %v1985, %v1987
    %v1989 = vrot.slane %v1982, %v1988
    %v1990 = vcombine.low %v1894, %v1901
    %v1992 = vunpack.c.l.s4 1983009808
    %v1993 = vunpack.c.0.s8 %v1992
    %v1994 = vlaneseq
    %v1995 = vshrl.u32 %v1994, 7
    %v1996 = vsub.s32 %v1993, %v1995
    %v1997 = vrot.slane %v1990, %v1996
    %v1998 = vcombine.low %v1904, %v1905
    %v2000 = vunpack.c.l.s4 1983009808
    %v2001 = vunpack.c.0.s8 %v2000
    %v2002 = vlaneseq
    %v2003 = vshrl.u32 %v2002, 7
    %v2004 = vsub.s32 %v2001, %v2003
    %v2005 = vrot.slane %v1998, %v2004
    %v2006 = vcombine.low %v1981, %v1989
    %v2007 = vcombine.high %v1981, %v1989
    %v2009 = vunpack.c.l.s4 1934713408
    %v2010 = vunpack.c.0.s8 %v2009
    %v2011 = vlaneseq
    %v2012 = vshrl.u32 %v2011, 7
    %v2013 = vsub.s32 %v2010, %v2012
    %v2014 = vrot.slane %v2006, %v2013
    %v2016 = vunpack.c.l.s4 1934713408
    %v2017 = vunpack.c.0.s8 %v2016
    %v2018 = vlaneseq
    %v2019 = vshrl.u32 %v2018, 7
    %v2020 = vsub.s32 %v2017, %v2019
    %v2021 = vrot.slane %v2007, %v2020
    %v2022 = vcombine.low %v1997, %v2005
    %v2023 = vcombine.high %v1997, %v2005
    %v2025 = vunpack.c.l.s4 1934713408
    %v2026 = vunpack.c.0.s8 %v2025
    %v2027 = vlaneseq
    %v2028 = vshrl.u32 %v2027, 7
    %v2029 = vsub.s32 %v2026, %v2028
    %v2030 = vrot.slane %v2022, %v2029
    %v2032 = vunpack.c.l.s4 1934713408
    %v2033 = vunpack.c.0.s8 %v2032
    %v2034 = vlaneseq
    %v2035 = vshrl.u32 %v2034, 7
    %v2036 = vsub.s32 %v2033, %v2035
    %v2037 = vrot.slane %v2023, %v2036
    %v2038 = vcombine.low %v2014, %v2030
    %v2039 = vcombine.high %v2014, %v2030
    %v2040 = vcombine.low %v2021, %v2037
    %v2041 = vcombine.high %v2021, %v2037
    %v2042 = vcombine.low %v1946, %v1953
    %v2044 = vunpack.c.l.s4 1983009808
    %v2045 = vunpack.c.0.s8 %v2044
    %v2046 = vlaneseq
    %v2047 = vshrl.u32 %v2046, 7
    %v2048 = vsub.s32 %v2045, %v2047
    %v2049 = vrot.slane %v2042, %v2048
    %v2050 = vcombine.low %v1970, %v1971
    %v2052 = vunpack.c.l.s4 1983009808
    %v2053 = vunpack.c.0.s8 %v2052
    %v2054 = vlaneseq
    %v2055 = vshrl.u32 %v2054, 7
    %v2056 = vsub.s32 %v2053, %v2055
    %v2057 = vrot.slane %v2050, %v2056
    %v2058 = vcombine.low %v1962, %v1969
    %v2060 = vunpack.c.l.s4 1983009808
    %v2061 = vunpack.c.0.s8 %v2060
    %v2062 = vlaneseq
    %v2063 = vshrl.u32 %v2062, 7
    %v2064 = vsub.s32 %v2061, %v2063
    %v2065 = vrot.slane %v2058, %v2064
    %v2066 = vcombine.low %v1972, %v1973
    %v2068 = vunpack.c.l.s4 1983009808
    %v2069 = vunpack.c.0.s8 %v2068
    %v2070 = vlaneseq
    %v2071 = vshrl.u32 %v2070, 7
    %v2072 = vsub.s32 %v2069, %v2071
    %v2073 = vrot.slane %v2066, %v2072
    %v2074 = vcombine.low %v2049, %v2057
    %v2075 = vcombine.high %v2049, %v2057
    %v2077 = vunpack.c.l.s4 1934713408
    %v2078 = vunpack.c.0.s8 %v2077
    %v2079 = vlaneseq
    %v2080 = vshrl.u32 %v2079, 7
    %v2081 = vsub.s32 %v2078, %v2080
    %v2082 = vrot.slane %v2074, %v2081
    %v2084 = vunpack.c.l.s4 1934713408
    %v2085 = vunpack.c.0.s8 %v2084
    %v2086 = vlaneseq
    %v2087 = vshrl.u32 %v2086, 7
    %v2088 = vsub.s32 %v2085, %v2087
    %v2089 = vrot.slane %v2075, %v2088
    %v2090 = vcombine.low %v2065, %v2073
    %v2091 = vcombine.high %v2065, %v2073
    %v2093 = vunpack.c.l.s4 1934713408
    %v2094 = vunpack.c.0.s8 %v2093
    %v2095 = vlaneseq
    %v2096 = vshrl.u32 %v2095, 7
    %v2097 = vsub.s32 %v2094, %v2096
    %v2098 = vrot.slane %v2090, %v2097
    %v2100 = vunpack.c.l.s4 1934713408
    %v2101 = vunpack.c.0.s8 %v2100
    %v2102 = vlaneseq
    %v2103 = vshrl.u32 %v2102, 7
    %v2104 = vsub.s32 %v2101, %v2103
    %v2105 = vrot.slane %v2091, %v2104
    %v2106 = vcombine.low %v2082, %v2098
    %v2107 = vcombine.high %v2082, %v2098
    %v2108 = vcombine.low %v2089, %v2105
    %v2109 = vcombine.high %v2089, %v2105
    %2112 = vrot.lane.b32.xlu0 %v2039, 8
    %v2113 = vpop.permute.xlu0 %2112
    %2114 = vrot.lane.b32.xlu0 %v2107, 8
    %v2115 = vpop.permute.xlu0 %2114
    %2120 = vrot.lane.b32.xlu0 %v2040, 16
    %v2121 = vpop.permute.xlu0 %2120
    %2122 = vrot.lane.b32.xlu0 %v2108, 16
    %v2123 = vpop.permute.xlu0 %2122
    %2128 = vrot.lane.b32.xlu0 %v2041, 24
    %v2129 = vpop.permute.xlu0 %2128
    %2130 = vrot.lane.b32.xlu0 %v2109, 24
    %v2131 = vpop.permute.xlu0 %2130
    %v2134 = vsel %vm1076, %v2038, %v2113
    %v2135 = vsel %vm1076, %v2106, %v2115
    %v2136 = vsel %vm1425, %v2134, %v2121
    %v2137 = vsel %vm1425, %v2135, %v2123
    %vm2138 = vcmask 195584
    %v2139 = vsel %vm2138, %v2136, %v2129
    %v2140 = vsel %vm2138, %v2137, %v2131
    %v2141 = vld [vmem:[%s5] sm:$0xff]
    %v2142 = vld [vmem:[%s5 + $0x8] sm:$0xff]
    %v2143 = vld [vmem:[%s5 + $0x10] sm:$0xff]
    %v2144 = vld [vmem:[%s5 + $0x18] sm:$0xff]
    %v2145 = vld [vmem:[%s6] sm:$0x1]
    %v2146 = vlaneseq
    %v2147 = vshrl.u32 %v2146, 7
    %v2148 = vsub.s32 0, %v2147
    %v2149 = vrot.slane %v2145, %v2148
    %v2151 = vsel %vm79, %v2139, 0
    %v2154 = vsel %vm79, %v2140, 0
    %2156 = vmatprep.subr.mxu0 0.0
    %2157 = vmatpush1.msra.mxu0 %v2141
    %2158 = vmatprep.subr.mxu0 0.0
    %2159 = vmatpush1.msra.mxu0 %v2142
    %2160 = vmatprep.subr.mxu0 0.0
    %2161 = vmatpush1.msra.mxu0 %v2143
    %2162 = vmatprep.subr.mxu0 0.0
    %2163 = vmatpush1.msra.mxu0 %v2144
    %2164 = vmatprep.subr.mxu0 0.0
    %2165 = vmatpush1.msra.mxu0 0.0
    %2166 = vmatprep.subr.mxu0 0.0
    %2167 = vmatpush1.msra.mxu0 0.0
    %2168 = vmatprep.subr.mxu0 0.0
    %2169 = vmatpush1.msra.mxu0 0.0
    %2170 = vmatprep.subr.mxu0 0.0
    %2171 = vmatpush1.msra.mxu0 0.0
    %2172 = vmatprep.subr.mxu0 0.0
    %2173 = vmatpush1.msra.mxu0 0.0
    %2174 = vmatprep.subr.mxu0 0.0
    %2175 = vmatpush1.msra.mxu0 0.0
    %2176 = vmatprep.subr.mxu0 0.0
    %2177 = vmatpush1.msra.mxu0 0.0
    %2178 = vmatprep.subr.mxu0 0.0
    %2179 = vmatpush1.msra.mxu0 0.0
    %2180 = vmatprep.subr.mxu0 0.0
    %2181 = vmatpush1.msra.mxu0 0.0
    %2182 = vmatprep.subr.mxu0 0.0
    %2183 = vmatpush1.msra.mxu0 0.0
    %2184 = vmatprep.subr.mxu0 0.0
    %2185 = vmatpush1.msra.mxu0 0.0
    %2186 = vmatprep.subr.mxu0 0.0
    %2187 = vmatpush1.msra.mxu0 0.0
    %2188 = vmatprep.subr.mxu0 0.0
    %2189 = vmatpush1.msra.mxu0 0.0
    %2190 = vmatprep.subr.mxu0 0.0
    %2191 = vmatpush1.msra.mxu0 0.0
    %2192 = vmatprep.subr.mxu0 0.0
    %2193 = vmatpush1.msra.mxu0 0.0
    %2194 = vmatprep.subr.mxu0 0.0
    %2195 = vmatpush1.msra.mxu0 0.0
    %2196 = vmatprep.subr.mxu0 0.0
    %2197 = vmatpush1.msra.mxu0 0.0
    %2198 = vmatprep.subr.mxu0 0.0
    %2199 = vmatpush1.msra.mxu0 0.0
    %2200 = vmatprep.subr.mxu0 0.0
    %2201 = vmatpush1.msra.mxu0 0.0
    %2202 = vmatprep.subr.mxu0 0.0
    %2203 = vmatpush1.msra.mxu0 0.0
    %2204 = vmatprep.subr.mxu0 0.0
    %2205 = vmatpush1.msra.mxu0 0.0
    %2206 = vmatprep.subr.mxu0 0.0
    %2207 = vmatpush1.msra.mxu0 0.0
    %2208 = vmatprep.subr.mxu0 0.0
    %2209 = vmatpush1.msra.mxu0 0.0
    %2210 = vmatprep.subr.mxu0 0.0
    %2211 = vmatpush1.msra.mxu0 0.0
    %2212 = vmatprep.subr.mxu0 0.0
    %2213 = vmatpush1.msra.mxu0 0.0
    %2214 = vmatprep.subr.mxu0 0.0
    %2215 = vmatpush1.msra.mxu0 0.0
    %2216 = vmatprep.subr.mxu0 0.0
    %2217 = vmatpush1.msra.mxu0 0.0
    %2218 = vmatprep.subr.mxu0 0.0
    %2219 = vmatpush1.msra.mxu0 0.0
    %2220 = vmatprep.mubr.f32.mxu0 0.0
    %2221 = vmatmul.mubr.f32.gmra.mrb[0].mxu0 %v2151
    %v2222 = vpop.f32.mrb[0].mxu0
    %v2223 = vadd.f32 %v2149, %v2222
    %v2224 = vpop.f32.mrb[0].mxu0
    %2225 = vmatprep.mubr.f32.mxu0 0.0
    %2226 = vmatmul.mubr.f32.gmra.mrb[0].mxu0 %v2154
    %v2227 = vpop.f32.mrb[0].mxu0
    %v2228 = vadd.f32 %v2149, %v2227
    %v2229 = vpop.f32.mrb[0].mxu0
    %2230 = vdwg.mxu0
    %v2231 = vadd.f32 %v2223, %v73
    %v2232 = vadd.f32 %v2228, %v74
    %v2233 = vsel %vm79, %v2231, 0.0
    %2234 = vadd.xlane.f32.xlu0 %v2233
    %v2235 = vpop.xlane.xlu0 %2234
    %v2236 = vsel %vm79, %v2232, 0.0
    %2237 = vadd.xlane.f32.xlu0 %v2236
    %v2238 = vpop.xlane.xlu0 %2237
    %v2239 = vmul.f32 %v2235, %v86
    %v2240 = vmul.f32 %v2238, %v86
    %v2241 = vmul.f32 %v2231, %v2231
    %v2242 = vmul.f32 %v2232, %v2232
    %v2243 = vsel %vm79, %v2241, 0.0
    %2244 = vadd.xlane.f32.xlu0 %v2243
    %v2245 = vpop.xlane.xlu0 %2244
    %v2246 = vsel %vm79, %v2242, 0.0
    %2247 = vadd.xlane.f32.xlu0 %v2246
    %v2248 = vpop.xlane.xlu0 %2247
    %v2249 = vmul.f32 %v2245, %v86
    %v2250 = vmul.f32 %v2248, %v86
    %v2251 = vsub.f32 %v2231, %v2239
    %v2252 = vsub.f32 %v2232, %v2240
    %v2253 = vmul.f32 %v2239, %v2239
    %v2254 = vmul.f32 %v2240, %v2240
    %v2255 = vsub.f32 %v2249, %v2253
    %v2256 = vsub.f32 %v2250, %v2254
    %v2257 = vadd.f32 %v2255, 1e-06
    %v2258 = vadd.f32 %v2256, 1e-06
    %v2259 = vrsqrt.pop %v2257
    %v2260 = vrsqrt.pop %v2258
    %v2261 = vmul.f32 %v2251, %v2259
    %v2262 = vmul.f32 %v2252, %v2260
    %v2263 = vld [vmem:[%s7] sm:$0x1]
    %v2264 = vadd.f32 %v2263, 1.0
    %v2265 = vlaneseq
    %v2266 = vshrl.u32 %v2265, 7
    %v2267 = vsub.s32 0, %v2266
    %v2268 = vrot.slane %v2264, %v2267
    %v2269 = vmul.f32 %v2261, %v2268
    %v2270 = vmul.f32 %v2262, %v2268
    %v2271 = vld [vmem:[%s8] sm:$0x1]
    %v2272 = vlaneseq
    %v2273 = vshrl.u32 %v2272, 7
    %v2274 = vsub.s32 0, %v2273
    %v2275 = vrot.slane %v2271, %v2274
    %v2276 = vadd.f32 %v2269, %v2275
    %v2277 = vadd.f32 %v2270, %v2275
    %v2278 = vld [vmem:[%s9] sm:$0xff]
    %v2279 = vld [vmem:[%s9 + $0x8] sm:$0xff]
    %v2280 = vld [vmem:[%s9 + $0x10] sm:$0xff]
    %v2281 = vld [vmem:[%s9 + $0x18] sm:$0xff]
    %v2282 = vld [vmem:[%s10] sm:$0x1]
    %v2283 = vlaneseq
    %v2284 = vshrl.u32 %v2283, 7
    %v2285 = vsub.s32 0, %v2284
    %v2286 = vrot.slane %v2282, %v2285
    %v2288 = vsel %vm79, %v2276, 0
    %v2291 = vsel %vm79, %v2277, 0
    %2293 = vmatprep.subr.mxu0 0.0
    %2294 = vmatpush1.msra.mxu0 %v2278
    %2295 = vmatprep.subr.mxu0 0.0
    %2296 = vmatpush1.msra.mxu0 %v2279
    %2297 = vmatprep.subr.mxu0 0.0
    %2298 = vmatpush1.msra.mxu0 %v2280
    %2299 = vmatprep.subr.mxu0 0.0
    %2300 = vmatpush1.msra.mxu0 %v2281
    %2301 = vmatprep.subr.mxu0 0.0
    %2302 = vmatpush1.msra.mxu0 0.0
    %2303 = vmatprep.subr.mxu0 0.0
    %2304 = vmatpush1.msra.mxu0 0.0
    %2305 = vmatprep.subr.mxu0 0.0
    %2306 = vmatpush1.msra.mxu0 0.0
    %2307 = vmatprep.subr.mxu0 0.0
    %2308 = vmatpush1.msra.mxu0 0.0
    %2309 = vmatprep.subr.mxu0 0.0
    %2310 = vmatpush1.msra.mxu0 0.0
    %2311 = vmatprep.subr.mxu0 0.0
    %2312 = vmatpush1.msra.mxu0 0.0
    %2313 = vmatprep.subr.mxu0 0.0
    %2314 = vmatpush1.msra.mxu0 0.0
    %2315 = vmatprep.subr.mxu0 0.0
    %2316 = vmatpush1.msra.mxu0 0.0
    %2317 = vmatprep.subr.mxu0 0.0
    %2318 = vmatpush1.msra.mxu0 0.0
    %2319 = vmatprep.subr.mxu0 0.0
    %2320 = vmatpush1.msra.mxu0 0.0
    %2321 = vmatprep.subr.mxu0 0.0
    %2322 = vmatpush1.msra.mxu0 0.0
    %2323 = vmatprep.subr.mxu0 0.0
    %2324 = vmatpush1.msra.mxu0 0.0
    %2325 = vmatprep.subr.mxu0 0.0
    %2326 = vmatpush1.msra.mxu0 0.0
    %2327 = vmatprep.subr.mxu0 0.0
    %2328 = vmatpush1.msra.mxu0 0.0
    %2329 = vmatprep.subr.mxu0 0.0
    %2330 = vmatpush1.msra.mxu0 0.0
    %2331 = vmatprep.subr.mxu0 0.0
    %2332 = vmatpush1.msra.mxu0 0.0
    %2333 = vmatprep.subr.mxu0 0.0
    %2334 = vmatpush1.msra.mxu0 0.0
    %2335 = vmatprep.subr.mxu0 0.0
    %2336 = vmatpush1.msra.mxu0 0.0
    %2337 = vmatprep.subr.mxu0 0.0
    %2338 = vmatpush1.msra.mxu0 0.0
    %2339 = vmatprep.subr.mxu0 0.0
    %2340 = vmatpush1.msra.mxu0 0.0
    %2341 = vmatprep.subr.mxu0 0.0
    %2342 = vmatpush1.msra.mxu0 0.0
    %2343 = vmatprep.subr.mxu0 0.0
    %2344 = vmatpush1.msra.mxu0 0.0
    %2345 = vmatprep.subr.mxu0 0.0
    %2346 = vmatpush1.msra.mxu0 0.0
    %2347 = vmatprep.subr.mxu0 0.0
    %2348 = vmatpush1.msra.mxu0 0.0
    %2349 = vmatprep.subr.mxu0 0.0
    %2350 = vmatpush1.msra.mxu0 0.0
    %2351 = vmatprep.subr.mxu0 0.0
    %2352 = vmatpush1.msra.mxu0 0.0
    %2353 = vmatprep.subr.mxu0 0.0
    %2354 = vmatpush1.msra.mxu0 0.0
    %2355 = vmatprep.subr.mxu0 0.0
    %2356 = vmatpush1.msra.mxu0 0.0
    %2357 = vmatprep.mubr.f32.mxu0 0.0
    %2358 = vmatmul.mubr.f32.gmra.mrb[0].mxu0 %v2288
    %v2359 = vpop.f32.mrb[0].mxu0
    %v2360 = vadd.f32 %v2286, %v2359
    %v2361 = vpop.f32.mrb[0].mxu0
    %2362 = vmatprep.mubr.f32.mxu0 0.0
    %2363 = vmatmul.mubr.f32.gmra.mrb[0].mxu0 %v2291
    %v2364 = vpop.f32.mrb[0].mxu0
    %v2365 = vadd.f32 %v2286, %v2364
    %v2366 = vpop.f32.mrb[0].mxu0
    %2367 = vdwg.mxu0
    %v2368 = vmax.f32 %v2360, 0.0
    %v2369 = vmax.f32 %v2365, 0.0
    %v2370 = vld [vmem:[%s11] sm:$0xff]
    %v2371 = vld [vmem:[%s11 + $0x8] sm:$0xff]
    %v2372 = vld [vmem:[%s11 + $0x10] sm:$0xff]
    %v2373 = vld [vmem:[%s11 + $0x18] sm:$0xff]
    %v2374 = vld [vmem:[%s11 + $0x20] sm:$0xff]
    %v2375 = vld [vmem:[%s11 + $0x28] sm:$0xff]
    %v2376 = vld [vmem:[%s11 + $0x30] sm:$0xff]
    %v2377 = vld [vmem:[%s11 + $0x38] sm:$0xff]
    %v2378 = vld [vmem:[%s12] sm:$0x1]
    %v2379 = vlaneseq
    %v2380 = vshrl.u32 %v2379, 7
    %v2381 = vsub.s32 0, %v2380
    %v2382 = vrot.slane %v2378, %v2381
    %vm2383 = vcmask 523264
    %v2385 = vsel %vm2383, %v2368, 0
    %v2388 = vsel %vm2383, %v2369, 0
    %2390 = vmatprep.subr.mxu0 0.0
    %2391 = vmatpush1.msra.mxu0 %v2370
    %2392 = vmatprep.subr.mxu0 0.0
    %2393 = vmatpush1.msra.mxu0 %v2371
    %2394 = vmatprep.subr.mxu0 0.0
    %2395 = vmatpush1.msra.mxu0 %v2372
    %2396 = vmatprep.subr.mxu0 0.0
    %2397 = vmatpush1.msra.mxu0 %v2373
    %2398 = vmatprep.subr.mxu0 0.0
    %2399 = vmatpush1.msra.mxu0 %v2374
    %2400 = vmatprep.subr.mxu0 0.0
    %2401 = vmatpush1.msra.mxu0 %v2375
    %2402 = vmatprep.subr.mxu0 0.0
    %2403 = vmatpush1.msra.mxu0 %v2376
    %2404 = vmatprep.subr.mxu0 0.0
    %2405 = vmatpush1.msra.mxu0 %v2377
    %2406 = vmatprep.subr.mxu0 0.0
    %2407 = vmatpush1.msra.mxu0 0.0
    %2408 = vmatprep.subr.mxu0 0.0
    %2409 = vmatpush1.msra.mxu0 0.0
    %2410 = vmatprep.subr.mxu0 0.0
    %2411 = vmatpush1.msra.mxu0 0.0
    %2412 = vmatprep.subr.mxu0 0.0
    %2413 = vmatpush1.msra.mxu0 0.0
    %2414 = vmatprep.subr.mxu0 0.0
    %2415 = vmatpush1.msra.mxu0 0.0
    %2416 = vmatprep.subr.mxu0 0.0
    %2417 = vmatpush1.msra.mxu0 0.0
    %2418 = vmatprep.subr.mxu0 0.0
    %2419 = vmatpush1.msra.mxu0 0.0
    %2420 = vmatprep.subr.mxu0 0.0
    %2421 = vmatpush1.msra.mxu0 0.0
    %2422 = vmatprep.subr.mxu0 0.0
    %2423 = vmatpush1.msra.mxu0 0.0
    %2424 = vmatprep.subr.mxu0 0.0
    %2425 = vmatpush1.msra.mxu0 0.0
    %2426 = vmatprep.subr.mxu0 0.0
    %2427 = vmatpush1.msra.mxu0 0.0
    %2428 = vmatprep.subr.mxu0 0.0
    %2429 = vmatpush1.msra.mxu0 0.0
    %2430 = vmatprep.subr.mxu0 0.0
    %2431 = vmatpush1.msra.mxu0 0.0
    %2432 = vmatprep.subr.mxu0 0.0
    %2433 = vmatpush1.msra.mxu0 0.0
    %2434 = vmatprep.subr.mxu0 0.0
    %2435 = vmatpush1.msra.mxu0 0.0
    %2436 = vmatprep.subr.mxu0 0.0
    %2437 = vmatpush1.msra.mxu0 0.0
    %2438 = vmatprep.subr.mxu0 0.0
    %2439 = vmatpush1.msra.mxu0 0.0
    %2440 = vmatprep.subr.mxu0 0.0
    %2441 = vmatpush1.msra.mxu0 0.0
    %2442 = vmatprep.subr.mxu0 0.0
    %2443 = vmatpush1.msra.mxu0 0.0
    %2444 = vmatprep.subr.mxu0 0.0
    %2445 = vmatpush1.msra.mxu0 0.0
    %2446 = vmatprep.subr.mxu0 0.0
    %2447 = vmatpush1.msra.mxu0 0.0
    %2448 = vmatprep.subr.mxu0 0.0
    %2449 = vmatpush1.msra.mxu0 0.0
    %2450 = vmatprep.subr.mxu0 0.0
    %2451 = vmatpush1.msra.mxu0 0.0
    %2452 = vmatprep.subr.mxu0 0.0
    %2453 = vmatpush1.msra.mxu0 0.0
    %2454 = vmatprep.mubr.f32.mxu0 0.0
    %2455 = vmatmul.mubr.f32.gmra.mrb[0].mxu0 %v2385
    %v2456 = vpop.f32.mrb[0].mxu0
    %v2457 = vadd.f32 %v2382, %v2456
    %v2458 = vpop.f32.mrb[0].mxu0
    %2459 = vmatprep.mubr.f32.mxu0 0.0
    %2460 = vmatmul.mubr.f32.gmra.mrb[0].mxu0 %v2388
    %v2461 = vpop.f32.mrb[0].mxu0
    %v2462 = vadd.f32 %v2382, %v2461
    %v2463 = vpop.f32.mrb[0].mxu0
    %2464 = vdwg.mxu0
    %v2465 = vadd.f32 %v2457, %v2231
    %v2466 = vadd.f32 %v2462, %v2232
    %v2467 = vmul.f32 %v2465, %v2465
    %v2468 = vmul.f32 %v2466, %v2466
    %v2469 = vsel %vm79, %v2467, 0.0
    %2470 = vadd.xlane.f32.xlu0 %v2469
    %v2471 = vpop.xlane.xlu0 %2470
    %v2472 = vsel %vm79, %v2468, 0.0
    %2473 = vadd.xlane.f32.xlu0 %v2472
    %v2474 = vpop.xlane.xlu0 %2473
    %v2475 = vmul.f32 %v2471, %v86
    %v2476 = vmul.f32 %v2474, %v86
    %v2477 = vadd.f32 %v2475, 1e-06
    %v2478 = vadd.f32 %v2476, 1e-06
    %v2479 = vrsqrt.pop %v2477
    %v2480 = vrsqrt.pop %v2478
    %v2481 = vmul.f32 %v2465, %v2479
    %v2482 = vmul.f32 %v2466, %v2480
    %v2483 = vld [vmem:[%s2 + $0x1] sm:$0x1]
    %v2484 = vlaneseq
    %v2485 = vshrl.u32 %v2484, 7
    %v2486 = vsub.s32 0, %v2485
    %v2487 = vrot.slane %v2483, %v2486
    %v2488 = vmul.f32 %v2481, %v2487
    %v2489 = vmul.f32 %v2482, %v2487
    %s2490 = scalar_lea.vmem %s3, 32
    %v2491 = vld [vmem:[%s2490] sm:$0xff]
    %v2492 = vld [vmem:[%s2490 + $0x8] sm:$0xff]
    %v2493 = vld [vmem:[%s2490 + $0x10] sm:$0xff]
    %v2494 = vld [vmem:[%s2490 + $0x18] sm:$0xff]
    %v2495 = vld [vmem:[%s4 + $0x1] sm:$0x1]
    %v2496 = vlaneseq
    %v2497 = vshrl.u32 %v2496, 7
    %v2498 = vsub.s32 0, %v2497
    %v2499 = vrot.slane %v2495, %v2498
    %v2501 = vsel %vm79, %v2488, 0
    %v2504 = vsel %vm79, %v2489, 0
    %2506 = vmatprep.subr.mxu0 0.0
    %2507 = vmatpush1.msra.mxu0 %v2491
    %2508 = vmatprep.subr.mxu0 0.0
    %2509 = vmatpush1.msra.mxu0 %v2492
    %2510 = vmatprep.subr.mxu0 0.0
    %2511 = vmatpush1.msra.mxu0 %v2493
    %2512 = vmatprep.subr.mxu0 0.0
    %2513 = vmatpush1.msra.mxu0 %v2494
    %2514 = vmatprep.subr.mxu0 0.0
    %2515 = vmatpush1.msra.mxu0 0.0
    %2516 = vmatprep.subr.mxu0 0.0
    %2517 = vmatpush1.msra.mxu0 0.0
    %2518 = vmatprep.subr.mxu0 0.0
    %2519 = vmatpush1.msra.mxu0 0.0
    %2520 = vmatprep.subr.mxu0 0.0
    %2521 = vmatpush1.msra.mxu0 0.0
    %2522 = vmatprep.subr.mxu0 0.0
    %2523 = vmatpush1.msra.mxu0 0.0
    %2524 = vmatprep.subr.mxu0 0.0
    %2525 = vmatpush1.msra.mxu0 0.0
    %2526 = vmatprep.subr.mxu0 0.0
    %2527 = vmatpush1.msra.mxu0 0.0
    %2528 = vmatprep.subr.mxu0 0.0
    %2529 = vmatpush1.msra.mxu0 0.0
    %2530 = vmatprep.subr.mxu0 0.0
    %2531 = vmatpush1.msra.mxu0 0.0
    %2532 = vmatprep.subr.mxu0 0.0
    %2533 = vmatpush1.msra.mxu0 0.0
    %2534 = vmatprep.subr.mxu0 0.0
    %2535 = vmatpush1.msra.mxu0 0.0
    %2536 = vmatprep.subr.mxu0 0.0
    %2537 = vmatpush1.msra.mxu0 0.0
    %2538 = vmatprep.subr.mxu0 0.0
    %2539 = vmatpush1.msra.mxu0 0.0
    %2540 = vmatprep.subr.mxu0 0.0
    %2541 = vmatpush1.msra.mxu0 0.0
    %2542 = vmatprep.subr.mxu0 0.0
    %2543 = vmatpush1.msra.mxu0 0.0
    %2544 = vmatprep.subr.mxu0 0.0
    %2545 = vmatpush1.msra.mxu0 0.0
    %2546 = vmatprep.subr.mxu0 0.0
    %2547 = vmatpush1.msra.mxu0 0.0
    %2548 = vmatprep.subr.mxu0 0.0
    %2549 = vmatpush1.msra.mxu0 0.0
    %2550 = vmatprep.subr.mxu0 0.0
    %2551 = vmatpush1.msra.mxu0 0.0
    %2552 = vmatprep.subr.mxu0 0.0
    %2553 = vmatpush1.msra.mxu0 0.0
    %2554 = vmatprep.subr.mxu0 0.0
    %2555 = vmatpush1.msra.mxu0 0.0
    %2556 = vmatprep.subr.mxu0 0.0
    %2557 = vmatpush1.msra.mxu0 0.0
    %2558 = vmatprep.subr.mxu0 0.0
    %2559 = vmatpush1.msra.mxu0 0.0
    %2560 = vmatprep.subr.mxu0 0.0
    %2561 = vmatpush1.msra.mxu0 0.0
    %2562 = vmatprep.subr.mxu0 0.0
    %2563 = vmatpush1.msra.mxu0 0.0
    %2564 = vmatprep.subr.mxu0 0.0
    %2565 = vmatpush1.msra.mxu0 0.0
    %2566 = vmatprep.subr.mxu0 0.0
    %2567 = vmatpush1.msra.mxu0 0.0
    %2568 = vmatprep.subr.mxu0 0.0
    %2569 = vmatpush1.msra.mxu0 0.0
    %2570 = vmatprep.mubr.f32.mxu0 0.0
    %2571 = vmatmul.mubr.f32.gmra.mrb[0].mxu0 %v2501
    %v2572 = vpop.f32.mrb[0].mxu0
    %v2573 = vadd.f32 %v2499, %v2572
    %v2574 = vpop.f32.mrb[0].mxu0
    %2575 = vmatprep.mubr.f32.mxu0 0.0
    %2576 = vmatmul.mubr.f32.gmra.mrb[0].mxu0 %v2504
    %v2577 = vpop.f32.mrb[0].mxu0
    %v2578 = vadd.f32 %v2499, %v2577
    %v2579 = vpop.f32.mrb[0].mxu0
    %2580 = vdwg.mxu0
    %2583 = vrot.lane.b32.xlu0 %v2573, 120
    %v2584 = vpop.permute.xlu0 %2583
    %2585 = vrot.lane.b32.xlu0 %v2578, 120
    %v2586 = vpop.permute.xlu0 %2585
    %2589 = vrot.lane.b32.xlu0 %v2573, 112
    %v2590 = vpop.permute.xlu0 %2589
    %2591 = vrot.lane.b32.xlu0 %v2578, 112
    %v2592 = vpop.permute.xlu0 %2591
    %2595 = vrot.lane.b32.xlu0 %v2573, 104
    %v2596 = vpop.permute.xlu0 %2595
    %2597 = vrot.lane.b32.xlu0 %v2578, 104
    %v2598 = vpop.permute.xlu0 %2597
    %v2601 = vcombine.low %v2573, %v2590
    %v2602 = vcombine.high %v2573, %v2590
    %v2604 = vunpack.c.l.s4 1983009808
    %v2605 = vunpack.c.0.s8 %v2604
    %v2606 = vlaneseq
    %v2607 = vshrl.u32 %v2606, 7
    %v2608 = vsub.s32 %v2605, %v2607
    %v2609 = vrot.slane %v2601, %v2608
    %v2611 = vunpack.c.l.s4 1983009808
    %v2612 = vunpack.c.0.s8 %v2611
    %v2613 = vlaneseq
    %v2614 = vshrl.u32 %v2613, 7
    %v2615 = vsub.s32 %v2612, %v2614
    %v2616 = vrot.slane %v2602, %v2615
    %v2617 = vcombine.low %v2584, %v2596
    %v2618 = vcombine.high %v2584, %v2596
    %v2620 = vunpack.c.l.s4 1983009808
    %v2621 = vunpack.c.0.s8 %v2620
    %v2622 = vlaneseq
    %v2623 = vshrl.u32 %v2622, 7
    %v2624 = vsub.s32 %v2621, %v2623
    %v2625 = vrot.slane %v2617, %v2624
    %v2627 = vunpack.c.l.s4 1983009808
    %v2628 = vunpack.c.0.s8 %v2627
    %v2629 = vlaneseq
    %v2630 = vshrl.u32 %v2629, 7
    %v2631 = vsub.s32 %v2628, %v2630
    %v2632 = vrot.slane %v2618, %v2631
    %v2633 = vcombine.low %v2609, %v2625
    %v2634 = vcombine.high %v2609, %v2625
    %v2636 = vunpack.c.l.s4 1934713408
    %v2637 = vunpack.c.0.s8 %v2636
    %v2638 = vlaneseq
    %v2639 = vshrl.u32 %v2638, 7
    %v2640 = vsub.s32 %v2637, %v2639
    %v2641 = vrot.slane %v2633, %v2640
    %v2643 = vunpack.c.l.s4 1934713408
    %v2644 = vunpack.c.0.s8 %v2643
    %v2645 = vlaneseq
    %v2646 = vshrl.u32 %v2645, 7
    %v2647 = vsub.s32 %v2644, %v2646
    %v2648 = vrot.slane %v2634, %v2647
    %v2649 = vcombine.low %v2616, %v2632
    %v2650 = vcombine.high %v2616, %v2632
    %v2652 = vunpack.c.l.s4 1934713408
    %v2653 = vunpack.c.0.s8 %v2652
    %v2654 = vlaneseq
    %v2655 = vshrl.u32 %v2654, 7
    %v2656 = vsub.s32 %v2653, %v2655
    %v2657 = vrot.slane %v2649, %v2656
    %v2659 = vunpack.c.l.s4 1934713408
    %v2660 = vunpack.c.0.s8 %v2659
    %v2661 = vlaneseq
    %v2662 = vshrl.u32 %v2661, 7
    %v2663 = vsub.s32 %v2660, %v2662
    %v2664 = vrot.slane %v2650, %v2663
    %v2665 = vcombine.high %v2641, 0.0
    %v2666 = vcombine.high %v2648, 0.0
    %v2667 = vcombine.high %v2657, 0.0
    %v2668 = vcombine.high %v2664, 0.0
    %v2669 = vcombine.low %v2578, %v2592
    %v2670 = vcombine.high %v2578, %v2592
    %v2672 = vunpack.c.l.s4 1983009808
    %v2673 = vunpack.c.0.s8 %v2672
    %v2674 = vlaneseq
    %v2675 = vshrl.u32 %v2674, 7
    %v2676 = vsub.s32 %v2673, %v2675
    %v2677 = vrot.slane %v2669, %v2676
    %v2679 = vunpack.c.l.s4 1983009808
    %v2680 = vunpack.c.0.s8 %v2679
    %v2681 = vlaneseq
    %v2682 = vshrl.u32 %v2681, 7
    %v2683 = vsub.s32 %v2680, %v2682
    %v2684 = vrot.slane %v2670, %v2683
    %v2685 = vcombine.low %v2586, %v2598
    %v2686 = vcombine.high %v2586, %v2598
    %v2688 = vunpack.c.l.s4 1983009808
    %v2689 = vunpack.c.0.s8 %v2688
    %v2690 = vlaneseq
    %v2691 = vshrl.u32 %v2690, 7
    %v2692 = vsub.s32 %v2689, %v2691
    %v2693 = vrot.slane %v2685, %v2692
    %v2695 = vunpack.c.l.s4 1983009808
    %v2696 = vunpack.c.0.s8 %v2695
    %v2697 = vlaneseq
    %v2698 = vshrl.u32 %v2697, 7
    %v2699 = vsub.s32 %v2696, %v2698
    %v2700 = vrot.slane %v2686, %v2699
    %v2701 = vcombine.low %v2677, %v2693
    %v2702 = vcombine.high %v2677, %v2693
    %v2704 = vunpack.c.l.s4 1934713408
    %v2705 = vunpack.c.0.s8 %v2704
    %v2706 = vlaneseq
    %v2707 = vshrl.u32 %v2706, 7
    %v2708 = vsub.s32 %v2705, %v2707
    %v2709 = vrot.slane %v2701, %v2708
    %v2711 = vunpack.c.l.s4 1934713408
    %v2712 = vunpack.c.0.s8 %v2711
    %v2713 = vlaneseq
    %v2714 = vshrl.u32 %v2713, 7
    %v2715 = vsub.s32 %v2712, %v2714
    %v2716 = vrot.slane %v2702, %v2715
    %v2717 = vcombine.low %v2684, %v2700
    %v2718 = vcombine.high %v2684, %v2700
    %v2720 = vunpack.c.l.s4 1934713408
    %v2721 = vunpack.c.0.s8 %v2720
    %v2722 = vlaneseq
    %v2723 = vshrl.u32 %v2722, 7
    %v2724 = vsub.s32 %v2721, %v2723
    %v2725 = vrot.slane %v2717, %v2724
    %v2727 = vunpack.c.l.s4 1934713408
    %v2728 = vunpack.c.0.s8 %v2727
    %v2729 = vlaneseq
    %v2730 = vshrl.u32 %v2729, 7
    %v2731 = vsub.s32 %v2728, %v2730
    %v2732 = vrot.slane %v2718, %v2731
    %v2733 = vcombine.high %v2709, 0.0
    %v2734 = vcombine.high %v2716, 0.0
    %v2735 = vcombine.high %v2725, 0.0
    %v2736 = vcombine.high %v2732, 0.0
    %v2737 = vcombine.low %v2641, %v2648
    %v2739 = vunpack.c.l.s4 1983009808
    %v2740 = vunpack.c.0.s8 %v2739
    %v2741 = vlaneseq
    %v2742 = vshrl.u32 %v2741, 7
    %v2743 = vsub.s32 %v2740, %v2742
    %v2744 = vrot.slane %v2737, %v2743
    %v2745 = vcombine.low %v2665, %v2666
    %v2747 = vunpack.c.l.s4 1983009808
    %v2748 = vunpack.c.0.s8 %v2747
    %v2749 = vlaneseq
    %v2750 = vshrl.u32 %v2749, 7
    %v2751 = vsub.s32 %v2748, %v2750
    %v2752 = vrot.slane %v2745, %v2751
    %v2753 = vcombine.low %v2657, %v2664
    %v2755 = vunpack.c.l.s4 1983009808
    %v2756 = vunpack.c.0.s8 %v2755
    %v2757 = vlaneseq
    %v2758 = vshrl.u32 %v2757, 7
    %v2759 = vsub.s32 %v2756, %v2758
    %v2760 = vrot.slane %v2753, %v2759
    %v2761 = vcombine.low %v2667, %v2668
    %v2763 = vunpack.c.l.s4 1983009808
    %v2764 = vunpack.c.0.s8 %v2763
    %v2765 = vlaneseq
    %v2766 = vshrl.u32 %v2765, 7
    %v2767 = vsub.s32 %v2764, %v2766
    %v2768 = vrot.slane %v2761, %v2767
    %v2769 = vcombine.low %v2744, %v2752
    %v2770 = vcombine.high %v2744, %v2752
    %v2772 = vunpack.c.l.s4 1934713408
    %v2773 = vunpack.c.0.s8 %v2772
    %v2774 = vlaneseq
    %v2775 = vshrl.u32 %v2774, 7
    %v2776 = vsub.s32 %v2773, %v2775
    %v2777 = vrot.slane %v2769, %v2776
    %v2779 = vunpack.c.l.s4 1934713408
    %v2780 = vunpack.c.0.s8 %v2779
    %v2781 = vlaneseq
    %v2782 = vshrl.u32 %v2781, 7
    %v2783 = vsub.s32 %v2780, %v2782
    %v2784 = vrot.slane %v2770, %v2783
    %v2785 = vcombine.low %v2760, %v2768
    %v2786 = vcombine.high %v2760, %v2768
    %v2788 = vunpack.c.l.s4 1934713408
    %v2789 = vunpack.c.0.s8 %v2788
    %v2790 = vlaneseq
    %v2791 = vshrl.u32 %v2790, 7
    %v2792 = vsub.s32 %v2789, %v2791
    %v2793 = vrot.slane %v2785, %v2792
    %v2795 = vunpack.c.l.s4 1934713408
    %v2796 = vunpack.c.0.s8 %v2795
    %v2797 = vlaneseq
    %v2798 = vshrl.u32 %v2797, 7
    %v2799 = vsub.s32 %v2796, %v2798
    %v2800 = vrot.slane %v2786, %v2799
    %v2801 = vcombine.low %v2777, %v2793
    %v2802 = vcombine.high %v2777, %v2793
    %v2803 = vcombine.low %v2784, %v2800
    %v2804 = vcombine.high %v2784, %v2800
    %v2805 = vcombine.low %v2709, %v2716
    %v2807 = vunpack.c.l.s4 1983009808
    %v2808 = vunpack.c.0.s8 %v2807
    %v2809 = vlaneseq
    %v2810 = vshrl.u32 %v2809, 7
    %v2811 = vsub.s32 %v2808, %v2810
    %v2812 = vrot.slane %v2805, %v2811
    %v2813 = vcombine.low %v2733, %v2734
    %v2815 = vunpack.c.l.s4 1983009808
    %v2816 = vunpack.c.0.s8 %v2815
    %v2817 = vlaneseq
    %v2818 = vshrl.u32 %v2817, 7
    %v2819 = vsub.s32 %v2816, %v2818
    %v2820 = vrot.slane %v2813, %v2819
    %v2821 = vcombine.low %v2725, %v2732
    %v2823 = vunpack.c.l.s4 1983009808
    %v2824 = vunpack.c.0.s8 %v2823
    %v2825 = vlaneseq
    %v2826 = vshrl.u32 %v2825, 7
    %v2827 = vsub.s32 %v2824, %v2826
    %v2828 = vrot.slane %v2821, %v2827
    %v2829 = vcombine.low %v2735, %v2736
    %v2831 = vunpack.c.l.s4 1983009808
    %v2832 = vunpack.c.0.s8 %v2831
    %v2833 = vlaneseq
    %v2834 = vshrl.u32 %v2833, 7
    %v2835 = vsub.s32 %v2832, %v2834
    %v2836 = vrot.slane %v2829, %v2835
    %v2837 = vcombine.low %v2812, %v2820
    %v2838 = vcombine.high %v2812, %v2820
    %v2840 = vunpack.c.l.s4 1934713408
    %v2841 = vunpack.c.0.s8 %v2840
    %v2842 = vlaneseq
    %v2843 = vshrl.u32 %v2842, 7
    %v2844 = vsub.s32 %v2841, %v2843
    %v2845 = vrot.slane %v2837, %v2844
    %v2847 = vunpack.c.l.s4 1934713408
    %v2848 = vunpack.c.0.s8 %v2847
    %v2849 = vlaneseq
    %v2850 = vshrl.u32 %v2849, 7
    %v2851 = vsub.s32 %v2848, %v2850
    %v2852 = vrot.slane %v2838, %v2851
    %v2853 = vcombine.low %v2828, %v2836
    %v2854 = vcombine.high %v2828, %v2836
    %v2856 = vunpack.c.l.s4 1934713408
    %v2857 = vunpack.c.0.s8 %v2856
    %v2858 = vlaneseq
    %v2859 = vshrl.u32 %v2858, 7
    %v2860 = vsub.s32 %v2857, %v2859
    %v2861 = vrot.slane %v2853, %v2860
    %v2863 = vunpack.c.l.s4 1934713408
    %v2864 = vunpack.c.0.s8 %v2863
    %v2865 = vlaneseq
    %v2866 = vshrl.u32 %v2865, 7
    %v2867 = vsub.s32 %v2864, %v2866
    %v2868 = vrot.slane %v2854, %v2867
    %v2869 = vcombine.low %v2845, %v2861
    %v2870 = vcombine.high %v2845, %v2861
    %v2871 = vcombine.low %v2852, %v2868
    %v2872 = vcombine.high %v2852, %v2868
    %2873 = vrot.lane.b32.xlu0 %v2573, 96
    %v2874 = vpop.permute.xlu0 %2873
    %2875 = vrot.lane.b32.xlu0 %v2578, 96
    %v2876 = vpop.permute.xlu0 %2875
    %2877 = vrot.lane.b32.xlu0 %v2584, 96
    %v2878 = vpop.permute.xlu0 %2877
    %2879 = vrot.lane.b32.xlu0 %v2586, 96
    %v2880 = vpop.permute.xlu0 %2879
    %2881 = vrot.lane.b32.xlu0 %v2590, 96
    %v2882 = vpop.permute.xlu0 %2881
    %2883 = vrot.lane.b32.xlu0 %v2592, 96
    %v2884 = vpop.permute.xlu0 %2883
    %2885 = vrot.lane.b32.xlu0 %v2596, 96
    %v2886 = vpop.permute.xlu0 %2885
    %2887 = vrot.lane.b32.xlu0 %v2598, 96
    %v2888 = vpop.permute.xlu0 %2887
    %v2897 = vcombine.low %v2874, %v2882
    %v2898 = vcombine.high %v2874, %v2882
    %v2900 = vunpack.c.l.s4 1983009808
    %v2901 = vunpack.c.0.s8 %v2900
    %v2902 = vlaneseq
    %v2903 = vshrl.u32 %v2902, 7
    %v2904 = vsub.s32 %v2901, %v2903
    %v2905 = vrot.slane %v2897, %v2904
    %v2907 = vunpack.c.l.s4 1983009808
    %v2908 = vunpack.c.0.s8 %v2907
    %v2909 = vlaneseq
    %v2910 = vshrl.u32 %v2909, 7
    %v2911 = vsub.s32 %v2908, %v2910
    %v2912 = vrot.slane %v2898, %v2911
    %v2913 = vcombine.low %v2878, %v2886
    %v2914 = vcombine.high %v2878, %v2886
    %v2916 = vunpack.c.l.s4 1983009808
    %v2917 = vunpack.c.0.s8 %v2916
    %v2918 = vlaneseq
    %v2919 = vshrl.u32 %v2918, 7
    %v2920 = vsub.s32 %v2917, %v2919
    %v2921 = vrot.slane %v2913, %v2920
    %v2923 = vunpack.c.l.s4 1983009808
    %v2924 = vunpack.c.0.s8 %v2923
    %v2925 = vlaneseq
    %v2926 = vshrl.u32 %v2925, 7
    %v2927 = vsub.s32 %v2924, %v2926
    %v2928 = vrot.slane %v2914, %v2927
    %v2929 = vcombine.low %v2905, %v2921
    %v2930 = vcombine.high %v2905, %v2921
    %v2932 = vunpack.c.l.s4 1934713408
    %v2933 = vunpack.c.0.s8 %v2932
    %v2934 = vlaneseq
    %v2935 = vshrl.u32 %v2934, 7
    %v2936 = vsub.s32 %v2933, %v2935
    %v2937 = vrot.slane %v2929, %v2936
    %v2939 = vunpack.c.l.s4 1934713408
    %v2940 = vunpack.c.0.s8 %v2939
    %v2941 = vlaneseq
    %v2942 = vshrl.u32 %v2941, 7
    %v2943 = vsub.s32 %v2940, %v2942
    %v2944 = vrot.slane %v2930, %v2943
    %v2945 = vcombine.low %v2912, %v2928
    %v2946 = vcombine.high %v2912, %v2928
    %v2948 = vunpack.c.l.s4 1934713408
    %v2949 = vunpack.c.0.s8 %v2948
    %v2950 = vlaneseq
    %v2951 = vshrl.u32 %v2950, 7
    %v2952 = vsub.s32 %v2949, %v2951
    %v2953 = vrot.slane %v2945, %v2952
    %v2955 = vunpack.c.l.s4 1934713408
    %v2956 = vunpack.c.0.s8 %v2955
    %v2957 = vlaneseq
    %v2958 = vshrl.u32 %v2957, 7
    %v2959 = vsub.s32 %v2956, %v2958
    %v2960 = vrot.slane %v2946, %v2959
    %v2961 = vcombine.high %v2937, 0.0
    %v2962 = vcombine.high %v2944, 0.0
    %v2963 = vcombine.high %v2953, 0.0
    %v2964 = vcombine.high %v2960, 0.0
    %v2965 = vcombine.low %v2876, %v2884
    %v2966 = vcombine.high %v2876, %v2884
    %v2968 = vunpack.c.l.s4 1983009808
    %v2969 = vunpack.c.0.s8 %v2968
    %v2970 = vlaneseq
    %v2971 = vshrl.u32 %v2970, 7
    %v2972 = vsub.s32 %v2969, %v2971
    %v2973 = vrot.slane %v2965, %v2972
    %v2975 = vunpack.c.l.s4 1983009808
    %v2976 = vunpack.c.0.s8 %v2975
    %v2977 = vlaneseq
    %v2978 = vshrl.u32 %v2977, 7
    %v2979 = vsub.s32 %v2976, %v2978
    %v2980 = vrot.slane %v2966, %v2979
    %v2981 = vcombine.low %v2880, %v2888
    %v2982 = vcombine.high %v2880, %v2888
    %v2984 = vunpack.c.l.s4 1983009808
    %v2985 = vunpack.c.0.s8 %v2984
    %v2986 = vlaneseq
    %v2987 = vshrl.u32 %v2986, 7
    %v2988 = vsub.s32 %v2985, %v2987
    %v2989 = vrot.slane %v2981, %v2988
    %v2991 = vunpack.c.l.s4 1983009808
    %v2992 = vunpack.c.0.s8 %v2991
    %v2993 = vlaneseq
    %v2994 = vshrl.u32 %v2993, 7
    %v2995 = vsub.s32 %v2992, %v2994
    %v2996 = vrot.slane %v2982, %v2995
    %v2997 = vcombine.low %v2973, %v2989
    %v2998 = vcombine.high %v2973, %v2989
    %v3000 = vunpack.c.l.s4 1934713408
    %v3001 = vunpack.c.0.s8 %v3000
    %v3002 = vlaneseq
    %v3003 = vshrl.u32 %v3002, 7
    %v3004 = vsub.s32 %v3001, %v3003
    %v3005 = vrot.slane %v2997, %v3004
    %v3007 = vunpack.c.l.s4 1934713408
    %v3008 = vunpack.c.0.s8 %v3007
    %v3009 = vlaneseq
    %v3010 = vshrl.u32 %v3009, 7
    %v3011 = vsub.s32 %v3008, %v3010
    %v3012 = vrot.slane %v2998, %v3011
    %v3013 = vcombine.low %v2980, %v2996
    %v3014 = vcombine.high %v2980, %v2996
    %v3016 = vunpack.c.l.s4 1934713408
    %v3017 = vunpack.c.0.s8 %v3016
    %v3018 = vlaneseq
    %v3019 = vshrl.u32 %v3018, 7
    %v3020 = vsub.s32 %v3017, %v3019
    %v3021 = vrot.slane %v3013, %v3020
    %v3023 = vunpack.c.l.s4 1934713408
    %v3024 = vunpack.c.0.s8 %v3023
    %v3025 = vlaneseq
    %v3026 = vshrl.u32 %v3025, 7
    %v3027 = vsub.s32 %v3024, %v3026
    %v3028 = vrot.slane %v3014, %v3027
    %v3029 = vcombine.high %v3005, 0.0
    %v3030 = vcombine.high %v3012, 0.0
    %v3031 = vcombine.high %v3021, 0.0
    %v3032 = vcombine.high %v3028, 0.0
    %v3033 = vcombine.low %v2937, %v2944
    %v3035 = vunpack.c.l.s4 1983009808
    %v3036 = vunpack.c.0.s8 %v3035
    %v3037 = vlaneseq
    %v3038 = vshrl.u32 %v3037, 7
    %v3039 = vsub.s32 %v3036, %v3038
    %v3040 = vrot.slane %v3033, %v3039
    %v3041 = vcombine.low %v2961, %v2962
    %v3043 = vunpack.c.l.s4 1983009808
    %v3044 = vunpack.c.0.s8 %v3043
    %v3045 = vlaneseq
    %v3046 = vshrl.u32 %v3045, 7
    %v3047 = vsub.s32 %v3044, %v3046
    %v3048 = vrot.slane %v3041, %v3047
    %v3049 = vcombine.low %v2953, %v2960
    %v3051 = vunpack.c.l.s4 1983009808
    %v3052 = vunpack.c.0.s8 %v3051
    %v3053 = vlaneseq
    %v3054 = vshrl.u32 %v3053, 7
    %v3055 = vsub.s32 %v3052, %v3054
    %v3056 = vrot.slane %v3049, %v3055
    %v3057 = vcombine.low %v2963, %v2964
    %v3059 = vunpack.c.l.s4 1983009808
    %v3060 = vunpack.c.0.s8 %v3059
    %v3061 = vlaneseq
    %v3062 = vshrl.u32 %v3061, 7
    %v3063 = vsub.s32 %v3060, %v3062
    %v3064 = vrot.slane %v3057, %v3063
    %v3065 = vcombine.low %v3040, %v3048
    %v3066 = vcombine.high %v3040, %v3048
    %v3068 = vunpack.c.l.s4 1934713408
    %v3069 = vunpack.c.0.s8 %v3068
    %v3070 = vlaneseq
    %v3071 = vshrl.u32 %v3070, 7
    %v3072 = vsub.s32 %v3069, %v3071
    %v3073 = vrot.slane %v3065, %v3072
    %v3075 = vunpack.c.l.s4 1934713408
    %v3076 = vunpack.c.0.s8 %v3075
    %v3077 = vlaneseq
    %v3078 = vshrl.u32 %v3077, 7
    %v3079 = vsub.s32 %v3076, %v3078
    %v3080 = vrot.slane %v3066, %v3079
    %v3081 = vcombine.low %v3056, %v3064
    %v3082 = vcombine.high %v3056, %v3064
    %v3084 = vunpack.c.l.s4 1934713408
    %v3085 = vunpack.c.0.s8 %v3084
    %v3086 = vlaneseq
    %v3087 = vshrl.u32 %v3086, 7
    %v3088 = vsub.s32 %v3085, %v3087
    %v3089 = vrot.slane %v3081, %v3088
    %v3091 = vunpack.c.l.s4 1934713408
    %v3092 = vunpack.c.0.s8 %v3091
    %v3093 = vlaneseq
    %v3094 = vshrl.u32 %v3093, 7
    %v3095 = vsub.s32 %v3092, %v3094
    %v3096 = vrot.slane %v3082, %v3095
    %v3097 = vcombine.low %v3073, %v3089
    %v3098 = vcombine.high %v3073, %v3089
    %v3099 = vcombine.low %v3080, %v3096
    %v3100 = vcombine.high %v3080, %v3096
    %v3101 = vcombine.low %v3005, %v3012
    %v3103 = vunpack.c.l.s4 1983009808
    %v3104 = vunpack.c.0.s8 %v3103
    %v3105 = vlaneseq
    %v3106 = vshrl.u32 %v3105, 7
    %v3107 = vsub.s32 %v3104, %v3106
    %v3108 = vrot.slane %v3101, %v3107
    %v3109 = vcombine.low %v3029, %v3030
    %v3111 = vunpack.c.l.s4 1983009808
    %v3112 = vunpack.c.0.s8 %v3111
    %v3113 = vlaneseq
    %v3114 = vshrl.u32 %v3113, 7
    %v3115 = vsub.s32 %v3112, %v3114
    %v3116 = vrot.slane %v3109, %v3115
    %v3117 = vcombine.low %v3021, %v3028
    %v3119 = vunpack.c.l.s4 1983009808
    %v3120 = vunpack.c.0.s8 %v3119
    %v3121 = vlaneseq
    %v3122 = vshrl.u32 %v3121, 7
    %v3123 = vsub.s32 %v3120, %v3122
    %v3124 = vrot.slane %v3117, %v3123
    %v3125 = vcombine.low %v3031, %v3032
    %v3127 = vunpack.c.l.s4 1983009808
    %v3128 = vunpack.c.0.s8 %v3127
    %v3129 = vlaneseq
    %v3130 = vshrl.u32 %v3129, 7
    %v3131 = vsub.s32 %v3128, %v3130
    %v3132 = vrot.slane %v3125, %v3131
    %v3133 = vcombine.low %v3108, %v3116
    %v3134 = vcombine.high %v3108, %v3116
    %v3136 = vunpack.c.l.s4 1934713408
    %v3137 = vunpack.c.0.s8 %v3136
    %v3138 = vlaneseq
    %v3139 = vshrl.u32 %v3138, 7
    %v3140 = vsub.s32 %v3137, %v3139
    %v3141 = vrot.slane %v3133, %v3140
    %v3143 = vunpack.c.l.s4 1934713408
    %v3144 = vunpack.c.0.s8 %v3143
    %v3145 = vlaneseq
    %v3146 = vshrl.u32 %v3145, 7
    %v3147 = vsub.s32 %v3144, %v3146
    %v3148 = vrot.slane %v3134, %v3147
    %v3149 = vcombine.low %v3124, %v3132
    %v3150 = vcombine.high %v3124, %v3132
    %v3152 = vunpack.c.l.s4 1934713408
    %v3153 = vunpack.c.0.s8 %v3152
    %v3154 = vlaneseq
    %v3155 = vshrl.u32 %v3154, 7
    %v3156 = vsub.s32 %v3153, %v3155
    %v3157 = vrot.slane %v3149, %v3156
    %v3159 = vunpack.c.l.s4 1934713408
    %v3160 = vunpack.c.0.s8 %v3159
    %v3161 = vlaneseq
    %v3162 = vshrl.u32 %v3161, 7
    %v3163 = vsub.s32 %v3160, %v3162
    %v3164 = vrot.slane %v3150, %v3163
    %v3165 = vcombine.low %v3141, %v3157
    %v3166 = vcombine.high %v3141, %v3157
    %v3167 = vcombine.low %v3148, %v3164
    %v3168 = vcombine.high %v3148, %v3164
    %3169 = vrot.lane.b32.xlu0 %v2573, 64
    %v3170 = vpop.permute.xlu0 %3169
    %3171 = vrot.lane.b32.xlu0 %v2578, 64
    %v3172 = vpop.permute.xlu0 %3171
    %3173 = vrot.lane.b32.xlu0 %v2584, 64
    %v3174 = vpop.permute.xlu0 %3173
    %3175 = vrot.lane.b32.xlu0 %v2586, 64
    %v3176 = vpop.permute.xlu0 %3175
    %3177 = vrot.lane.b32.xlu0 %v2590, 64
    %v3178 = vpop.permute.xlu0 %3177
    %3179 = vrot.lane.b32.xlu0 %v2592, 64
    %v3180 = vpop.permute.xlu0 %3179
    %3181 = vrot.lane.b32.xlu0 %v2596, 64
    %v3182 = vpop.permute.xlu0 %3181
    %3183 = vrot.lane.b32.xlu0 %v2598, 64
    %v3184 = vpop.permute.xlu0 %3183
    %v3193 = vcombine.low %v3170, %v3178
    %v3194 = vcombine.high %v3170, %v3178
    %v3196 = vunpack.c.l.s4 1983009808
    %v3197 = vunpack.c.0.s8 %v3196
    %v3198 = vlaneseq
    %v3199 = vshrl.u32 %v3198, 7
    %v3200 = vsub.s32 %v3197, %v3199
    %v3201 = vrot.slane %v3193, %v3200
    %v3203 = vunpack.c.l.s4 1983009808
    %v3204 = vunpack.c.0.s8 %v3203
    %v3205 = vlaneseq
    %v3206 = vshrl.u32 %v3205, 7
    %v3207 = vsub.s32 %v3204, %v3206
    %v3208 = vrot.slane %v3194, %v3207
    %v3209 = vcombine.low %v3174, %v3182
    %v3210 = vcombine.high %v3174, %v3182
    %v3212 = vunpack.c.l.s4 1983009808
    %v3213 = vunpack.c.0.s8 %v3212
    %v3214 = vlaneseq
    %v3215 = vshrl.u32 %v3214, 7
    %v3216 = vsub.s32 %v3213, %v3215
    %v3217 = vrot.slane %v3209, %v3216
    %v3219 = vunpack.c.l.s4 1983009808
    %v3220 = vunpack.c.0.s8 %v3219
    %v3221 = vlaneseq
    %v3222 = vshrl.u32 %v3221, 7
    %v3223 = vsub.s32 %v3220, %v3222
    %v3224 = vrot.slane %v3210, %v3223
    %v3225 = vcombine.low %v3201, %v3217
    %v3226 = vcombine.high %v3201, %v3217
    %v3228 = vunpack.c.l.s4 1934713408
    %v3229 = vunpack.c.0.s8 %v3228
    %v3230 = vlaneseq
    %v3231 = vshrl.u32 %v3230, 7
    %v3232 = vsub.s32 %v3229, %v3231
    %v3233 = vrot.slane %v3225, %v3232
    %v3235 = vunpack.c.l.s4 1934713408
    %v3236 = vunpack.c.0.s8 %v3235
    %v3237 = vlaneseq
    %v3238 = vshrl.u32 %v3237, 7
    %v3239 = vsub.s32 %v3236, %v3238
    %v3240 = vrot.slane %v3226, %v3239
    %v3241 = vcombine.low %v3208, %v3224
    %v3242 = vcombine.high %v3208, %v3224
    %v3244 = vunpack.c.l.s4 1934713408
    %v3245 = vunpack.c.0.s8 %v3244
    %v3246 = vlaneseq
    %v3247 = vshrl.u32 %v3246, 7
    %v3248 = vsub.s32 %v3245, %v3247
    %v3249 = vrot.slane %v3241, %v3248
    %v3251 = vunpack.c.l.s4 1934713408
    %v3252 = vunpack.c.0.s8 %v3251
    %v3253 = vlaneseq
    %v3254 = vshrl.u32 %v3253, 7
    %v3255 = vsub.s32 %v3252, %v3254
    %v3256 = vrot.slane %v3242, %v3255
    %v3257 = vcombine.high %v3233, 0.0
    %v3258 = vcombine.high %v3240, 0.0
    %v3259 = vcombine.high %v3249, 0.0
    %v3260 = vcombine.high %v3256, 0.0
    %v3261 = vcombine.low %v3172, %v3180
    %v3262 = vcombine.high %v3172, %v3180
    %v3264 = vunpack.c.l.s4 1983009808
    %v3265 = vunpack.c.0.s8 %v3264
    %v3266 = vlaneseq
    %v3267 = vshrl.u32 %v3266, 7
    %v3268 = vsub.s32 %v3265, %v3267
    %v3269 = vrot.slane %v3261, %v3268
    %v3271 = vunpack.c.l.s4 1983009808
    %v3272 = vunpack.c.0.s8 %v3271
    %v3273 = vlaneseq
    %v3274 = vshrl.u32 %v3273, 7
    %v3275 = vsub.s32 %v3272, %v3274
    %v3276 = vrot.slane %v3262, %v3275
    %v3277 = vcombine.low %v3176, %v3184
    %v3278 = vcombine.high %v3176, %v3184
    %v3280 = vunpack.c.l.s4 1983009808
    %v3281 = vunpack.c.0.s8 %v3280
    %v3282 = vlaneseq
    %v3283 = vshrl.u32 %v3282, 7
    %v3284 = vsub.s32 %v3281, %v3283
    %v3285 = vrot.slane %v3277, %v3284
    %v3287 = vunpack.c.l.s4 1983009808
    %v3288 = vunpack.c.0.s8 %v3287
    %v3289 = vlaneseq
    %v3290 = vshrl.u32 %v3289, 7
    %v3291 = vsub.s32 %v3288, %v3290
    %v3292 = vrot.slane %v3278, %v3291
    %v3293 = vcombine.low %v3269, %v3285
    %v3294 = vcombine.high %v3269, %v3285
    %v3296 = vunpack.c.l.s4 1934713408
    %v3297 = vunpack.c.0.s8 %v3296
    %v3298 = vlaneseq
    %v3299 = vshrl.u32 %v3298, 7
    %v3300 = vsub.s32 %v3297, %v3299
    %v3301 = vrot.slane %v3293, %v3300
    %v3303 = vunpack.c.l.s4 1934713408
    %v3304 = vunpack.c.0.s8 %v3303
    %v3305 = vlaneseq
    %v3306 = vshrl.u32 %v3305, 7
    %v3307 = vsub.s32 %v3304, %v3306
    %v3308 = vrot.slane %v3294, %v3307
    %v3309 = vcombine.low %v3276, %v3292
    %v3310 = vcombine.high %v3276, %v3292
    %v3312 = vunpack.c.l.s4 1934713408
    %v3313 = vunpack.c.0.s8 %v3312
    %v3314 = vlaneseq
    %v3315 = vshrl.u32 %v3314, 7
    %v3316 = vsub.s32 %v3313, %v3315
    %v3317 = vrot.slane %v3309, %v3316
    %v3319 = vunpack.c.l.s4 1934713408
    %v3320 = vunpack.c.0.s8 %v3319
    %v3321 = vlaneseq
    %v3322 = vshrl.u32 %v3321, 7
    %v3323 = vsub.s32 %v3320, %v3322
    %v3324 = vrot.slane %v3310, %v3323
    %v3325 = vcombine.high %v3301, 0.0
    %v3326 = vcombine.high %v3308, 0.0
    %v3327 = vcombine.high %v3317, 0.0
    %v3328 = vcombine.high %v3324, 0.0
    %v3329 = vcombine.low %v3233, %v3240
    %v3331 = vunpack.c.l.s4 1983009808
    %v3332 = vunpack.c.0.s8 %v3331
    %v3333 = vlaneseq
    %v3334 = vshrl.u32 %v3333, 7
    %v3335 = vsub.s32 %v3332, %v3334
    %v3336 = vrot.slane %v3329, %v3335
    %v3337 = vcombine.low %v3257, %v3258
    %v3339 = vunpack.c.l.s4 1983009808
    %v3340 = vunpack.c.0.s8 %v3339
    %v3341 = vlaneseq
    %v3342 = vshrl.u32 %v3341, 7
    %v3343 = vsub.s32 %v3340, %v3342
    %v3344 = vrot.slane %v3337, %v3343
    %v3345 = vcombine.low %v3249, %v3256
    %v3347 = vunpack.c.l.s4 1983009808
    %v3348 = vunpack.c.0.s8 %v3347
    %v3349 = vlaneseq
    %v3350 = vshrl.u32 %v3349, 7
    %v3351 = vsub.s32 %v3348, %v3350
    %v3352 = vrot.slane %v3345, %v3351
    %v3353 = vcombine.low %v3259, %v3260
    %v3355 = vunpack.c.l.s4 1983009808
    %v3356 = vunpack.c.0.s8 %v3355
    %v3357 = vlaneseq
    %v3358 = vshrl.u32 %v3357, 7
    %v3359 = vsub.s32 %v3356, %v3358
    %v3360 = vrot.slane %v3353, %v3359
    %v3361 = vcombine.low %v3336, %v3344
    %v3362 = vcombine.high %v3336, %v3344
    %v3364 = vunpack.c.l.s4 1934713408
    %v3365 = vunpack.c.0.s8 %v3364
    %v3366 = vlaneseq
    %v3367 = vshrl.u32 %v3366, 7
    %v3368 = vsub.s32 %v3365, %v3367
    %v3369 = vrot.slane %v3361, %v3368
    %v3371 = vunpack.c.l.s4 1934713408
    %v3372 = vunpack.c.0.s8 %v3371
    %v3373 = vlaneseq
    %v3374 = vshrl.u32 %v3373, 7
    %v3375 = vsub.s32 %v3372, %v3374
    %v3376 = vrot.slane %v3362, %v3375
    %v3377 = vcombine.low %v3352, %v3360
    %v3378 = vcombine.high %v3352, %v3360
    %v3380 = vunpack.c.l.s4 1934713408
    %v3381 = vunpack.c.0.s8 %v3380
    %v3382 = vlaneseq
    %v3383 = vshrl.u32 %v3382, 7
    %v3384 = vsub.s32 %v3381, %v3383
    %v3385 = vrot.slane %v3377, %v3384
    %v3387 = vunpack.c.l.s4 1934713408
    %v3388 = vunpack.c.0.s8 %v3387
    %v3389 = vlaneseq
    %v3390 = vshrl.u32 %v3389, 7
    %v3391 = vsub.s32 %v3388, %v3390
    %v3392 = vrot.slane %v3378, %v3391
    %v3393 = vcombine.low %v3369, %v3385
    %v3394 = vcombine.high %v3369, %v3385
    %v3395 = vcombine.low %v3376, %v3392
    %v3396 = vcombine.high %v3376, %v3392
    %v3397 = vcombine.low %v3301, %v3308
    %v3399 = vunpack.c.l.s4 1983009808
    %v3400 = vunpack.c.0.s8 %v3399
    %v3401 = vlaneseq
    %v3402 = vshrl.u32 %v3401, 7
    %v3403 = vsub.s32 %v3400, %v3402
    %v3404 = vrot.slane %v3397, %v3403
    %v3405 = vcombine.low %v3325, %v3326
    %v3407 = vunpack.c.l.s4 1983009808
    %v3408 = vunpack.c.0.s8 %v3407
    %v3409 = vlaneseq
    %v3410 = vshrl.u32 %v3409, 7
    %v3411 = vsub.s32 %v3408, %v3410
    %v3412 = vrot.slane %v3405, %v3411
    %v3413 = vcombine.low %v3317, %v3324
    %v3415 = vunpack.c.l.s4 1983009808
    %v3416 = vunpack.c.0.s8 %v3415
    %v3417 = vlaneseq
    %v3418 = vshrl.u32 %v3417, 7
    %v3419 = vsub.s32 %v3416, %v3418
    %v3420 = vrot.slane %v3413, %v3419
    %v3421 = vcombine.low %v3327, %v3328
    %v3423 = vunpack.c.l.s4 1983009808
    %v3424 = vunpack.c.0.s8 %v3423
    %v3425 = vlaneseq
    %v3426 = vshrl.u32 %v3425, 7
    %v3427 = vsub.s32 %v3424, %v3426
    %v3428 = vrot.slane %v3421, %v3427
    %v3429 = vcombine.low %v3404, %v3412
    %v3430 = vcombine.high %v3404, %v3412
    %v3432 = vunpack.c.l.s4 1934713408
    %v3433 = vunpack.c.0.s8 %v3432
    %v3434 = vlaneseq
    %v3435 = vshrl.u32 %v3434, 7
    %v3436 = vsub.s32 %v3433, %v3435
    %v3437 = vrot.slane %v3429, %v3436
    %v3439 = vunpack.c.l.s4 1934713408
    %v3440 = vunpack.c.0.s8 %v3439
    %v3441 = vlaneseq
    %v3442 = vshrl.u32 %v3441, 7
    %v3443 = vsub.s32 %v3440, %v3442
    %v3444 = vrot.slane %v3430, %v3443
    %v3445 = vcombine.low %v3420, %v3428
    %v3446 = vcombine.high %v3420, %v3428
    %v3448 = vunpack.c.l.s4 1934713408
    %v3449 = vunpack.c.0.s8 %v3448
    %v3450 = vlaneseq
    %v3451 = vshrl.u32 %v3450, 7
    %v3452 = vsub.s32 %v3449, %v3451
    %v3453 = vrot.slane %v3445, %v3452
    %v3455 = vunpack.c.l.s4 1934713408
    %v3456 = vunpack.c.0.s8 %v3455
    %v3457 = vlaneseq
    %v3458 = vshrl.u32 %v3457, 7
    %v3459 = vsub.s32 %v3456, %v3458
    %v3460 = vrot.slane %v3446, %v3459
    %v3461 = vcombine.low %v3437, %v3453
    %v3462 = vcombine.high %v3437, %v3453
    %v3463 = vcombine.low %v3444, %v3460
    %v3464 = vcombine.high %v3444, %v3460
    %v3466 = vsel %vm1076, %v2801, 0
    %v3469 = vsel %vm1076, %v2869, 0
    %v3472 = vsel %vm1076, %v3097, 0
    %v3475 = vsel %vm1076, %v3165, 0
    %3477 = vmatprep.subr.mxu0 0.0
    %3478 = vmatpush1.xpose.msra.mxu0 %v3472
    %3479 = vmatprep.subr.mxu0 0.0
    %3480 = vmatpush1.xpose.msra.mxu0 %v3475
    %3481 = vmatprep.subr.mxu0 0.0
    %3482 = vmatpush1.xpose.msra.mxu0 0.0
    %3483 = vmatprep.subr.mxu0 0.0
    %3484 = vmatpush1.xpose.msra.mxu0 0.0
    %3485 = vmatprep.subr.mxu0 0.0
    %3486 = vmatpush1.xpose.msra.mxu0 0.0
    %3487 = vmatprep.subr.mxu0 0.0
    %3488 = vmatpush1.xpose.msra.mxu0 0.0
    %3489 = vmatprep.subr.mxu0 0.0
    %3490 = vmatpush1.xpose.msra.mxu0 0.0
    %3491 = vmatprep.subr.mxu0 0.0
    %3492 = vmatpush1.xpose.msra.mxu0 0.0
    %3493 = vmatprep.subr.mxu0 0.0
    %3494 = vmatpush1.xpose.msra.mxu0 0.0
    %3495 = vmatprep.subr.mxu0 0.0
    %3496 = vmatpush1.xpose.msra.mxu0 0.0
    %3497 = vmatprep.subr.mxu0 0.0
    %3498 = vmatpush1.xpose.msra.mxu0 0.0
    %3499 = vmatprep.subr.mxu0 0.0
    %3500 = vmatpush1.xpose.msra.mxu0 0.0
    %3501 = vmatprep.subr.mxu0 0.0
    %3502 = vmatpush1.xpose.msra.mxu0 0.0
    %3503 = vmatprep.subr.mxu0 0.0
    %3504 = vmatpush1.xpose.msra.mxu0 0.0
    %3505 = vmatprep.subr.mxu0 0.0
    %3506 = vmatpush1.xpose.msra.mxu0 0.0
    %3507 = vmatprep.subr.mxu0 0.0
    %3508 = vmatpush1.xpose.msra.mxu0 0.0
    %3509 = vmatprep.subr.mxu0 0.0
    %3510 = vmatpush1.xpose.msra.mxu0 0.0
    %3511 = vmatprep.subr.mxu0 0.0
    %3512 = vmatpush1.xpose.msra.mxu0 0.0
    %3513 = vmatprep.subr.mxu0 0.0
    %3514 = vmatpush1.xpose.msra.mxu0 0.0
    %3515 = vmatprep.subr.mxu0 0.0
    %3516 = vmatpush1.xpose.msra.mxu0 0.0
    %3517 = vmatprep.subr.mxu0 0.0
    %3518 = vmatpush1.xpose.msra.mxu0 0.0
    %3519 = vmatprep.subr.mxu0 0.0
    %3520 = vmatpush1.xpose.msra.mxu0 0.0
    %3521 = vmatprep.subr.mxu0 0.0
    %3522 = vmatpush1.xpose.msra.mxu0 0.0
    %3523 = vmatprep.subr.mxu0 0.0
    %3524 = vmatpush1.xpose.msra.mxu0 0.0
    %3525 = vmatprep.subr.mxu0 0.0
    %3526 = vmatpush1.xpose.msra.mxu0 0.0
    %3527 = vmatprep.subr.mxu0 0.0
    %3528 = vmatpush1.xpose.msra.mxu0 0.0
    %3529 = vmatprep.subr.mxu0 0.0
    %3530 = vmatpush1.xpose.msra.mxu0 0.0
    %3531 = vmatprep.subr.mxu0 0.0
    %3532 = vmatpush1.xpose.msra.mxu0 0.0
    %3533 = vmatprep.subr.mxu0 0.0
    %3534 = vmatpush1.xpose.msra.mxu0 0.0
    %3535 = vmatprep.subr.mxu0 0.0
    %3536 = vmatpush1.xpose.msra.mxu0 0.0
    %3537 = vmatprep.subr.mxu0 0.0
    %3538 = vmatpush1.xpose.msra.mxu0 0.0
    %3539 = vmatprep.subr.mxu0 0.0
    %3540 = vmatpush1.xpose.msra.mxu0 0.0
    %3541 = vmatprep.mubr.f32.mxu0 0.0
    %3542 = vmatmul.mubr.f32.gmra.mrb[0].mxu0 %v3466
    %v3543 = vpop.f32.mrb[0].mxu0
    %v3544 = vadd.f32 %v75, %v3543
    %v3545 = vpop.f32.mrb[0].mxu0
    %3546 = vmatprep.mubr.f32.mxu0 0.0
    %3547 = vmatmul.mubr.f32.gmra.mrb[0].mxu0 %v3469
    %v3548 = vpop.f32.mrb[0].mxu0
    %v3549 = vadd.f32 %v76, %v3548
    %v3550 = vpop.f32.mrb[0].mxu0
    %3551 = vdwg.mxu0
    %v3553 = vsel %vm1076, %v2802, 0
    %v3556 = vsel %vm1076, %v2870, 0
    %v3559 = vsel %vm1076, %v3098, 0
    %v3562 = vsel %vm1076, %v3166, 0
    %3564 = vmatprep.subr.mxu0 0.0
    %3565 = vmatpush1.xpose.msra.mxu0 %v3559
    %3566 = vmatprep.subr.mxu0 0.0
    %3567 = vmatpush1.xpose.msra.mxu0 %v3562
    %3568 = vmatprep.subr.mxu0 0.0
    %3569 = vmatpush1.xpose.msra.mxu0 0.0
    %3570 = vmatprep.subr.mxu0 0.0
    %3571 = vmatpush1.xpose.msra.mxu0 0.0
    %3572 = vmatprep.subr.mxu0 0.0
    %3573 = vmatpush1.xpose.msra.mxu0 0.0
    %3574 = vmatprep.subr.mxu0 0.0
    %3575 = vmatpush1.xpose.msra.mxu0 0.0
    %3576 = vmatprep.subr.mxu0 0.0
    %3577 = vmatpush1.xpose.msra.mxu0 0.0
    %3578 = vmatprep.subr.mxu0 0.0
    %3579 = vmatpush1.xpose.msra.mxu0 0.0
    %3580 = vmatprep.subr.mxu0 0.0
    %3581 = vmatpush1.xpose.msra.mxu0 0.0
    %3582 = vmatprep.subr.mxu0 0.0
    %3583 = vmatpush1.xpose.msra.mxu0 0.0
    %3584 = vmatprep.subr.mxu0 0.0
    %3585 = vmatpush1.xpose.msra.mxu0 0.0
    %3586 = vmatprep.subr.mxu0 0.0
    %3587 = vmatpush1.xpose.msra.mxu0 0.0
    %3588 = vmatprep.subr.mxu0 0.0
    %3589 = vmatpush1.xpose.msra.mxu0 0.0
    %3590 = vmatprep.subr.mxu0 0.0
    %3591 = vmatpush1.xpose.msra.mxu0 0.0
    %3592 = vmatprep.subr.mxu0 0.0
    %3593 = vmatpush1.xpose.msra.mxu0 0.0
    %3594 = vmatprep.subr.mxu0 0.0
    %3595 = vmatpush1.xpose.msra.mxu0 0.0
    %3596 = vmatprep.subr.mxu0 0.0
    %3597 = vmatpush1.xpose.msra.mxu0 0.0
    %3598 = vmatprep.subr.mxu0 0.0
    %3599 = vmatpush1.xpose.msra.mxu0 0.0
    %3600 = vmatprep.subr.mxu0 0.0
    %3601 = vmatpush1.xpose.msra.mxu0 0.0
    %3602 = vmatprep.subr.mxu0 0.0
    %3603 = vmatpush1.xpose.msra.mxu0 0.0
    %3604 = vmatprep.subr.mxu0 0.0
    %3605 = vmatpush1.xpose.msra.mxu0 0.0
    %3606 = vmatprep.subr.mxu0 0.0
    %3607 = vmatpush1.xpose.msra.mxu0 0.0
    %3608 = vmatprep.subr.mxu0 0.0
    %3609 = vmatpush1.xpose.msra.mxu0 0.0
    %3610 = vmatprep.subr.mxu0 0.0
    %3611 = vmatpush1.xpose.msra.mxu0 0.0
    %3612 = vmatprep.subr.mxu0 0.0
    %3613 = vmatpush1.xpose.msra.mxu0 0.0
    %3614 = vmatprep.subr.mxu0 0.0
    %3615 = vmatpush1.xpose.msra.mxu0 0.0
    %3616 = vmatprep.subr.mxu0 0.0
    %3617 = vmatpush1.xpose.msra.mxu0 0.0
    %3618 = vmatprep.subr.mxu0 0.0
    %3619 = vmatpush1.xpose.msra.mxu0 0.0
    %3620 = vmatprep.subr.mxu0 0.0
    %3621 = vmatpush1.xpose.msra.mxu0 0.0
    %3622 = vmatprep.subr.mxu0 0.0
    %3623 = vmatpush1.xpose.msra.mxu0 0.0
    %3624 = vmatprep.subr.mxu0 0.0
    %3625 = vmatpush1.xpose.msra.mxu0 0.0
    %3626 = vmatprep.subr.mxu0 0.0
    %3627 = vmatpush1.xpose.msra.mxu0 0.0
    %3628 = vmatprep.mubr.f32.mxu0 0.0
    %3629 = vmatmul.mubr.f32.gmra.mrb[0].mxu0 %v3553
    %v3630 = vpop.f32.mrb[0].mxu0
    %v3631 = vadd.f32 %v75, %v3630
    %v3632 = vpop.f32.mrb[0].mxu0
    %3633 = vmatprep.mubr.f32.mxu0 0.0
    %3634 = vmatmul.mubr.f32.gmra.mrb[0].mxu0 %v3556
    %v3635 = vpop.f32.mrb[0].mxu0
    %v3636 = vadd.f32 %v76, %v3635
    %v3637 = vpop.f32.mrb[0].mxu0
    %3638 = vdwg.mxu0
    %v3640 = vsel %vm1076, %v2803, 0
    %v3643 = vsel %vm1076, %v2871, 0
    %v3646 = vsel %vm1076, %v3099, 0
    %v3649 = vsel %vm1076, %v3167, 0
    %3651 = vmatprep.subr.mxu0 0.0
    %3652 = vmatpush1.xpose.msra.mxu0 %v3646
    %3653 = vmatprep.subr.mxu0 0.0
    %3654 = vmatpush1.xpose.msra.mxu0 %v3649
    %3655 = vmatprep.subr.mxu0 0.0
    %3656 = vmatpush1.xpose.msra.mxu0 0.0
    %3657 = vmatprep.subr.mxu0 0.0
    %3658 = vmatpush1.xpose.msra.mxu0 0.0
    %3659 = vmatprep.subr.mxu0 0.0
    %3660 = vmatpush1.xpose.msra.mxu0 0.0
    %3661 = vmatprep.subr.mxu0 0.0
    %3662 = vmatpush1.xpose.msra.mxu0 0.0
    %3663 = vmatprep.subr.mxu0 0.0
    %3664 = vmatpush1.xpose.msra.mxu0 0.0
    %3665 = vmatprep.subr.mxu0 0.0
    %3666 = vmatpush1.xpose.msra.mxu0 0.0
    %3667 = vmatprep.subr.mxu0 0.0
    %3668 = vmatpush1.xpose.msra.mxu0 0.0
    %3669 = vmatprep.subr.mxu0 0.0
    %3670 = vmatpush1.xpose.msra.mxu0 0.0
    %3671 = vmatprep.subr.mxu0 0.0
    %3672 = vmatpush1.xpose.msra.mxu0 0.0
    %3673 = vmatprep.subr.mxu0 0.0
    %3674 = vmatpush1.xpose.msra.mxu0 0.0
    %3675 = vmatprep.subr.mxu0 0.0
    %3676 = vmatpush1.xpose.msra.mxu0 0.0
    %3677 = vmatprep.subr.mxu0 0.0
    %3678 = vmatpush1.xpose.msra.mxu0 0.0
    %3679 = vmatprep.subr.mxu0 0.0
    %3680 = vmatpush1.xpose.msra.mxu0 0.0
    %3681 = vmatprep.subr.mxu0 0.0
    %3682 = vmatpush1.xpose.msra.mxu0 0.0
    %3683 = vmatprep.subr.mxu0 0.0
    %3684 = vmatpush1.xpose.msra.mxu0 0.0
    %3685 = vmatprep.subr.mxu0 0.0
    %3686 = vmatpush1.xpose.msra.mxu0 0.0
    %3687 = vmatprep.subr.mxu0 0.0
    %3688 = vmatpush1.xpose.msra.mxu0 0.0
    %3689 = vmatprep.subr.mxu0 0.0
    %3690 = vmatpush1.xpose.msra.mxu0 0.0
    %3691 = vmatprep.subr.mxu0 0.0
    %3692 = vmatpush1.xpose.msra.mxu0 0.0
    %3693 = vmatprep.subr.mxu0 0.0
    %3694 = vmatpush1.xpose.msra.mxu0 0.0
    %3695 = vmatprep.subr.mxu0 0.0
    %3696 = vmatpush1.xpose.msra.mxu0 0.0
    %3697 = vmatprep.subr.mxu0 0.0
    %3698 = vmatpush1.xpose.msra.mxu0 0.0
    %3699 = vmatprep.subr.mxu0 0.0
    %3700 = vmatpush1.xpose.msra.mxu0 0.0
    %3701 = vmatprep.subr.mxu0 0.0
    %3702 = vmatpush1.xpose.msra.mxu0 0.0
    %3703 = vmatprep.subr.mxu0 0.0
    %3704 = vmatpush1.xpose.msra.mxu0 0.0
    %3705 = vmatprep.subr.mxu0 0.0
    %3706 = vmatpush1.xpose.msra.mxu0 0.0
    %3707 = vmatprep.subr.mxu0 0.0
    %3708 = vmatpush1.xpose.msra.mxu0 0.0
    %3709 = vmatprep.subr.mxu0 0.0
    %3710 = vmatpush1.xpose.msra.mxu0 0.0
    %3711 = vmatprep.subr.mxu0 0.0
    %3712 = vmatpush1.xpose.msra.mxu0 0.0
    %3713 = vmatprep.subr.mxu0 0.0
    %3714 = vmatpush1.xpose.msra.mxu0 0.0
    %3715 = vmatprep.mubr.f32.mxu0 0.0
    %3716 = vmatmul.mubr.f32.gmra.mrb[0].mxu0 %v3640
    %v3717 = vpop.f32.mrb[0].mxu0
    %v3718 = vadd.f32 %v75, %v3717
    %v3719 = vpop.f32.mrb[0].mxu0
    %3720 = vmatprep.mubr.f32.mxu0 0.0
    %3721 = vmatmul.mubr.f32.gmra.mrb[0].mxu0 %v3643
    %v3722 = vpop.f32.mrb[0].mxu0
    %v3723 = vadd.f32 %v76, %v3722
    %v3724 = vpop.f32.mrb[0].mxu0
    %3725 = vdwg.mxu0
    %v3727 = vsel %vm1076, %v2804, 0
    %v3730 = vsel %vm1076, %v2872, 0
    %v3733 = vsel %vm1076, %v3100, 0
    %v3736 = vsel %vm1076, %v3168, 0
    %3738 = vmatprep.subr.mxu0 0.0
    %3739 = vmatpush1.xpose.msra.mxu0 %v3733
    %3740 = vmatprep.subr.mxu0 0.0
    %3741 = vmatpush1.xpose.msra.mxu0 %v3736
    %3742 = vmatprep.subr.mxu0 0.0
    %3743 = vmatpush1.xpose.msra.mxu0 0.0
    %3744 = vmatprep.subr.mxu0 0.0
    %3745 = vmatpush1.xpose.msra.mxu0 0.0
    %3746 = vmatprep.subr.mxu0 0.0
    %3747 = vmatpush1.xpose.msra.mxu0 0.0
    %3748 = vmatprep.subr.mxu0 0.0
    %3749 = vmatpush1.xpose.msra.mxu0 0.0
    %3750 = vmatprep.subr.mxu0 0.0
    %3751 = vmatpush1.xpose.msra.mxu0 0.0
    %3752 = vmatprep.subr.mxu0 0.0
    %3753 = vmatpush1.xpose.msra.mxu0 0.0
    %3754 = vmatprep.subr.mxu0 0.0
    %3755 = vmatpush1.xpose.msra.mxu0 0.0
    %3756 = vmatprep.subr.mxu0 0.0
    %3757 = vmatpush1.xpose.msra.mxu0 0.0
    %3758 = vmatprep.subr.mxu0 0.0
    %3759 = vmatpush1.xpose.msra.mxu0 0.0
    %3760 = vmatprep.subr.mxu0 0.0
    %3761 = vmatpush1.xpose.msra.mxu0 0.0
    %3762 = vmatprep.subr.mxu0 0.0
    %3763 = vmatpush1.xpose.msra.mxu0 0.0
    %3764 = vmatprep.subr.mxu0 0.0
    %3765 = vmatpush1.xpose.msra.mxu0 0.0
    %3766 = vmatprep.subr.mxu0 0.0
    %3767 = vmatpush1.xpose.msra.mxu0 0.0
    %3768 = vmatprep.subr.mxu0 0.0
    %3769 = vmatpush1.xpose.msra.mxu0 0.0
    %3770 = vmatprep.subr.mxu0 0.0
    %3771 = vmatpush1.xpose.msra.mxu0 0.0
    %3772 = vmatprep.subr.mxu0 0.0
    %3773 = vmatpush1.xpose.msra.mxu0 0.0
    %3774 = vmatprep.subr.mxu0 0.0
    %3775 = vmatpush1.xpose.msra.mxu0 0.0
    %3776 = vmatprep.subr.mxu0 0.0
    %3777 = vmatpush1.xpose.msra.mxu0 0.0
    %3778 = vmatprep.subr.mxu0 0.0
    %3779 = vmatpush1.xpose.msra.mxu0 0.0
    %3780 = vmatprep.subr.mxu0 0.0
    %3781 = vmatpush1.xpose.msra.mxu0 0.0
    %3782 = vmatprep.subr.mxu0 0.0
    %3783 = vmatpush1.xpose.msra.mxu0 0.0
    %3784 = vmatprep.subr.mxu0 0.0
    %3785 = vmatpush1.xpose.msra.mxu0 0.0
    %3786 = vmatprep.subr.mxu0 0.0
    %3787 = vmatpush1.xpose.msra.mxu0 0.0
    %3788 = vmatprep.subr.mxu0 0.0
    %3789 = vmatpush1.xpose.msra.mxu0 0.0
    %3790 = vmatprep.subr.mxu0 0.0
    %3791 = vmatpush1.xpose.msra.mxu0 0.0
    %3792 = vmatprep.subr.mxu0 0.0
    %3793 = vmatpush1.xpose.msra.mxu0 0.0
    %3794 = vmatprep.subr.mxu0 0.0
    %3795 = vmatpush1.xpose.msra.mxu0 0.0
    %3796 = vmatprep.subr.mxu0 0.0
    %3797 = vmatpush1.xpose.msra.mxu0 0.0
    %3798 = vmatprep.subr.mxu0 0.0
    %3799 = vmatpush1.xpose.msra.mxu0 0.0
    %3800 = vmatprep.subr.mxu0 0.0
    %3801 = vmatpush1.xpose.msra.mxu0 0.0
    %3802 = vmatprep.mubr.f32.mxu0 0.0
    %3803 = vmatmul.mubr.f32.gmra.mrb[0].mxu0 %v3727
    %v3804 = vpop.f32.mrb[0].mxu0
    %v3805 = vadd.f32 %v75, %v3804
    %v3806 = vpop.f32.mrb[0].mxu0
    %3807 = vmatprep.mubr.f32.mxu0 0.0
    %3808 = vmatmul.mubr.f32.gmra.mrb[0].mxu0 %v3730
    %v3809 = vpop.f32.mrb[0].mxu0
    %v3810 = vadd.f32 %v76, %v3809
    %v3811 = vpop.f32.mrb[0].mxu0
    %3812 = vdwg.mxu0
    %v3813 = vsel %vm1425, %v3544, -inf
    %3814 = vmax.xlane.f32.xlu0 %v3813
    %v3815 = vpop.xlane.xlu0 %3814
    %v3816 = vsel %vm1425, %v3549, -inf
    %3817 = vmax.xlane.f32.xlu0 %v3816
    %v3818 = vpop.xlane.xlu0 %3817
    %v3819 = vsel %vm1425, %v3631, -inf
    %3820 = vmax.xlane.f32.xlu0 %v3819
    %v3821 = vpop.xlane.xlu0 %3820
    %v3822 = vsel %vm1425, %v3636, -inf
    %3823 = vmax.xlane.f32.xlu0 %v3822
    %v3824 = vpop.xlane.xlu0 %3823
    %v3825 = vsel %vm1425, %v3718, -inf
    %3826 = vmax.xlane.f32.xlu0 %v3825
    %v3827 = vpop.xlane.xlu0 %3826
    %v3828 = vsel %vm1425, %v3723, -inf
    %3829 = vmax.xlane.f32.xlu0 %v3828
    %v3830 = vpop.xlane.xlu0 %3829
    %v3831 = vsel %vm1425, %v3805, -inf
    %3832 = vmax.xlane.f32.xlu0 %v3831
    %v3833 = vpop.xlane.xlu0 %3832
    %v3834 = vsel %vm1425, %v3810, -inf
    %3835 = vmax.xlane.f32.xlu0 %v3834
    %v3836 = vpop.xlane.xlu0 %3835
    %v3837 = vsub.f32 %v3544, %v3815
    %v3838 = vsub.f32 %v3549, %v3818
    %v3839 = vsub.f32 %v3631, %v3821
    %v3840 = vsub.f32 %v3636, %v3824
    %v3841 = vsub.f32 %v3718, %v3827
    %v3842 = vsub.f32 %v3723, %v3830
    %v3843 = vsub.f32 %v3805, %v3833
    %v3844 = vsub.f32 %v3810, %v3836
    %v3845 = vmul.f32 %v3837, 1.442695
    %v3846 = vpow.pop %v3845
    %v3847 = vmul.f32 %v3838, 1.442695
    %v3848 = vpow.pop %v3847
    %v3849 = vmul.f32 %v3839, 1.442695
    %v3850 = vpow.pop %v3849
    %v3851 = vmul.f32 %v3840, 1.442695
    %v3852 = vpow.pop %v3851
    %v3853 = vmul.f32 %v3841, 1.442695
    %v3854 = vpow.pop %v3853
    %v3855 = vmul.f32 %v3842, 1.442695
    %v3856 = vpow.pop %v3855
    %v3857 = vmul.f32 %v3843, 1.442695
    %v3858 = vpow.pop %v3857
    %v3859 = vmul.f32 %v3844, 1.442695
    %v3860 = vpow.pop %v3859
    %v3861 = vsel %vm1425, %v3846, 0.0
    %3862 = vadd.xlane.f32.xlu0 %v3861
    %v3863 = vpop.xlane.xlu0 %3862
    %v3864 = vsel %vm1425, %v3848, 0.0
    %3865 = vadd.xlane.f32.xlu0 %v3864
    %v3866 = vpop.xlane.xlu0 %3865
    %v3867 = vsel %vm1425, %v3850, 0.0
    %3868 = vadd.xlane.f32.xlu0 %v3867
    %v3869 = vpop.xlane.xlu0 %3868
    %v3870 = vsel %vm1425, %v3852, 0.0
    %3871 = vadd.xlane.f32.xlu0 %v3870
    %v3872 = vpop.xlane.xlu0 %3871
    %v3873 = vsel %vm1425, %v3854, 0.0
    %3874 = vadd.xlane.f32.xlu0 %v3873
    %v3875 = vpop.xlane.xlu0 %3874
    %v3876 = vsel %vm1425, %v3856, 0.0
    %3877 = vadd.xlane.f32.xlu0 %v3876
    %v3878 = vpop.xlane.xlu0 %3877
    %v3879 = vsel %vm1425, %v3858, 0.0
    %3880 = vadd.xlane.f32.xlu0 %v3879
    %v3881 = vpop.xlane.xlu0 %3880
    %v3882 = vsel %vm1425, %v3860, 0.0
    %3883 = vadd.xlane.f32.xlu0 %v3882
    %v3884 = vpop.xlane.xlu0 %3883
    %v3885 = vrcp.pop %v3863
    %v3886 = vrcp.pop %v3866
    %v3887 = vrcp.pop %v3869
    %v3888 = vrcp.pop %v3872
    %v3889 = vrcp.pop %v3875
    %v3890 = vrcp.pop %v3878
    %v3891 = vrcp.pop %v3881
    %v3892 = vrcp.pop %v3884
    %v3893 = vmul.f32 %v3846, %v3885
    %v3894 = vmul.f32 %v3848, %v3886
    %v3895 = vmul.f32 %v3850, %v3887
    %v3896 = vmul.f32 %v3852, %v3888
    %v3897 = vmul.f32 %v3854, %v3889
    %v3898 = vmul.f32 %v3856, %v3890
    %v3899 = vmul.f32 %v3858, %v3891
    %v3900 = vmul.f32 %v3860, %v3892
    %v3902 = vsel %vm1425, %v3893, 0
    %v3905 = vsel %vm1425, %v3894, 0
    %3907 = vmatprep.subr.mxu0 0.0
    %3908 = vmatpush1.msra.mxu0 %v3393
    %3909 = vmatprep.subr.mxu0 0.0
    %3910 = vmatpush1.msra.mxu0 %v3461
    %3911 = vmatprep.subr.mxu0 0.0
    %3912 = vmatpush1.msra.mxu0 0.0
    %3913 = vmatprep.subr.mxu0 0.0
    %3914 = vmatpush1.msra.mxu0 0.0
    %3915 = vmatprep.subr.mxu0 0.0
    %3916 = vmatpush1.msra.mxu0 0.0
    %3917 = vmatprep.subr.mxu0 0.0
    %3918 = vmatpush1.msra.mxu0 0.0
    %3919 = vmatprep.subr.mxu0 0.0
    %3920 = vmatpush1.msra.mxu0 0.0
    %3921 = vmatprep.subr.mxu0 0.0
    %3922 = vmatpush1.msra.mxu0 0.0
    %3923 = vmatprep.subr.mxu0 0.0
    %3924 = vmatpush1.msra.mxu0 0.0
    %3925 = vmatprep.subr.mxu0 0.0
    %3926 = vmatpush1.msra.mxu0 0.0
    %3927 = vmatprep.subr.mxu0 0.0
    %3928 = vmatpush1.msra.mxu0 0.0
    %3929 = vmatprep.subr.mxu0 0.0
    %3930 = vmatpush1.msra.mxu0 0.0
    %3931 = vmatprep.subr.mxu0 0.0
    %3932 = vmatpush1.msra.mxu0 0.0
    %3933 = vmatprep.subr.mxu0 0.0
    %3934 = vmatpush1.msra.mxu0 0.0
    %3935 = vmatprep.subr.mxu0 0.0
    %3936 = vmatpush1.msra.mxu0 0.0
    %3937 = vmatprep.subr.mxu0 0.0
    %3938 = vmatpush1.msra.mxu0 0.0
    %3939 = vmatprep.subr.mxu0 0.0
    %3940 = vmatpush1.msra.mxu0 0.0
    %3941 = vmatprep.subr.mxu0 0.0
    %3942 = vmatpush1.msra.mxu0 0.0
    %3943 = vmatprep.subr.mxu0 0.0
    %3944 = vmatpush1.msra.mxu0 0.0
    %3945 = vmatprep.subr.mxu0 0.0
    %3946 = vmatpush1.msra.mxu0 0.0
    %3947 = vmatprep.subr.mxu0 0.0
    %3948 = vmatpush1.msra.mxu0 0.0
    %3949 = vmatprep.subr.mxu0 0.0
    %3950 = vmatpush1.msra.mxu0 0.0
    %3951 = vmatprep.subr.mxu0 0.0
    %3952 = vmatpush1.msra.mxu0 0.0
    %3953 = vmatprep.subr.mxu0 0.0
    %3954 = vmatpush1.msra.mxu0 0.0
    %3955 = vmatprep.subr.mxu0 0.0
    %3956 = vmatpush1.msra.mxu0 0.0
    %3957 = vmatprep.subr.mxu0 0.0
    %3958 = vmatpush1.msra.mxu0 0.0
    %3959 = vmatprep.subr.mxu0 0.0
    %3960 = vmatpush1.msra.mxu0 0.0
    %3961 = vmatprep.subr.mxu0 0.0
    %3962 = vmatpush1.msra.mxu0 0.0
    %3963 = vmatprep.subr.mxu0 0.0
    %3964 = vmatpush1.msra.mxu0 0.0
    %3965 = vmatprep.subr.mxu0 0.0
    %3966 = vmatpush1.msra.mxu0 0.0
    %3967 = vmatprep.subr.mxu0 0.0
    %3968 = vmatpush1.msra.mxu0 0.0
    %3969 = vmatprep.subr.mxu0 0.0
    %3970 = vmatpush1.msra.mxu0 0.0
    %3971 = vmatprep.mubr.f32.mxu0 0.0
    %3972 = vmatmul.mubr.f32.gmra.mrb[0].mxu0 %v3902
    %v3973 = vpop.f32.mrb[0].mxu0
    %v3974 = vadd.f32 0.0, %v3973
    %v3975 = vpop.f32.mrb[0].mxu0
    %3976 = vmatprep.mubr.f32.mxu0 0.0
    %3977 = vmatmul.mubr.f32.gmra.mrb[0].mxu0 %v3905
    %v3978 = vpop.f32.mrb[0].mxu0
    %v3979 = vadd.f32 0.0, %v3978
    %v3980 = vpop.f32.mrb[0].mxu0
    %3981 = vdwg.mxu0
    %v3983 = vsel %vm1425, %v3895, 0
    %v3986 = vsel %vm1425, %v3896, 0
    %3988 = vmatprep.subr.mxu0 0.0
    %3989 = vmatpush1.msra.mxu0 %v3394
    %3990 = vmatprep.subr.mxu0 0.0
    %3991 = vmatpush1.msra.mxu0 %v3462
    %3992 = vmatprep.subr.mxu0 0.0
    %3993 = vmatpush1.msra.mxu0 0.0
    %3994 = vmatprep.subr.mxu0 0.0
    %3995 = vmatpush1.msra.mxu0 0.0
    %3996 = vmatprep.subr.mxu0 0.0
    %3997 = vmatpush1.msra.mxu0 0.0
    %3998 = vmatprep.subr.mxu0 0.0
    %3999 = vmatpush1.msra.mxu0 0.0
    %4000 = vmatprep.subr.mxu0 0.0
    %4001 = vmatpush1.msra.mxu0 0.0
    %4002 = vmatprep.subr.mxu0 0.0
    %4003 = vmatpush1.msra.mxu0 0.0
    %4004 = vmatprep.subr.mxu0 0.0
    %4005 = vmatpush1.msra.mxu0 0.0
    %4006 = vmatprep.subr.mxu0 0.0
    %4007 = vmatpush1.msra.mxu0 0.0
    %4008 = vmatprep.subr.mxu0 0.0
    %4009 = vmatpush1.msra.mxu0 0.0
    %4010 = vmatprep.subr.mxu0 0.0
    %4011 = vmatpush1.msra.mxu0 0.0
    %4012 = vmatprep.subr.mxu0 0.0
    %4013 = vmatpush1.msra.mxu0 0.0
    %4014 = vmatprep.subr.mxu0 0.0
    %4015 = vmatpush1.msra.mxu0 0.0
    %4016 = vmatprep.subr.mxu0 0.0
    %4017 = vmatpush1.msra.mxu0 0.0
    %4018 = vmatprep.subr.mxu0 0.0
    %4019 = vmatpush1.msra.mxu0 0.0
    %4020 = vmatprep.subr.mxu0 0.0
    %4021 = vmatpush1.msra.mxu0 0.0
    %4022 = vmatprep.subr.mxu0 0.0
    %4023 = vmatpush1.msra.mxu0 0.0
    %4024 = vmatprep.subr.mxu0 0.0
    %4025 = vmatpush1.msra.mxu0 0.0
    %4026 = vmatprep.subr.mxu0 0.0
    %4027 = vmatpush1.msra.mxu0 0.0
    %4028 = vmatprep.subr.mxu0 0.0
    %4029 = vmatpush1.msra.mxu0 0.0
    %4030 = vmatprep.subr.mxu0 0.0
    %4031 = vmatpush1.msra.mxu0 0.0
    %4032 = vmatprep.subr.mxu0 0.0
    %4033 = vmatpush1.msra.mxu0 0.0
    %4034 = vmatprep.subr.mxu0 0.0
    %4035 = vmatpush1.msra.mxu0 0.0
    %4036 = vmatprep.subr.mxu0 0.0
    %4037 = vmatpush1.msra.mxu0 0.0
    %4038 = vmatprep.subr.mxu0 0.0
    %4039 = vmatpush1.msra.mxu0 0.0
    %4040 = vmatprep.subr.mxu0 0.0
    %4041 = vmatpush1.msra.mxu0 0.0
    %4042 = vmatprep.subr.mxu0 0.0
    %4043 = vmatpush1.msra.mxu0 0.0
    %4044 = vmatprep.subr.mxu0 0.0
    %4045 = vmatpush1.msra.mxu0 0.0
    %4046 = vmatprep.subr.mxu0 0.0
    %4047 = vmatpush1.msra.mxu0 0.0
    %4048 = vmatprep.subr.mxu0 0.0
    %4049 = vmatpush1.msra.mxu0 0.0
    %4050 = vmatprep.subr.mxu0 0.0
    %4051 = vmatpush1.msra.mxu0 0.0
    %4052 = vmatprep.mubr.f32.mxu0 0.0
    %4053 = vmatmul.mubr.f32.gmra.mrb[0].mxu0 %v3983
    %v4054 = vpop.f32.mrb[0].mxu0
    %v4055 = vadd.f32 0.0, %v4054
    %v4056 = vpop.f32.mrb[0].mxu0
    %4057 = vmatprep.mubr.f32.mxu0 0.0
    %4058 = vmatmul.mubr.f32.gmra.mrb[0].mxu0 %v3986
    %v4059 = vpop.f32.mrb[0].mxu0
    %v4060 = vadd.f32 0.0, %v4059
    %v4061 = vpop.f32.mrb[0].mxu0
    %4062 = vdwg.mxu0
    %v4064 = vsel %vm1425, %v3897, 0
    %v4067 = vsel %vm1425, %v3898, 0
    %4069 = vmatprep.subr.mxu0 0.0
    %4070 = vmatpush1.msra.mxu0 %v3395
    %4071 = vmatprep.subr.mxu0 0.0
    %4072 = vmatpush1.msra.mxu0 %v3463
    %4073 = vmatprep.subr.mxu0 0.0
    %4074 = vmatpush1.msra.mxu0 0.0
    %4075 = vmatprep.subr.mxu0 0.0
    %4076 = vmatpush1.msra.mxu0 0.0
    %4077 = vmatprep.subr.mxu0 0.0
    %4078 = vmatpush1.msra.mxu0 0.0
    %4079 = vmatprep.subr.mxu0 0.0
    %4080 = vmatpush1.msra.mxu0 0.0
    %4081 = vmatprep.subr.mxu0 0.0
    %4082 = vmatpush1.msra.mxu0 0.0
    %4083 = vmatprep.subr.mxu0 0.0
    %4084 = vmatpush1.msra.mxu0 0.0
    %4085 = vmatprep.subr.mxu0 0.0
    %4086 = vmatpush1.msra.mxu0 0.0
    %4087 = vmatprep.subr.mxu0 0.0
    %4088 = vmatpush1.msra.mxu0 0.0
    %4089 = vmatprep.subr.mxu0 0.0
    %4090 = vmatpush1.msra.mxu0 0.0
    %4091 = vmatprep.subr.mxu0 0.0
    %4092 = vmatpush1.msra.mxu0 0.0
    %4093 = vmatprep.subr.mxu0 0.0
    %4094 = vmatpush1.msra.mxu0 0.0
    %4095 = vmatprep.subr.mxu0 0.0
    %4096 = vmatpush1.msra.mxu0 0.0
    %4097 = vmatprep.subr.mxu0 0.0
    %4098 = vmatpush1.msra.mxu0 0.0
    %4099 = vmatprep.subr.mxu0 0.0
    %4100 = vmatpush1.msra.mxu0 0.0
    %4101 = vmatprep.subr.mxu0 0.0
    %4102 = vmatpush1.msra.mxu0 0.0
    %4103 = vmatprep.subr.mxu0 0.0
    %4104 = vmatpush1.msra.mxu0 0.0
    %4105 = vmatprep.subr.mxu0 0.0
    %4106 = vmatpush1.msra.mxu0 0.0
    %4107 = vmatprep.subr.mxu0 0.0
    %4108 = vmatpush1.msra.mxu0 0.0
    %4109 = vmatprep.subr.mxu0 0.0
    %4110 = vmatpush1.msra.mxu0 0.0
    %4111 = vmatprep.subr.mxu0 0.0
    %4112 = vmatpush1.msra.mxu0 0.0
    %4113 = vmatprep.subr.mxu0 0.0
    %4114 = vmatpush1.msra.mxu0 0.0
    %4115 = vmatprep.subr.mxu0 0.0
    %4116 = vmatpush1.msra.mxu0 0.0
    %4117 = vmatprep.subr.mxu0 0.0
    %4118 = vmatpush1.msra.mxu0 0.0
    %4119 = vmatprep.subr.mxu0 0.0
    %4120 = vmatpush1.msra.mxu0 0.0
    %4121 = vmatprep.subr.mxu0 0.0
    %4122 = vmatpush1.msra.mxu0 0.0
    %4123 = vmatprep.subr.mxu0 0.0
    %4124 = vmatpush1.msra.mxu0 0.0
    %4125 = vmatprep.subr.mxu0 0.0
    %4126 = vmatpush1.msra.mxu0 0.0
    %4127 = vmatprep.subr.mxu0 0.0
    %4128 = vmatpush1.msra.mxu0 0.0
    %4129 = vmatprep.subr.mxu0 0.0
    %4130 = vmatpush1.msra.mxu0 0.0
    %4131 = vmatprep.subr.mxu0 0.0
    %4132 = vmatpush1.msra.mxu0 0.0
    %4133 = vmatprep.mubr.f32.mxu0 0.0
    %4134 = vmatmul.mubr.f32.gmra.mrb[0].mxu0 %v4064
    %v4135 = vpop.f32.mrb[0].mxu0
    %v4136 = vadd.f32 0.0, %v4135
    %v4137 = vpop.f32.mrb[0].mxu0
    %4138 = vmatprep.mubr.f32.mxu0 0.0
    %4139 = vmatmul.mubr.f32.gmra.mrb[0].mxu0 %v4067
    %v4140 = vpop.f32.mrb[0].mxu0
    %v4141 = vadd.f32 0.0, %v4140
    %v4142 = vpop.f32.mrb[0].mxu0
    %4143 = vdwg.mxu0
    %v4145 = vsel %vm1425, %v3899, 0
    %v4148 = vsel %vm1425, %v3900, 0
    %4150 = vmatprep.subr.mxu0 0.0
    %4151 = vmatpush1.msra.mxu0 %v3396
    %4152 = vmatprep.subr.mxu0 0.0
    %4153 = vmatpush1.msra.mxu0 %v3464
    %4154 = vmatprep.subr.mxu0 0.0
    %4155 = vmatpush1.msra.mxu0 0.0
    %4156 = vmatprep.subr.mxu0 0.0
    %4157 = vmatpush1.msra.mxu0 0.0
    %4158 = vmatprep.subr.mxu0 0.0
    %4159 = vmatpush1.msra.mxu0 0.0
    %4160 = vmatprep.subr.mxu0 0.0
    %4161 = vmatpush1.msra.mxu0 0.0
    %4162 = vmatprep.subr.mxu0 0.0
    %4163 = vmatpush1.msra.mxu0 0.0
    %4164 = vmatprep.subr.mxu0 0.0
    %4165 = vmatpush1.msra.mxu0 0.0
    %4166 = vmatprep.subr.mxu0 0.0
    %4167 = vmatpush1.msra.mxu0 0.0
    %4168 = vmatprep.subr.mxu0 0.0
    %4169 = vmatpush1.msra.mxu0 0.0
    %4170 = vmatprep.subr.mxu0 0.0
    %4171 = vmatpush1.msra.mxu0 0.0
    %4172 = vmatprep.subr.mxu0 0.0
    %4173 = vmatpush1.msra.mxu0 0.0
    %4174 = vmatprep.subr.mxu0 0.0
    %4175 = vmatpush1.msra.mxu0 0.0
    %4176 = vmatprep.subr.mxu0 0.0
    %4177 = vmatpush1.msra.mxu0 0.0
    %4178 = vmatprep.subr.mxu0 0.0
    %4179 = vmatpush1.msra.mxu0 0.0
    %4180 = vmatprep.subr.mxu0 0.0
    %4181 = vmatpush1.msra.mxu0 0.0
    %4182 = vmatprep.subr.mxu0 0.0
    %4183 = vmatpush1.msra.mxu0 0.0
    %4184 = vmatprep.subr.mxu0 0.0
    %4185 = vmatpush1.msra.mxu0 0.0
    %4186 = vmatprep.subr.mxu0 0.0
    %4187 = vmatpush1.msra.mxu0 0.0
    %4188 = vmatprep.subr.mxu0 0.0
    %4189 = vmatpush1.msra.mxu0 0.0
    %4190 = vmatprep.subr.mxu0 0.0
    %4191 = vmatpush1.msra.mxu0 0.0
    %4192 = vmatprep.subr.mxu0 0.0
    %4193 = vmatpush1.msra.mxu0 0.0
    %4194 = vmatprep.subr.mxu0 0.0
    %4195 = vmatpush1.msra.mxu0 0.0
    %4196 = vmatprep.subr.mxu0 0.0
    %4197 = vmatpush1.msra.mxu0 0.0
    %4198 = vmatprep.subr.mxu0 0.0
    %4199 = vmatpush1.msra.mxu0 0.0
    %4200 = vmatprep.subr.mxu0 0.0
    %4201 = vmatpush1.msra.mxu0 0.0
    %4202 = vmatprep.subr.mxu0 0.0
    %4203 = vmatpush1.msra.mxu0 0.0
    %4204 = vmatprep.subr.mxu0 0.0
    %4205 = vmatpush1.msra.mxu0 0.0
    %4206 = vmatprep.subr.mxu0 0.0
    %4207 = vmatpush1.msra.mxu0 0.0
    %4208 = vmatprep.subr.mxu0 0.0
    %4209 = vmatpush1.msra.mxu0 0.0
    %4210 = vmatprep.subr.mxu0 0.0
    %4211 = vmatpush1.msra.mxu0 0.0
    %4212 = vmatprep.subr.mxu0 0.0
    %4213 = vmatpush1.msra.mxu0 0.0
    %4214 = vmatprep.mubr.f32.mxu0 0.0
    %4215 = vmatmul.mubr.f32.gmra.mrb[0].mxu0 %v4145
    %v4216 = vpop.f32.mrb[0].mxu0
    %v4217 = vadd.f32 0.0, %v4216
    %v4218 = vpop.f32.mrb[0].mxu0
    %4219 = vmatprep.mubr.f32.mxu0 0.0
    %4220 = vmatmul.mubr.f32.gmra.mrb[0].mxu0 %v4148
    %v4221 = vpop.f32.mrb[0].mxu0
    %v4222 = vadd.f32 0.0, %v4221
    %v4223 = vpop.f32.mrb[0].mxu0
    %4224 = vdwg.mxu0
    %v4225 = vcombine.low %v3974, %v4136
    %v4226 = vcombine.high %v3974, %v4136
    %v4228 = vunpack.c.l.s4 1983009808
    %v4229 = vunpack.c.0.s8 %v4228
    %v4230 = vlaneseq
    %v4231 = vshrl.u32 %v4230, 7
    %v4232 = vsub.s32 %v4229, %v4231
    %v4233 = vrot.slane %v4225, %v4232
    %v4235 = vunpack.c.l.s4 1983009808
    %v4236 = vunpack.c.0.s8 %v4235
    %v4237 = vlaneseq
    %v4238 = vshrl.u32 %v4237, 7
    %v4239 = vsub.s32 %v4236, %v4238
    %v4240 = vrot.slane %v4226, %v4239
    %v4241 = vcombine.low %v4055, %v4217
    %v4242 = vcombine.high %v4055, %v4217
    %v4244 = vunpack.c.l.s4 1983009808
    %v4245 = vunpack.c.0.s8 %v4244
    %v4246 = vlaneseq
    %v4247 = vshrl.u32 %v4246, 7
    %v4248 = vsub.s32 %v4245, %v4247
    %v4249 = vrot.slane %v4241, %v4248
    %v4251 = vunpack.c.l.s4 1983009808
    %v4252 = vunpack.c.0.s8 %v4251
    %v4253 = vlaneseq
    %v4254 = vshrl.u32 %v4253, 7
    %v4255 = vsub.s32 %v4252, %v4254
    %v4256 = vrot.slane %v4242, %v4255
    %v4257 = vcombine.low %v4233, %v4249
    %v4258 = vcombine.high %v4233, %v4249
    %v4260 = vunpack.c.l.s4 1934713408
    %v4261 = vunpack.c.0.s8 %v4260
    %v4262 = vlaneseq
    %v4263 = vshrl.u32 %v4262, 7
    %v4264 = vsub.s32 %v4261, %v4263
    %v4265 = vrot.slane %v4257, %v4264
    %v4267 = vunpack.c.l.s4 1934713408
    %v4268 = vunpack.c.0.s8 %v4267
    %v4269 = vlaneseq
    %v4270 = vshrl.u32 %v4269, 7
    %v4271 = vsub.s32 %v4268, %v4270
    %v4272 = vrot.slane %v4258, %v4271
    %v4273 = vcombine.low %v4240, %v4256
    %v4274 = vcombine.high %v4240, %v4256
    %v4276 = vunpack.c.l.s4 1934713408
    %v4277 = vunpack.c.0.s8 %v4276
    %v4278 = vlaneseq
    %v4279 = vshrl.u32 %v4278, 7
    %v4280 = vsub.s32 %v4277, %v4279
    %v4281 = vrot.slane %v4273, %v4280
    %v4283 = vunpack.c.l.s4 1934713408
    %v4284 = vunpack.c.0.s8 %v4283
    %v4285 = vlaneseq
    %v4286 = vshrl.u32 %v4285, 7
    %v4287 = vsub.s32 %v4284, %v4286
    %v4288 = vrot.slane %v4274, %v4287
    %v4289 = vcombine.high %v4265, 0.0
    %v4290 = vcombine.high %v4272, 0.0
    %v4291 = vcombine.high %v4281, 0.0
    %v4292 = vcombine.high %v4288, 0.0
    %v4293 = vcombine.low %v3979, %v4141
    %v4294 = vcombine.high %v3979, %v4141
    %v4296 = vunpack.c.l.s4 1983009808
    %v4297 = vunpack.c.0.s8 %v4296
    %v4298 = vlaneseq
    %v4299 = vshrl.u32 %v4298, 7
    %v4300 = vsub.s32 %v4297, %v4299
    %v4301 = vrot.slane %v4293, %v4300
    %v4303 = vunpack.c.l.s4 1983009808
    %v4304 = vunpack.c.0.s8 %v4303
    %v4305 = vlaneseq
    %v4306 = vshrl.u32 %v4305, 7
    %v4307 = vsub.s32 %v4304, %v4306
    %v4308 = vrot.slane %v4294, %v4307
    %v4309 = vcombine.low %v4060, %v4222
    %v4310 = vcombine.high %v4060, %v4222
    %v4312 = vunpack.c.l.s4 1983009808
    %v4313 = vunpack.c.0.s8 %v4312
    %v4314 = vlaneseq
    %v4315 = vshrl.u32 %v4314, 7
    %v4316 = vsub.s32 %v4313, %v4315
    %v4317 = vrot.slane %v4309, %v4316
    %v4319 = vunpack.c.l.s4 1983009808
    %v4320 = vunpack.c.0.s8 %v4319
    %v4321 = vlaneseq
    %v4322 = vshrl.u32 %v4321, 7
    %v4323 = vsub.s32 %v4320, %v4322
    %v4324 = vrot.slane %v4310, %v4323
    %v4325 = vcombine.low %v4301, %v4317
    %v4326 = vcombine.high %v4301, %v4317
    %v4328 = vunpack.c.l.s4 1934713408
    %v4329 = vunpack.c.0.s8 %v4328
    %v4330 = vlaneseq
    %v4331 = vshrl.u32 %v4330, 7
    %v4332 = vsub.s32 %v4329, %v4331
    %v4333 = vrot.slane %v4325, %v4332
    %v4335 = vunpack.c.l.s4 1934713408
    %v4336 = vunpack.c.0.s8 %v4335
    %v4337 = vlaneseq
    %v4338 = vshrl.u32 %v4337, 7
    %v4339 = vsub.s32 %v4336, %v4338
    %v4340 = vrot.slane %v4326, %v4339
    %v4341 = vcombine.low %v4308, %v4324
    %v4342 = vcombine.high %v4308, %v4324
    %v4344 = vunpack.c.l.s4 1934713408
    %v4345 = vunpack.c.0.s8 %v4344
    %v4346 = vlaneseq
    %v4347 = vshrl.u32 %v4346, 7
    %v4348 = vsub.s32 %v4345, %v4347
    %v4349 = vrot.slane %v4341, %v4348
    %v4351 = vunpack.c.l.s4 1934713408
    %v4352 = vunpack.c.0.s8 %v4351
    %v4353 = vlaneseq
    %v4354 = vshrl.u32 %v4353, 7
    %v4355 = vsub.s32 %v4352, %v4354
    %v4356 = vrot.slane %v4342, %v4355
    %v4357 = vcombine.high %v4333, 0.0
    %v4358 = vcombine.high %v4340, 0.0
    %v4359 = vcombine.high %v4349, 0.0
    %v4360 = vcombine.high %v4356, 0.0
    %v4361 = vcombine.low %v4265, %v4272
    %v4363 = vunpack.c.l.s4 1983009808
    %v4364 = vunpack.c.0.s8 %v4363
    %v4365 = vlaneseq
    %v4366 = vshrl.u32 %v4365, 7
    %v4367 = vsub.s32 %v4364, %v4366
    %v4368 = vrot.slane %v4361, %v4367
    %v4369 = vcombine.low %v4289, %v4290
    %v4371 = vunpack.c.l.s4 1983009808
    %v4372 = vunpack.c.0.s8 %v4371
    %v4373 = vlaneseq
    %v4374 = vshrl.u32 %v4373, 7
    %v4375 = vsub.s32 %v4372, %v4374
    %v4376 = vrot.slane %v4369, %v4375
    %v4377 = vcombine.low %v4281, %v4288
    %v4379 = vunpack.c.l.s4 1983009808
    %v4380 = vunpack.c.0.s8 %v4379
    %v4381 = vlaneseq
    %v4382 = vshrl.u32 %v4381, 7
    %v4383 = vsub.s32 %v4380, %v4382
    %v4384 = vrot.slane %v4377, %v4383
    %v4385 = vcombine.low %v4291, %v4292
    %v4387 = vunpack.c.l.s4 1983009808
    %v4388 = vunpack.c.0.s8 %v4387
    %v4389 = vlaneseq
    %v4390 = vshrl.u32 %v4389, 7
    %v4391 = vsub.s32 %v4388, %v4390
    %v4392 = vrot.slane %v4385, %v4391
    %v4393 = vcombine.low %v4368, %v4376
    %v4394 = vcombine.high %v4368, %v4376
    %v4396 = vunpack.c.l.s4 1934713408
    %v4397 = vunpack.c.0.s8 %v4396
    %v4398 = vlaneseq
    %v4399 = vshrl.u32 %v4398, 7
    %v4400 = vsub.s32 %v4397, %v4399
    %v4401 = vrot.slane %v4393, %v4400
    %v4403 = vunpack.c.l.s4 1934713408
    %v4404 = vunpack.c.0.s8 %v4403
    %v4405 = vlaneseq
    %v4406 = vshrl.u32 %v4405, 7
    %v4407 = vsub.s32 %v4404, %v4406
    %v4408 = vrot.slane %v4394, %v4407
    %v4409 = vcombine.low %v4384, %v4392
    %v4410 = vcombine.high %v4384, %v4392
    %v4412 = vunpack.c.l.s4 1934713408
    %v4413 = vunpack.c.0.s8 %v4412
    %v4414 = vlaneseq
    %v4415 = vshrl.u32 %v4414, 7
    %v4416 = vsub.s32 %v4413, %v4415
    %v4417 = vrot.slane %v4409, %v4416
    %v4419 = vunpack.c.l.s4 1934713408
    %v4420 = vunpack.c.0.s8 %v4419
    %v4421 = vlaneseq
    %v4422 = vshrl.u32 %v4421, 7
    %v4423 = vsub.s32 %v4420, %v4422
    %v4424 = vrot.slane %v4410, %v4423
    %v4425 = vcombine.low %v4401, %v4417
    %v4426 = vcombine.high %v4401, %v4417
    %v4427 = vcombine.low %v4408, %v4424
    %v4428 = vcombine.high %v4408, %v4424
    %v4429 = vcombine.low %v4333, %v4340
    %v4431 = vunpack.c.l.s4 1983009808
    %v4432 = vunpack.c.0.s8 %v4431
    %v4433 = vlaneseq
    %v4434 = vshrl.u32 %v4433, 7
    %v4435 = vsub.s32 %v4432, %v4434
    %v4436 = vrot.slane %v4429, %v4435
    %v4437 = vcombine.low %v4357, %v4358
    %v4439 = vunpack.c.l.s4 1983009808
    %v4440 = vunpack.c.0.s8 %v4439
    %v4441 = vlaneseq
    %v4442 = vshrl.u32 %v4441, 7
    %v4443 = vsub.s32 %v4440, %v4442
    %v4444 = vrot.slane %v4437, %v4443
    %v4445 = vcombine.low %v4349, %v4356
    %v4447 = vunpack.c.l.s4 1983009808
    %v4448 = vunpack.c.0.s8 %v4447
    %v4449 = vlaneseq
    %v4450 = vshrl.u32 %v4449, 7
    %v4451 = vsub.s32 %v4448, %v4450
    %v4452 = vrot.slane %v4445, %v4451
    %v4453 = vcombine.low %v4359, %v4360
    %v4455 = vunpack.c.l.s4 1983009808
    %v4456 = vunpack.c.0.s8 %v4455
    %v4457 = vlaneseq
    %v4458 = vshrl.u32 %v4457, 7
    %v4459 = vsub.s32 %v4456, %v4458
    %v4460 = vrot.slane %v4453, %v4459
    %v4461 = vcombine.low %v4436, %v4444
    %v4462 = vcombine.high %v4436, %v4444
    %v4464 = vunpack.c.l.s4 1934713408
    %v4465 = vunpack.c.0.s8 %v4464
    %v4466 = vlaneseq
    %v4467 = vshrl.u32 %v4466, 7
    %v4468 = vsub.s32 %v4465, %v4467
    %v4469 = vrot.slane %v4461, %v4468
    %v4471 = vunpack.c.l.s4 1934713408
    %v4472 = vunpack.c.0.s8 %v4471
    %v4473 = vlaneseq
    %v4474 = vshrl.u32 %v4473, 7
    %v4475 = vsub.s32 %v4472, %v4474
    %v4476 = vrot.slane %v4462, %v4475
    %v4477 = vcombine.low %v4452, %v4460
    %v4478 = vcombine.high %v4452, %v4460
    %v4480 = vunpack.c.l.s4 1934713408
    %v4481 = vunpack.c.0.s8 %v4480
    %v4482 = vlaneseq
    %v4483 = vshrl.u32 %v4482, 7
    %v4484 = vsub.s32 %v4481, %v4483
    %v4485 = vrot.slane %v4477, %v4484
    %v4487 = vunpack.c.l.s4 1934713408
    %v4488 = vunpack.c.0.s8 %v4487
    %v4489 = vlaneseq
    %v4490 = vshrl.u32 %v4489, 7
    %v4491 = vsub.s32 %v4488, %v4490
    %v4492 = vrot.slane %v4478, %v4491
    %v4493 = vcombine.low %v4469, %v4485
    %v4494 = vcombine.high %v4469, %v4485
    %v4495 = vcombine.low %v4476, %v4492
    %v4496 = vcombine.high %v4476, %v4492
    %4499 = vrot.lane.b32.xlu0 %v4426, 8
    %v4500 = vpop.permute.xlu0 %4499
    %4501 = vrot.lane.b32.xlu0 %v4494, 8
    %v4502 = vpop.permute.xlu0 %4501
    %4507 = vrot.lane.b32.xlu0 %v4427, 16
    %v4508 = vpop.permute.xlu0 %4507
    %4509 = vrot.lane.b32.xlu0 %v4495, 16
    %v4510 = vpop.permute.xlu0 %4509
    %4515 = vrot.lane.b32.xlu0 %v4428, 24
    %v4516 = vpop.permute.xlu0 %4515
    %4517 = vrot.lane.b32.xlu0 %v4496, 24
    %v4518 = vpop.permute.xlu0 %4517
    %v4521 = vsel %vm1076, %v4425, %v4500
    %v4522 = vsel %vm1076, %v4493, %v4502
    %v4523 = vsel %vm1425, %v4521, %v4508
    %v4524 = vsel %vm1425, %v4522, %v4510
    %v4525 = vsel %vm2138, %v4523, %v4516
    %v4526 = vsel %vm2138, %v4524, %v4518
    %s4527 = scalar_lea.vmem %s5, 32
    %v4528 = vld [vmem:[%s4527] sm:$0xff]
    %v4529 = vld [vmem:[%s4527 + $0x8] sm:$0xff]
    %v4530 = vld [vmem:[%s4527 + $0x10] sm:$0xff]
    %v4531 = vld [vmem:[%s4527 + $0x18] sm:$0xff]
    %v4532 = vld [vmem:[%s6 + $0x1] sm:$0x1]
    %v4533 = vlaneseq
    %v4534 = vshrl.u32 %v4533, 7
    %v4535 = vsub.s32 0, %v4534
    %v4536 = vrot.slane %v4532, %v4535
    %v4538 = vsel %vm79, %v4525, 0
    %v4541 = vsel %vm79, %v4526, 0
    %4543 = vmatprep.subr.mxu0 0.0
    %4544 = vmatpush1.msra.mxu0 %v4528
    %4545 = vmatprep.subr.mxu0 0.0
    %4546 = vmatpush1.msra.mxu0 %v4529
    %4547 = vmatprep.subr.mxu0 0.0
    %4548 = vmatpush1.msra.mxu0 %v4530
    %4549 = vmatprep.subr.mxu0 0.0
    %4550 = vmatpush1.msra.mxu0 %v4531
    %4551 = vmatprep.subr.mxu0 0.0
    %4552 = vmatpush1.msra.mxu0 0.0
    %4553 = vmatprep.subr.mxu0 0.0
    %4554 = vmatpush1.msra.mxu0 0.0
    %4555 = vmatprep.subr.mxu0 0.0
    %4556 = vmatpush1.msra.mxu0 0.0
    %4557 = vmatprep.subr.mxu0 0.0
    %4558 = vmatpush1.msra.mxu0 0.0
    %4559 = vmatprep.subr.mxu0 0.0
    %4560 = vmatpush1.msra.mxu0 0.0
    %4561 = vmatprep.subr.mxu0 0.0
    %4562 = vmatpush1.msra.mxu0 0.0
    %4563 = vmatprep.subr.mxu0 0.0
    %4564 = vmatpush1.msra.mxu0 0.0
    %4565 = vmatprep.subr.mxu0 0.0
    %4566 = vmatpush1.msra.mxu0 0.0
    %4567 = vmatprep.subr.mxu0 0.0
    %4568 = vmatpush1.msra.mxu0 0.0
    %4569 = vmatprep.subr.mxu0 0.0
    %4570 = vmatpush1.msra.mxu0 0.0
    %4571 = vmatprep.subr.mxu0 0.0
    %4572 = vmatpush1.msra.mxu0 0.0
    %4573 = vmatprep.subr.mxu0 0.0
    %4574 = vmatpush1.msra.mxu0 0.0
    %4575 = vmatprep.subr.mxu0 0.0
    %4576 = vmatpush1.msra.mxu0 0.0
    %4577 = vmatprep.subr.mxu0 0.0
    %4578 = vmatpush1.msra.mxu0 0.0
    %4579 = vmatprep.subr.mxu0 0.0
    %4580 = vmatpush1.msra.mxu0 0.0
    %4581 = vmatprep.subr.mxu0 0.0
    %4582 = vmatpush1.msra.mxu0 0.0
    %4583 = vmatprep.subr.mxu0 0.0
    %4584 = vmatpush1.msra.mxu0 0.0
    %4585 = vmatprep.subr.mxu0 0.0
    %4586 = vmatpush1.msra.mxu0 0.0
    %4587 = vmatprep.subr.mxu0 0.0
    %4588 = vmatpush1.msra.mxu0 0.0
    %4589 = vmatprep.subr.mxu0 0.0
    %4590 = vmatpush1.msra.mxu0 0.0
    %4591 = vmatprep.subr.mxu0 0.0
    %4592 = vmatpush1.msra.mxu0 0.0
    %4593 = vmatprep.subr.mxu0 0.0
    %4594 = vmatpush1.msra.mxu0 0.0
    %4595 = vmatprep.subr.mxu0 0.0
    %4596 = vmatpush1.msra.mxu0 0.0
    %4597 = vmatprep.subr.mxu0 0.0
    %4598 = vmatpush1.msra.mxu0 0.0
    %4599 = vmatprep.subr.mxu0 0.0
    %4600 = vmatpush1.msra.mxu0 0.0
    %4601 = vmatprep.subr.mxu0 0.0
    %4602 = vmatpush1.msra.mxu0 0.0
    %4603 = vmatprep.subr.mxu0 0.0
    %4604 = vmatpush1.msra.mxu0 0.0
    %4605 = vmatprep.subr.mxu0 0.0
    %4606 = vmatpush1.msra.mxu0 0.0
    %4607 = vmatprep.mubr.f32.mxu0 0.0
    %4608 = vmatmul.mubr.f32.gmra.mrb[0].mxu0 %v4538
    %v4609 = vpop.f32.mrb[0].mxu0
    %v4610 = vadd.f32 %v4536, %v4609
    %v4611 = vpop.f32.mrb[0].mxu0
    %4612 = vmatprep.mubr.f32.mxu0 0.0
    %4613 = vmatmul.mubr.f32.gmra.mrb[0].mxu0 %v4541
    %v4614 = vpop.f32.mrb[0].mxu0
    %v4615 = vadd.f32 %v4536, %v4614
    %v4616 = vpop.f32.mrb[0].mxu0
    %4617 = vdwg.mxu0
    %v4618 = vadd.f32 %v4610, %v2465
    %v4619 = vadd.f32 %v4615, %v2466
    %v4620 = vsel %vm79, %v4618, 0.0
    %4621 = vadd.xlane.f32.xlu0 %v4620
    %v4622 = vpop.xlane.xlu0 %4621
    %v4623 = vsel %vm79, %v4619, 0.0
    %4624 = vadd.xlane.f32.xlu0 %v4623
    %v4625 = vpop.xlane.xlu0 %4624
    %v4626 = vmul.f32 %v4622, %v86
    %v4627 = vmul.f32 %v4625, %v86
    %v4628 = vmul.f32 %v4618, %v4618
    %v4629 = vmul.f32 %v4619, %v4619
    %v4630 = vsel %vm79, %v4628, 0.0
    %4631 = vadd.xlane.f32.xlu0 %v4630
    %v4632 = vpop.xlane.xlu0 %4631
    %v4633 = vsel %vm79, %v4629, 0.0
    %4634 = vadd.xlane.f32.xlu0 %v4633
    %v4635 = vpop.xlane.xlu0 %4634
    %v4636 = vmul.f32 %v4632, %v86
    %v4637 = vmul.f32 %v4635, %v86
    %v4638 = vsub.f32 %v4618, %v4626
    %v4639 = vsub.f32 %v4619, %v4627
    %v4640 = vmul.f32 %v4626, %v4626
    %v4641 = vmul.f32 %v4627, %v4627
    %v4642 = vsub.f32 %v4636, %v4640
    %v4643 = vsub.f32 %v4637, %v4641
    %v4644 = vadd.f32 %v4642, 1e-06
    %v4645 = vadd.f32 %v4643, 1e-06
    %v4646 = vrsqrt.pop %v4644
    %v4647 = vrsqrt.pop %v4645
    %v4648 = vmul.f32 %v4638, %v4646
    %v4649 = vmul.f32 %v4639, %v4647
    %v4650 = vld [vmem:[%s7 + $0x1] sm:$0x1]
    %v4651 = vadd.f32 %v4650, 1.0
    %v4652 = vlaneseq
    %v4653 = vshrl.u32 %v4652, 7
    %v4654 = vsub.s32 0, %v4653
    %v4655 = vrot.slane %v4651, %v4654
    %v4656 = vmul.f32 %v4648, %v4655
    %v4657 = vmul.f32 %v4649, %v4655
    %v4658 = vld [vmem:[%s8 + $0x1] sm:$0x1]
    %v4659 = vlaneseq
    %v4660 = vshrl.u32 %v4659, 7
    %v4661 = vsub.s32 0, %v4660
    %v4662 = vrot.slane %v4658, %v4661
    %v4663 = vadd.f32 %v4656, %v4662
    %v4664 = vadd.f32 %v4657, %v4662
    %s4665 = scalar_lea.vmem %s9, 32
    %v4666 = vld [vmem:[%s4665] sm:$0xff]
    %v4667 = vld [vmem:[%s4665 + $0x8] sm:$0xff]
    %v4668 = vld [vmem:[%s4665 + $0x10] sm:$0xff]
    %v4669 = vld [vmem:[%s4665 + $0x18] sm:$0xff]
    %v4670 = vld [vmem:[%s10 + $0x1] sm:$0x1]
    %v4671 = vlaneseq
    %v4672 = vshrl.u32 %v4671, 7
    %v4673 = vsub.s32 0, %v4672
    %v4674 = vrot.slane %v4670, %v4673
    %v4676 = vsel %vm79, %v4663, 0
    %v4679 = vsel %vm79, %v4664, 0
    %4681 = vmatprep.subr.mxu0 0.0
    %4682 = vmatpush1.msra.mxu0 %v4666
    %4683 = vmatprep.subr.mxu0 0.0
    %4684 = vmatpush1.msra.mxu0 %v4667
    %4685 = vmatprep.subr.mxu0 0.0
    %4686 = vmatpush1.msra.mxu0 %v4668
    %4687 = vmatprep.subr.mxu0 0.0
    %4688 = vmatpush1.msra.mxu0 %v4669
    %4689 = vmatprep.subr.mxu0 0.0
    %4690 = vmatpush1.msra.mxu0 0.0
    %4691 = vmatprep.subr.mxu0 0.0
    %4692 = vmatpush1.msra.mxu0 0.0
    %4693 = vmatprep.subr.mxu0 0.0
    %4694 = vmatpush1.msra.mxu0 0.0
    %4695 = vmatprep.subr.mxu0 0.0
    %4696 = vmatpush1.msra.mxu0 0.0
    %4697 = vmatprep.subr.mxu0 0.0
    %4698 = vmatpush1.msra.mxu0 0.0
    %4699 = vmatprep.subr.mxu0 0.0
    %4700 = vmatpush1.msra.mxu0 0.0
    %4701 = vmatprep.subr.mxu0 0.0
    %4702 = vmatpush1.msra.mxu0 0.0
    %4703 = vmatprep.subr.mxu0 0.0
    %4704 = vmatpush1.msra.mxu0 0.0
    %4705 = vmatprep.subr.mxu0 0.0
    %4706 = vmatpush1.msra.mxu0 0.0
    %4707 = vmatprep.subr.mxu0 0.0
    %4708 = vmatpush1.msra.mxu0 0.0
    %4709 = vmatprep.subr.mxu0 0.0
    %4710 = vmatpush1.msra.mxu0 0.0
    %4711 = vmatprep.subr.mxu0 0.0
    %4712 = vmatpush1.msra.mxu0 0.0
    %4713 = vmatprep.subr.mxu0 0.0
    %4714 = vmatpush1.msra.mxu0 0.0
    %4715 = vmatprep.subr.mxu0 0.0
    %4716 = vmatpush1.msra.mxu0 0.0
    %4717 = vmatprep.subr.mxu0 0.0
    %4718 = vmatpush1.msra.mxu0 0.0
    %4719 = vmatprep.subr.mxu0 0.0
    %4720 = vmatpush1.msra.mxu0 0.0
    %4721 = vmatprep.subr.mxu0 0.0
    %4722 = vmatpush1.msra.mxu0 0.0
    %4723 = vmatprep.subr.mxu0 0.0
    %4724 = vmatpush1.msra.mxu0 0.0
    %4725 = vmatprep.subr.mxu0 0.0
    %4726 = vmatpush1.msra.mxu0 0.0
    %4727 = vmatprep.subr.mxu0 0.0
    %4728 = vmatpush1.msra.mxu0 0.0
    %4729 = vmatprep.subr.mxu0 0.0
    %4730 = vmatpush1.msra.mxu0 0.0
    %4731 = vmatprep.subr.mxu0 0.0
    %4732 = vmatpush1.msra.mxu0 0.0
    %4733 = vmatprep.subr.mxu0 0.0
    %4734 = vmatpush1.msra.mxu0 0.0
    %4735 = vmatprep.subr.mxu0 0.0
    %4736 = vmatpush1.msra.mxu0 0.0
    %4737 = vmatprep.subr.mxu0 0.0
    %4738 = vmatpush1.msra.mxu0 0.0
    %4739 = vmatprep.subr.mxu0 0.0
    %4740 = vmatpush1.msra.mxu0 0.0
    %4741 = vmatprep.subr.mxu0 0.0
    %4742 = vmatpush1.msra.mxu0 0.0
    %4743 = vmatprep.subr.mxu0 0.0
    %4744 = vmatpush1.msra.mxu0 0.0
    %4745 = vmatprep.mubr.f32.mxu0 0.0
    %4746 = vmatmul.mubr.f32.gmra.mrb[0].mxu0 %v4676
    %v4747 = vpop.f32.mrb[0].mxu0
    %v4748 = vadd.f32 %v4674, %v4747
    %v4749 = vpop.f32.mrb[0].mxu0
    %4750 = vmatprep.mubr.f32.mxu0 0.0
    %4751 = vmatmul.mubr.f32.gmra.mrb[0].mxu0 %v4679
    %v4752 = vpop.f32.mrb[0].mxu0
    %v4753 = vadd.f32 %v4674, %v4752
    %v4754 = vpop.f32.mrb[0].mxu0
    %4755 = vdwg.mxu0
    %v4756 = vmax.f32 %v4748, 0.0
    %v4757 = vmax.f32 %v4753, 0.0
    %s4758 = scalar_lea.vmem %s11, 64
    %v4759 = vld [vmem:[%s4758] sm:$0xff]
    %v4760 = vld [vmem:[%s4758 + $0x8] sm:$0xff]
    %v4761 = vld [vmem:[%s4758 + $0x10] sm:$0xff]
    %v4762 = vld [vmem:[%s4758 + $0x18] sm:$0xff]
    %v4763 = vld [vmem:[%s4758 + $0x20] sm:$0xff]
    %v4764 = vld [vmem:[%s4758 + $0x28] sm:$0xff]
    %v4765 = vld [vmem:[%s4758 + $0x30] sm:$0xff]
    %v4766 = vld [vmem:[%s4758 + $0x38] sm:$0xff]
    %v4767 = vld [vmem:[%s12 + $0x1] sm:$0x1]
    %v4768 = vlaneseq
    %v4769 = vshrl.u32 %v4768, 7
    %v4770 = vsub.s32 0, %v4769
    %v4771 = vrot.slane %v4767, %v4770
    %v4773 = vsel %vm2383, %v4756, 0
    %v4776 = vsel %vm2383, %v4757, 0
    %4778 = vmatprep.subr.mxu0 0.0
    %4779 = vmatpush1.msra.mxu0 %v4759
    %4780 = vmatprep.subr.mxu0 0.0
    %4781 = vmatpush1.msra.mxu0 %v4760
    %4782 = vmatprep.subr.mxu0 0.0
    %4783 = vmatpush1.msra.mxu0 %v4761
    %4784 = vmatprep.subr.mxu0 0.0
    %4785 = vmatpush1.msra.mxu0 %v4762
    %4786 = vmatprep.subr.mxu0 0.0
    %4787 = vmatpush1.msra.mxu0 %v4763
    %4788 = vmatprep.subr.mxu0 0.0
    %4789 = vmatpush1.msra.mxu0 %v4764
    %4790 = vmatprep.subr.mxu0 0.0
    %4791 = vmatpush1.msra.mxu0 %v4765
    %4792 = vmatprep.subr.mxu0 0.0
    %4793 = vmatpush1.msra.mxu0 %v4766
    %4794 = vmatprep.subr.mxu0 0.0
    %4795 = vmatpush1.msra.mxu0 0.0
    %4796 = vmatprep.subr.mxu0 0.0
    %4797 = vmatpush1.msra.mxu0 0.0
    %4798 = vmatprep.subr.mxu0 0.0
    %4799 = vmatpush1.msra.mxu0 0.0
    %4800 = vmatprep.subr.mxu0 0.0
    %4801 = vmatpush1.msra.mxu0 0.0
    %4802 = vmatprep.subr.mxu0 0.0
    %4803 = vmatpush1.msra.mxu0 0.0
    %4804 = vmatprep.subr.mxu0 0.0
    %4805 = vmatpush1.msra.mxu0 0.0
    %4806 = vmatprep.subr.mxu0 0.0
    %4807 = vmatpush1.msra.mxu0 0.0
    %4808 = vmatprep.subr.mxu0 0.0
    %4809 = vmatpush1.msra.mxu0 0.0
    %4810 = vmatprep.subr.mxu0 0.0
    %4811 = vmatpush1.msra.mxu0 0.0
    %4812 = vmatprep.subr.mxu0 0.0
    %4813 = vmatpush1.msra.mxu0 0.0
    %4814 = vmatprep.subr.mxu0 0.0
    %4815 = vmatpush1.msra.mxu0 0.0
    %4816 = vmatprep.subr.mxu0 0.0
    %4817 = vmatpush1.msra.mxu0 0.0
    %4818 = vmatprep.subr.mxu0 0.0
    %4819 = vmatpush1.msra.mxu0 0.0
    %4820 = vmatprep.subr.mxu0 0.0
    %4821 = vmatpush1.msra.mxu0 0.0
    %4822 = vmatprep.subr.mxu0 0.0
    %4823 = vmatpush1.msra.mxu0 0.0
    %4824 = vmatprep.subr.mxu0 0.0
    %4825 = vmatpush1.msra.mxu0 0.0
    %4826 = vmatprep.subr.mxu0 0.0
    %4827 = vmatpush1.msra.mxu0 0.0
    %4828 = vmatprep.subr.mxu0 0.0
    %4829 = vmatpush1.msra.mxu0 0.0
    %4830 = vmatprep.subr.mxu0 0.0
    %4831 = vmatpush1.msra.mxu0 0.0
    %4832 = vmatprep.subr.mxu0 0.0
    %4833 = vmatpush1.msra.mxu0 0.0
    %4834 = vmatprep.subr.mxu0 0.0
    %4835 = vmatpush1.msra.mxu0 0.0
    %4836 = vmatprep.subr.mxu0 0.0
    %4837 = vmatpush1.msra.mxu0 0.0
    %4838 = vmatprep.subr.mxu0 0.0
    %4839 = vmatpush1.msra.mxu0 0.0
    %4840 = vmatprep.subr.mxu0 0.0
    %4841 = vmatpush1.msra.mxu0 0.0
    %4842 = vmatprep.mubr.f32.mxu0 0.0
    %4843 = vmatmul.mubr.f32.gmra.mrb[0].mxu0 %v4773
    %v4844 = vpop.f32.mrb[0].mxu0
    %v4845 = vadd.f32 %v4771, %v4844
    %v4846 = vpop.f32.mrb[0].mxu0
    %4847 = vmatprep.mubr.f32.mxu0 0.0
    %4848 = vmatmul.mubr.f32.gmra.mrb[0].mxu0 %v4776
    %v4849 = vpop.f32.mrb[0].mxu0
    %v4850 = vadd.f32 %v4771, %v4849
    %v4851 = vpop.f32.mrb[0].mxu0
    %4852 = vdwg.mxu0
    %v4853 = vadd.f32 %v4845, %v4618
    %v4854 = vadd.f32 %v4850, %v4619
    %4855 = vst.msk [vmem:[#allocation7] sm:$0xff] %vm79, %v4853
    %4856 = vst.msk [vmem:[#allocation7 + $0x8] sm:$0xff] %vm79, %v4854
    // Predicated region
    $region62: #{transformer_pallas.1} parent=1 // pred_check
      _
    $region63: #{transformer_pallas.1} parent=1 // pred_check_branch
      %4858 = sbr.rel (0) target = $region65
    $region64: #{transformer_pallas.1} parent=1 // pred_region
      %s4860 = ssub.s32 256, 256
      %4861 = vsyncadd [#allocation4], %s4860
      %s4862 = sshll.u32 [#allocation7], 4
      %s4863 = int_to_ptr.vmem [resolvable:$true] %s4862
      %4868 = dma.vmem_to_hbm [thread:$0]  %s4863, 256, %s13, [#allocation4], 128, 128, 8
    $region65: #{transformer_pallas.1} parent=1 // pred_fallthru
      _
    // Predicated region
    $region66: #{transformer_pallas.1} parent=1 // pred_check
      _
    $region67: #{transformer_pallas.1} parent=1 // pred_check_branch
      %4870 = sbr.rel (0) target = $region69
    $region68: #{transformer_pallas.1} parent=1 // pred_region
      %4871 = dma.done [#allocation4], 256
    $region69: #{transformer_pallas.1} parent=1 // pred_fallthru
      _
    %4872 = vsyncpa [#allocation3], 1
    %4873 = vsyncpa [#allocation6], 1
    %4874 = vsyncpa [#allocation4], 1

</llo_original>
